<compile_context>
chip_gen: v7x
topology: tpu7x:2x2x1
jax: 0.10.0
libtpu: 0.0.40
codegen_flags: <defaults>
</compile_context>

<pallas_src>
import functools

import jax
import jax.numpy as jnp
from jax.experimental import pallas as pl
from jax.experimental.pallas import tpu as pltpu

NEG_SLOPE = 0.01          # nn.LeakyReLU() default
BN_EPS = 1e-5             # nn.BatchNorm1d default
DEFAULT_TILE_L = 512      # lane tile (multiple of 128); per-step VMEM is tiny


def _round_up(x, m):
    return ((x + m - 1) // m) * m


# ------------------------------ Pallas kernels ----------------------------- #
def _conv_lrelu_stats_kernel(w_ref, b_ref, p_ref, y_ref, s1_ref, s2_ref, *,
                             neg_slope, l_real, tile_l, need_mask):
    """y = LeakyReLU(W @ patches + b); store y (bf16) + per-tile BN sum/sumsq."""
    y = jnp.dot(w_ref[...], p_ref[0], preferred_element_type=jnp.float32)
    y = y + b_ref[...]                          # (Cout_p, 1) broadcast over lanes
    y = jnp.where(y >= 0, y, neg_slope * y)
    y_ref[0] = y.astype(y_ref.dtype)

    def write_stats(v):
        s1_ref[0, 0] = jnp.sum(v, axis=1, keepdims=True)        # (Cout_p, 1)
        s2_ref[0, 0] = jnp.sum(v * v, axis=1, keepdims=True)    # (Cout_p, 1)

    if need_mask:
        # Only the last L-tile contains padded columns -> mask only there.
        j = pl.program_id(1)
        last = pl.num_programs(1) - 1

        @pl.when(j == last)
        def _():
            col = jax.lax.broadcasted_iota(jnp.int32, y.shape, 1) + j * tile_l
            write_stats(jnp.where(col < l_real, y, 0.0))

        @pl.when(j != last)
        def _():
            write_stats(y)
    else:
        write_stats(y)


def _bn_apply_kernel(y_ref, mean_ref, inv_ref, o_ref):
    """Explicit BatchNorm apply (only for the externally returned tensors)."""
    y = y_ref[0].astype(jnp.float32)
    o_ref[0] = ((y - mean_ref[...]) * inv_ref[...]).astype(o_ref.dtype)


# ------------------------------ fused layers ------------------------------- #
def _conv_layer(x, w_base, bias, mean_in, inv_in, stride, *, tile_l):
    """Conv1d (with the previous layer's BN folded in) + LeakyReLU + BN stats.

    x:       (N, Cin_p8, L) bf16 raw (un-normalized) previous activation
    w_base:  (Cout_p8, K, Cin_p8) f32 prepared weight
    bias:    (Cout_p8,) f32
    mean_in, inv_in: (Cin_p8,) f32 BN stats of x to fold into this layer.
    Returns raw y (N, Cout_p8, L_out) bf16 and this layer's (mean, invstd).
    """
    N, cp_in, L = x.shape
    cout_p, K, _ = w_base.shape
    l_out = (L - K) // stride + 1
    kd = K * cp_in

    # Fold input BatchNorm into weights / bias (tiny XLA op, weights are small).
    w = (w_base * inv_in[None, None, :]).reshape(cout_p, kd).astype(jnp.bfloat16)
    b = (bias - jnp.einsum("okc,c->o", w_base, mean_in * inv_in))
    b = b.reshape(cout_p, 1).astype(jnp.float32)

    # im2col = K strided slices concatenated on the (small) channel axis, bf16.
    taps = [x[:, :, k:k + stride * (l_out - 1) + 1:stride] for k in range(K)]
    patches = jnp.concatenate(taps, axis=1)              # (N, K*Cin_p, L_out)

    if l_out <= tile_l:
        tl, l_pad = l_out, l_out
    else:
        tl = tile_l
        l_pad = _round_up(l_out, tl)
        patches = jnp.pad(patches, ((0, 0), (0, 0), (0, l_pad - l_out)))
    need_mask = l_pad != l_out
    n_lt = l_pad // tl

    y, ssum, ssq = pl.pallas_call(
        functools.partial(_conv_lrelu_stats_kernel, neg_slope=NEG_SLOPE,
                          l_real=l_out, tile_l=tl, need_mask=need_mask),
        out_shape=(jax.ShapeDtypeStruct((N, cout_p, l_pad), jnp.bfloat16),
                   jax.ShapeDtypeStruct((N, n_lt, cout_p, 1), jnp.float32),
                   jax.ShapeDtypeStruct((N, n_lt, cout_p, 1), jnp.float32)),
        grid=(N, n_lt),
        in_specs=[pl.BlockSpec((cout_p, kd), lambda n, j: (0, 0)),
                  pl.BlockSpec((cout_p, 1), lambda n, j: (0, 0)),
                  pl.BlockSpec((1, kd, tl), lambda n, j: (n, 0, j))],
        out_specs=(pl.BlockSpec((1, cout_p, tl), lambda n, j: (n, 0, j)),
                   pl.BlockSpec((1, 1, cout_p, 1), lambda n, j: (n, j, 0, 0)),
                   pl.BlockSpec((1, 1, cout_p, 1), lambda n, j: (n, j, 0, 0))),
        compiler_params=pltpu.CompilerParams(
            dimension_semantics=("parallel", "parallel")),
    )(w, b, patches)

    if l_pad != l_out:
        y = y[:, :, :l_out]

    # Reduce tiny per-tile partial stats in XLA and finish BN statistics (f32).
    count = float(N * l_out)
    s = jnp.sum(ssum, axis=(0, 1))[:, 0] / count
    sq = jnp.sum(ssq, axis=(0, 1))[:, 0] / count
    var = jnp.maximum(sq - s * s, 0.0)      # f32 accumulation; clamp tiny negatives
    inv = jax.lax.rsqrt(var + BN_EPS)
    return y, s, inv


def _deconv_layer(x, w_base, bias, mean_in, inv_in, stride, output_padding, *, tile_l):
    """ConvTranspose1d (with folded input BN) + LeakyReLU + BN stats.

    Rewritten as a stride-1 conv on the dilated / edge-padded input.  The
    structural positions are filled with the per-channel mean (not zero) so the
    input-BN fold remains exact at every tap."""
    N, cp_in, L = x.shape
    K = w_base.shape[1]
    left = K - 1
    right = K - 1 + output_padding
    l_dil = (L - 1) * stride + 1
    fill = mean_in.astype(x.dtype).reshape(1, cp_in, 1)
    xdp = jnp.broadcast_to(fill, (N, cp_in, left + l_dil + right))
    xdp = xdp.at[:, :, left:left + l_dil:stride].set(x)
    return _conv_layer(xdp, w_base, bias, mean_in, inv_in, 1, tile_l=tile_l)


def _bn_apply(y, mean, inv, *, tile_l):
    """Normalize a raw bf16 activation (only for the returned tensors)."""
    N, cp, L = y.shape
    if L <= tile_l:
        tl, l_pad = L, L
    else:
        tl = tile_l
        l_pad = _round_up(L, tl)
        y = jnp.pad(y, ((0, 0), (0, 0), (0, l_pad - L)))
    n_lt = l_pad // tl

    out = pl.pallas_call(
        _bn_apply_kernel,
        out_shape=jax.ShapeDtypeStruct((N, cp, l_pad), jnp.float32),
        grid=(N, n_lt),
        in_specs=[pl.BlockSpec((1, cp, tl), lambda n, j: (n, 0, j)),
                  pl.BlockSpec((cp, 1), lambda n, j: (0, 0)),
                  pl.BlockSpec((cp, 1), lambda n, j: (0, 0))],
        out_specs=pl.BlockSpec((1, cp, tl), lambda n, j: (n, 0, j)),
        compiler_params=pltpu.CompilerParams(
            dimension_semantics=("parallel", "parallel")),
    )(y, mean.reshape(cp, 1), inv.reshape(cp, 1))
    return out[:, :, :L] if l_pad != L else out


# -------------------------------- parameters -------------------------------- #
def init_params(key, input_channels, out_channels, kernel_size):
    ks = jax.random.split(key, 12)
    c, k = out_channels, kernel_size

    def w(kk, shape):
        return jax.random.normal(kk, shape, jnp.float32) * 0.1

    return {
        "conv1_w": w(ks[0], (c, input_channels, k)),    "conv1_b": w(ks[1], (c,)),
        "conv2_w": w(ks[2], (2 * c, c, k)),             "conv2_b": w(ks[3], (2 * c,)),
        "conv3_w": w(ks[4], (4 * c, 2 * c, k)),         "conv3_b": w(ks[5], (4 * c,)),
        # ConvTranspose1d weight layout: (Cin, Cout, K)
        "deconv3_w": w(ks[6], (4 * c, 2 * c, k)),       "deconv3_b": w(ks[7], (2 * c,)),
        "deconv2_w": w(ks[8], (2 * c, c, k)),           "deconv2_b": w(ks[9], (c,)),
        "deconv1_w": w(ks[10], (c, input_channels, k)), "deconv1_b": w(ks[11], (input_channels,)),
    }


def prepare_params(params):
    """One-time weight prep (hoisted out of the forward): conv-equivalent
    layout (Cout_p8, K, Cin_p8), channel padding, kernel flip for deconvs."""
    def prep_conv(W, b):
        cout, cin, _ = W.shape
        cout_p, cin_p = _round_up(cout, 8), _round_up(cin, 8)
        Wp = jnp.zeros((cout_p, cin_p, W.shape[2]), jnp.float32).at[:cout, :cin, :].set(W)
        bp = jnp.zeros((cout_p,), jnp.float32).at[:cout].set(b)
        return jnp.transpose(Wp, (0, 2, 1)), bp            # (Cout_p, K, Cin_p)

    def prep_deconv(Wt, b):
        # ConvTranspose1d weight (Cin, Cout, K) -> equivalent conv weight, flipped.
        return prep_conv(jnp.transpose(Wt, (1, 0, 2))[:, :, ::-1], b)

    out = {}
    for name in ("conv1", "conv2", "conv3"):
        out[name + "_w"], out[name + "_b"] = prep_conv(params[name + "_w"],
                                                       params[name + "_b"])
    for name in ("deconv3", "deconv2", "deconv1"):
        out[name + "_w"], out[name + "_b"] = prep_deconv(params[name + "_w"],
                                                         params[name + "_b"])
    return out


# --------------------------------- model ------------------------------------ #
def cae_3_bn_forward(prep, x_ncl, *, input_channels, out_channels,
                     tile_l=DEFAULT_TILE_L):
    """x_ncl: (N, C_in, L) like the PyTorch module.  Returns (reconst, bottleneck)."""
    N, cin, L = x_ncl.shape
    cin_p = _round_up(cin, 8)
    a = jnp.pad(x_ncl, ((0, 0), (0, cin_p - cin), (0, 0))).astype(jnp.bfloat16)
    m0 = jnp.zeros((cin_p,), jnp.float32)        # identity "fold" for the input
    i0 = jnp.ones((cin_p,), jnp.float32)
    kw = dict(tile_l=tile_l)

    # encoder: conv -> LeakyReLU, BN folded into the following layer
    y1, m1, i1 = _conv_layer(a, prep["conv1_w"], prep["conv1_b"], m0, i0, 2, **kw)
    y2, m2, i2 = _conv_layer(y1, prep["conv2_w"], prep["conv2_b"], m1, i1, 2, **kw)
    y3, m3, i3 = _conv_layer(y2, prep["conv3_w"], prep["conv3_b"], m2, i2, 1, **kw)
    bottleneck = _bn_apply(y3, m3, i3, **kw)[:, :4 * out_channels, :]

    # decoder: deconv -> LeakyReLU, previous BN folded in
    y4, m4, i4 = _deconv_layer(y3, prep["deconv3_w"], prep["deconv3_b"], m3, i3, 1, 0, **kw)
    y5, m5, i5 = _deconv_layer(y4, prep["deconv2_w"], prep["deconv2_b"], m4, i4, 2, 1, **kw)
    y6, m6, i6 = _deconv_layer(y5, prep["deconv1_w"], prep["deconv1_b"], m5, i5, 2, 1, **kw)
    reconst = _bn_apply(y6, m6, i6, **kw)[:, :input_channels, :]
    return reconst, bottleneck


# ------------------------------ pure-JAX reference --------------------------- #
def reference_forward(params, x):
    dn = ("NCH", "OIH", "NCH")

    def lrelu_bn(y):
        y = jnp.where(y >= 0, y, NEG_SLOPE * y)
        m = jnp.mean(y, axis=(0, 2), keepdims=True)
        v = jnp.mean((y - m) ** 2, axis=(0, 2), keepdims=True)
        return (y - m) * jax.lax.rsqrt(v + BN_EPS)

    def conv(x, W, b, s):
        y = jax.lax.conv_general_dilated(x, W, (s,), "VALID", dimension_numbers=dn)
        return y + b[None, :, None]

    def deconv(x, Wt, b, s, op):
        K = Wt.shape[-1]
        Wc = jnp.transpose(Wt, (1, 0, 2))[:, :, ::-1]
        y = jax.lax.conv_general_dilated(x, Wc, (1,), [(K - 1, K - 1 + op)],
                                         lhs_dilation=(s,), dimension_numbers=dn)
        return y + b[None, :, None]

    h = lrelu_bn(conv(x, params["conv1_w"], params["conv1_b"], 2))
    h = lrelu_bn(conv(h, params["conv2_w"], params["conv2_b"], 2))
    bott = lrelu_bn(conv(h, params["conv3_w"], params["conv3_b"], 1))
    d = lrelu_bn(deconv(bott, params["deconv3_w"], params["deconv3_b"], 1, 0))
    d = lrelu_bn(deconv(d, params["deconv2_w"], params["deconv2_b"], 2, 1))
    d = lrelu_bn(deconv(d, params["deconv1_w"], params["deconv1_b"], 2, 1))
    return d, bott


if __name__ == "__main__":
    input_channels, out_channels, kernel_size = 4, 8, 3
    N, L = 2, 32

    key = jax.random.PRNGKey(0)
    kx, kp, kx2 = jax.random.split(key, 3)
    x = jax.random.normal(kx, (N, input_channels, L), jnp.float32)
    params = init_params(kp, input_channels, out_channels, kernel_size)
    prep = prepare_params(params)                 # one-time weight prep (hoisted)

    fwd = jax.jit(functools.partial(cae_3_bn_forward, input_channels=input_channels,
                                    out_channels=out_channels, tile_l=DEFAULT_TILE_L))
    reconst, bottleneck = fwd(prep, x)
    jax.block_until_ready((reconst, bottleneck))

    # shapes implied by the PyTorch module
    assert bottleneck.shape == (N, 4 * out_channels, 5), bottleneck.shape
    assert reconst.shape == (N, input_channels, 34), reconst.shape

    r_ref, bott_ref = jax.jit(reference_forward)(params, x)
    jax.block_until_ready((r_ref, bott_ref))
    assert float(jnp.max(jnp.abs(bottleneck - bott_ref))) < 2e-1
    assert float(jnp.max(jnp.abs(reconst - r_ref))) < 2e-1

    # Longer sequence exercises the multi-L-tile path (lane tiling + last-tile
    # masking of the BatchNorm statistics).
    L2 = 640
    x2 = jax.random.normal(kx2, (N, input_channels, L2), jnp.float32)
    fwd_tiled = jax.jit(functools.partial(cae_3_bn_forward, input_channels=input_channels,
                                          out_channels=out_channels, tile_l=128))
    reconst2, bottleneck2 = fwd_tiled(prep, x2)
    jax.block_until_ready((reconst2, bottleneck2))
    r_ref2, bott_ref2 = jax.jit(reference_forward)(params, x2)
    jax.block_until_ready((r_ref2, bott_ref2))
    assert reconst2.shape == r_ref2.shape and bottleneck2.shape == bott_ref2.shape
    assert float(jnp.max(jnp.abs(bottleneck2 - bott_ref2))) < 2e-1
    assert float(jnp.max(jnp.abs(reconst2 - r_ref2))) < 2e-1

    print("KERNEL_OK")
</pallas_src>

<mosaic_0001>
module attributes {stable_mosaic.version = 11 : i64} {
  func.func @_conv_lrelu_stats_kernel(%arg0: i32, %arg1: i32, %arg2: memref<8x24xbf16, #tpu.memory_space<vmem>>, %arg3: memref<8x1xf32, #tpu.memory_space<vmem>>, %arg4: memref<1x24x15xbf16, #tpu.memory_space<vmem>>, %arg5: memref<1x8x15xbf16, #tpu.memory_space<vmem>>, %arg6: memref<1x1x8x1xf32, #tpu.memory_space<vmem>>, %arg7: memref<1x1x8x1xf32, #tpu.memory_space<vmem>>) attributes {dimension_semantics = [#tpu.dimension_semantics<parallel>, #tpu.dimension_semantics<parallel>], iteration_bounds = array<i64: 2, 1>, scalar_prefetch = 0 : i64, scratch_operands = 0 : i64, tpu.core_type = #tpu.core_type<tc>, window_params = [{pipeline_mode = #tpu.pipeline_mode<synchronous>, transform_indices = @transform_0, window_bounds = array<i64: 8, 24>}, {pipeline_mode = #tpu.pipeline_mode<synchronous>, transform_indices = @transform_1, window_bounds = array<i64: 8, 1>}, {transform_indices = @transform_2, window_bounds = array<i64: 1, 24, 15>}, {transform_indices = @transform_3, window_bounds = array<i64: 1, 8, 15>}, {transform_indices = @transform_4, window_bounds = array<i64: 1, 1, 8, 1>}, {transform_indices = @transform_5, window_bounds = array<i64: 1, 1, 8, 1>}]} {
    %c0 = arith.constant 0 : index
    %c0_0 = arith.constant 0 : index
    %0 = vector.load %arg2[%c0, %c0_0] : memref<8x24xbf16, #tpu.memory_space<vmem>>, vector<8x24xbf16>
    %c0_1 = arith.constant 0 : index
    %c0_2 = arith.constant 0 : index
    %c0_3 = arith.constant 0 : index
    %1 = vector.load %arg4[%c0_1, %c0_2, %c0_3] : memref<1x24x15xbf16, #tpu.memory_space<vmem>>, vector<1x24x15xbf16>
    %2 = vector.shape_cast %1 : vector<1x24x15xbf16> to vector<24x15xbf16>
    %cst = arith.constant dense<0.000000e+00> : vector<8x15xf32>
    %3 = tpu.matmul %0, %2, %cst {dimension_numbers = #tpu.dot_dimension_numbers<[1], [0], [0], [1], [0, 0, 1, 1], [], []>} : vector<8x24xbf16>, vector<24x15xbf16>, vector<8x15xf32> -> vector<8x15xf32>
    %c0_4 = arith.constant 0 : index
    %c0_5 = arith.constant 0 : index
    %4 = vector.load %arg3[%c0_4, %c0_5] : memref<8x1xf32, #tpu.memory_space<vmem>>, vector<8x1xf32>
    %5 = vector.broadcast %4 : vector<8x1xf32> to vector<8x15xf32>
    %6 = arith.addf %3, %5 : vector<8x15xf32>
    %cst_6 = arith.constant 0.000000e+00 : f32
    %7 = vector.broadcast %cst_6 : f32 to vector<8x15xf32>
    %8 = arith.cmpf oge, %6, %7 : vector<8x15xf32>
    %cst_7 = arith.constant 0.00999999977 : f32
    %9 = vector.broadcast %cst_7 : f32 to vector<8x15xf32>
    %10 = arith.mulf %9, %6 : vector<8x15xf32>
    %11 = arith.select %8, %6, %10 : vector<8x15xi1>, vector<8x15xf32>
    %12 = arith.truncf %11 : vector<8x15xf32> to vector<8x15xbf16>
    %c0_8 = arith.constant 0 : index
    %c0_9 = arith.constant 0 : index
    %c0_10 = arith.constant 0 : index
    %13 = vector.load %arg5[%c0_8, %c0_9, %c0_10] : memref<1x8x15xbf16, #tpu.memory_space<vmem>>, vector<1x8x15xbf16>
    %14 = vector.shape_cast %13 : vector<1x8x15xbf16> to vector<8x15xbf16>
    %15 = vector.shape_cast %12 : vector<8x15xbf16> to vector<1x8x15xbf16>
    tpu.vector_store %arg5[%c0_8, %c0_9, %c0_10], %15 {strides = array<i32>} : memref<1x8x15xbf16, #tpu.memory_space<vmem>>, vector<1x8x15xbf16>,
    %cst_11 = arith.constant dense<0.000000e+00> : vector<8xf32>
    %16 = vector.multi_reduction <add>, %11, %cst_11 [1] : vector<8x15xf32> to vector<8xf32>
    %17 = vector.shape_cast %16 : vector<8xf32> to vector<8x1xf32>
    %c0_12 = arith.constant 0 : index
    %c0_13 = arith.constant 0 : index
    %c0_14 = arith.constant 0 : index
    %c0_15 = arith.constant 0 : index
    %18 = vector.load %arg6[%c0_12, %c0_13, %c0_14, %c0_15] : memref<1x1x8x1xf32, #tpu.memory_space<vmem>>, vector<1x1x8x1xf32>
    %19 = vector.shape_cast %18 : vector<1x1x8x1xf32> to vector<8x1xf32>
    %20 = vector.shape_cast %17 : vector<8x1xf32> to vector<1x1x8x1xf32>
    tpu.vector_store %arg6[%c0_12, %c0_13, %c0_14, %c0_15], %20 {strides = array<i32>} : memref<1x1x8x1xf32, #tpu.memory_space<vmem>>, vector<1x1x8x1xf32>,
    %21 = arith.mulf %11, %11 : vector<8x15xf32>
    %cst_16 = arith.constant dense<0.000000e+00> : vector<8xf32>
    %22 = vector.multi_reduction <add>, %21, %cst_16 [1] : vector<8x15xf32> to vector<8xf32>
    %23 = vector.shape_cast %22 : vector<8xf32> to vector<8x1xf32>
    %c0_17 = arith.constant 0 : index
    %c0_18 = arith.constant 0 : index
    %c0_19 = arith.constant 0 : index
    %c0_20 = arith.constant 0 : index
    %24 = vector.load %arg7[%c0_17, %c0_18, %c0_19, %c0_20] : memref<1x1x8x1xf32, #tpu.memory_space<vmem>>, vector<1x1x8x1xf32>
    %25 = vector.shape_cast %24 : vector<1x1x8x1xf32> to vector<8x1xf32>
    %26 = vector.shape_cast %23 : vector<8x1xf32> to vector<1x1x8x1xf32>
    tpu.vector_store %arg7[%c0_17, %c0_18, %c0_19, %c0_20], %26 {strides = array<i32>} : memref<1x1x8x1xf32, #tpu.memory_space<vmem>>, vector<1x1x8x1xf32>,
    return
  }
  func.func @transform_0(%arg0: i32, %arg1: i32) -> (i32, i32) {
    %c0_i32 = arith.constant 0 : i32
    %c0_i32_0 = arith.constant 0 : i32
    %c0_i32_1 = arith.constant 0 : i32
    return %c0_i32, %c0_i32_0 : i32, i32
  }
  func.func @transform_1(%arg0: i32, %arg1: i32) -> (i32, i32) {
    %c0_i32 = arith.constant 0 : i32
    %c0_i32_0 = arith.constant 0 : i32
    %c0_i32_1 = arith.constant 0 : i32
    return %c0_i32, %c0_i32_0 : i32, i32
  }
  func.func @transform_2(%arg0: i32, %arg1: i32) -> (i32, i32, i32) {
    %c0_i32 = arith.constant 0 : i32
    %c0_i32_0 = arith.constant 0 : i32
    return %arg0, %c0_i32, %arg1 : i32, i32, i32
  }
  func.func @transform_3(%arg0: i32, %arg1: i32) -> (i32, i32, i32) {
    %c0_i32 = arith.constant 0 : i32
    %c0_i32_0 = arith.constant 0 : i32
    return %arg0, %c0_i32, %arg1 : i32, i32, i32
  }
  func.func @transform_4(%arg0: i32, %arg1: i32) -> (i32, i32, i32, i32) {
    %c0_i32 = arith.constant 0 : i32
    %c0_i32_0 = arith.constant 0 : i32
    %c0_i32_1 = arith.constant 0 : i32
    return %arg0, %arg1, %c0_i32, %c0_i32_0 : i32, i32, i32, i32
  }
  func.func @transform_5(%arg0: i32, %arg1: i32) -> (i32, i32, i32, i32) {
    %c0_i32 = arith.constant 0 : i32
    %c0_i32_0 = arith.constant 0 : i32
    %c0_i32_1 = arith.constant 0 : i32
    return %arg0, %arg1, %c0_i32, %c0_i32_0 : i32, i32, i32, i32
  }
}

module attributes {stable_mosaic.version = 11 : i64} {
  func.func @_conv_lrelu_stats_kernel(%arg0: i32, %arg1: i32, %arg2: memref<16x24xbf16, #tpu.memory_space<vmem>>, %arg3: memref<16x1xf32, #tpu.memory_space<vmem>>, %arg4: memref<1x24x7xbf16, #tpu.memory_space<vmem>>, %arg5: memref<1x16x7xbf16, #tpu.memory_space<vmem>>, %arg6: memref<1x1x16x1xf32, #tpu.memory_space<vmem>>, %arg7: memref<1x1x16x1xf32, #tpu.memory_space<vmem>>) attributes {dimension_semantics = [#tpu.dimension_semantics<parallel>, #tpu.dimension_semantics<parallel>], iteration_bounds = array<i64: 2, 1>, scalar_prefetch = 0 : i64, scratch_operands = 0 : i64, tpu.core_type = #tpu.core_type<tc>, window_params = [{pipeline_mode = #tpu.pipeline_mode<synchronous>, transform_indices = @transform_0, window_bounds = array<i64: 16, 24>}, {pipeline_mode = #tpu.pipeline_mode<synchronous>, transform_indices = @transform_1, window_bounds = array<i64: 16, 1>}, {transform_indices = @transform_2, window_bounds = array<i64: 1, 24, 7>}, {transform_indices = @transform_3, window_bounds = array<i64: 1, 16, 7>}, {transform_indices = @transform_4, window_bounds = array<i64: 1, 1, 16, 1>}, {transform_indices = @transform_5, window_bounds = array<i64: 1, 1, 16, 1>}]} {
    %c0 = arith.constant 0 : index
    %c0_0 = arith.constant 0 : index
    %0 = vector.load %arg2[%c0, %c0_0] : memref<16x24xbf16, #tpu.memory_space<vmem>>, vector<16x24xbf16>
    %c0_1 = arith.constant 0 : index
    %c0_2 = arith.constant 0 : index
    %c0_3 = arith.constant 0 : index
    %1 = vector.load %arg4[%c0_1, %c0_2, %c0_3] : memref<1x24x7xbf16, #tpu.memory_space<vmem>>, vector<1x24x7xbf16>
    %2 = vector.shape_cast %1 : vector<1x24x7xbf16> to vector<24x7xbf16>
    %cst = arith.constant dense<0.000000e+00> : vector<16x7xf32>
    %3 = tpu.matmul %0, %2, %cst {dimension_numbers = #tpu.dot_dimension_numbers<[1], [0], [0], [1], [0, 0, 1, 1], [], []>} : vector<16x24xbf16>, vector<24x7xbf16>, vector<16x7xf32> -> vector<16x7xf32>
    %c0_4 = arith.constant 0 : index
    %c0_5 = arith.constant 0 : index
    %4 = vector.load %arg3[%c0_4, %c0_5] : memref<16x1xf32, #tpu.memory_space<vmem>>, vector<16x1xf32>
    %5 = vector.broadcast %4 : vector<16x1xf32> to vector<16x7xf32>
    %6 = arith.addf %3, %5 : vector<16x7xf32>
    %cst_6 = arith.constant 0.000000e+00 : f32
    %7 = vector.broadcast %cst_6 : f32 to vector<16x7xf32>
    %8 = arith.cmpf oge, %6, %7 : vector<16x7xf32>
    %cst_7 = arith.constant 0.00999999977 : f32
    %9 = vector.broadcast %cst_7 : f32 to vector<16x7xf32>
    %10 = arith.mulf %9, %6 : vector<16x7xf32>
    %11 = arith.select %8, %6, %10 : vector<16x7xi1>, vector<16x7xf32>
    %12 = arith.truncf %11 : vector<16x7xf32> to vector<16x7xbf16>
    %c0_8 = arith.constant 0 : index
    %c0_9 = arith.constant 0 : index
    %c0_10 = arith.constant 0 : index
    %13 = vector.load %arg5[%c0_8, %c0_9, %c0_10] : memref<1x16x7xbf16, #tpu.memory_space<vmem>>, vector<1x16x7xbf16>
    %14 = vector.shape_cast %13 : vector<1x16x7xbf16> to vector<16x7xbf16>
    %15 = vector.shape_cast %12 : vector<16x7xbf16> to vector<1x16x7xbf16>
    tpu.vector_store %arg5[%c0_8, %c0_9, %c0_10], %15 {strides = array<i32>} : memref<1x16x7xbf16, #tpu.memory_space<vmem>>, vector<1x16x7xbf16>,
    %cst_11 = arith.constant dense<0.000000e+00> : vector<16xf32>
    %16 = vector.multi_reduction <add>, %11, %cst_11 [1] : vector<16x7xf32> to vector<16xf32>
    %17 = vector.shape_cast %16 : vector<16xf32> to vector<16x1xf32>
    %c0_12 = arith.constant 0 : index
    %c0_13 = arith.constant 0 : index
    %c0_14 = arith.constant 0 : index
    %c0_15 = arith.constant 0 : index
    %18 = vector.load %arg6[%c0_12, %c0_13, %c0_14, %c0_15] : memref<1x1x16x1xf32, #tpu.memory_space<vmem>>, vector<1x1x16x1xf32>
    %19 = vector.shape_cast %18 : vector<1x1x16x1xf32> to vector<16x1xf32>
    %20 = vector.shape_cast %17 : vector<16x1xf32> to vector<1x1x16x1xf32>
    tpu.vector_store %arg6[%c0_12, %c0_13, %c0_14, %c0_15], %20 {strides = array<i32>} : memref<1x1x16x1xf32, #tpu.memory_space<vmem>>, vector<1x1x16x1xf32>,
    %21 = arith.mulf %11, %11 : vector<16x7xf32>
    %cst_16 = arith.constant dense<0.000000e+00> : vector<16xf32>
    %22 = vector.multi_reduction <add>, %21, %cst_16 [1] : vector<16x7xf32> to vector<16xf32>
    %23 = vector.shape_cast %22 : vector<16xf32> to vector<16x1xf32>
    %c0_17 = arith.constant 0 : index
    %c0_18 = arith.constant 0 : index
    %c0_19 = arith.constant 0 : index
    %c0_20 = arith.constant 0 : index
    %24 = vector.load %arg7[%c0_17, %c0_18, %c0_19, %c0_20] : memref<1x1x16x1xf32, #tpu.memory_space<vmem>>, vector<1x1x16x1xf32>
    %25 = vector.shape_cast %24 : vector<1x1x16x1xf32> to vector<16x1xf32>
    %26 = vector.shape_cast %23 : vector<16x1xf32> to vector<1x1x16x1xf32>
    tpu.vector_store %arg7[%c0_17, %c0_18, %c0_19, %c0_20], %26 {strides = array<i32>} : memref<1x1x16x1xf32, #tpu.memory_space<vmem>>, vector<1x1x16x1xf32>,
    return
  }
  func.func @transform_0(%arg0: i32, %arg1: i32) -> (i32, i32) {
    %c0_i32 = arith.constant 0 : i32
    %c0_i32_0 = arith.constant 0 : i32
    %c0_i32_1 = arith.constant 0 : i32
    return %c0_i32, %c0_i32_0 : i32, i32
  }
  func.func @transform_1(%arg0: i32, %arg1: i32) -> (i32, i32) {
    %c0_i32 = arith.constant 0 : i32
    %c0_i32_0 = arith.constant 0 : i32
    %c0_i32_1 = arith.constant 0 : i32
    return %c0_i32, %c0_i32_0 : i32, i32
  }
  func.func @transform_2(%arg0: i32, %arg1: i32) -> (i32, i32, i32) {
    %c0_i32 = arith.constant 0 : i32
    %c0_i32_0 = arith.constant 0 : i32
    return %arg0, %c0_i32, %arg1 : i32, i32, i32
  }
  func.func @transform_3(%arg0: i32, %arg1: i32) -> (i32, i32, i32) {
    %c0_i32 = arith.constant 0 : i32
    %c0_i32_0 = arith.constant 0 : i32
    return %arg0, %c0_i32, %arg1 : i32, i32, i32
  }
  func.func @transform_4(%arg0: i32, %arg1: i32) -> (i32, i32, i32, i32) {
    %c0_i32 = arith.constant 0 : i32
    %c0_i32_0 = arith.constant 0 : i32
    %c0_i32_1 = arith.constant 0 : i32
    return %arg0, %arg1, %c0_i32, %c0_i32_0 : i32, i32, i32, i32
  }
  func.func @transform_5(%arg0: i32, %arg1: i32) -> (i32, i32, i32, i32) {
    %c0_i32 = arith.constant 0 : i32
    %c0_i32_0 = arith.constant 0 : i32
    %c0_i32_1 = arith.constant 0 : i32
    return %arg0, %arg1, %c0_i32, %c0_i32_0 : i32, i32, i32, i32
  }
}

module attributes {stable_mosaic.version = 11 : i64} {
  func.func @_bn_apply_kernel(%arg0: i32, %arg1: i32, %arg2: memref<1x32x5xbf16, #tpu.memory_space<vmem>>, %arg3: memref<32x1xf32, #tpu.memory_space<vmem>>, %arg4: memref<32x1xf32, #tpu.memory_space<vmem>>, %arg5: memref<1x32x5xf32, #tpu.memory_space<vmem>>) attributes {dimension_semantics = [#tpu.dimension_semantics<parallel>, #tpu.dimension_semantics<parallel>], iteration_bounds = array<i64: 2, 1>, scalar_prefetch = 0 : i64, scratch_operands = 0 : i64, tpu.core_type = #tpu.core_type<tc>, window_params = [{transform_indices = @transform_0, window_bounds = array<i64: 1, 32, 5>}, {pipeline_mode = #tpu.pipeline_mode<synchronous>, transform_indices = @transform_1, window_bounds = array<i64: 32, 1>}, {pipeline_mode = #tpu.pipeline_mode<synchronous>, transform_indices = @transform_2, window_bounds = array<i64: 32, 1>}, {transform_indices = @transform_3, window_bounds = array<i64: 1, 32, 5>}]} {
    %c0 = arith.constant 0 : index
    %c0_0 = arith.constant 0 : index
    %c0_1 = arith.constant 0 : index
    %0 = vector.load %arg2[%c0, %c0_0, %c0_1] : memref<1x32x5xbf16, #tpu.memory_space<vmem>>, vector<1x32x5xbf16>
    %1 = vector.shape_cast %0 : vector<1x32x5xbf16> to vector<32x5xbf16>
    %2 = arith.extf %1 : vector<32x5xbf16> to vector<32x5xf32>
    %c0_2 = arith.constant 0 : index
    %c0_3 = arith.constant 0 : index
    %3 = vector.load %arg3[%c0_2, %c0_3] : memref<32x1xf32, #tpu.memory_space<vmem>>, vector<32x1xf32>
    %4 = vector.broadcast %3 : vector<32x1xf32> to vector<32x5xf32>
    %5 = arith.subf %2, %4 : vector<32x5xf32>
    %c0_4 = arith.constant 0 : index
    %c0_5 = arith.constant 0 : index
    %6 = vector.load %arg4[%c0_4, %c0_5] : memref<32x1xf32, #tpu.memory_space<vmem>>, vector<32x1xf32>
    %7 = vector.broadcast %6 : vector<32x1xf32> to vector<32x5xf32>
    %8 = arith.mulf %5, %7 : vector<32x5xf32>
    %c0_6 = arith.constant 0 : index
    %c0_7 = arith.constant 0 : index
    %c0_8 = arith.constant 0 : index
    %9 = vector.load %arg5[%c0_6, %c0_7, %c0_8] : memref<1x32x5xf32, #tpu.memory_space<vmem>>, vector<1x32x5xf32>
    %10 = vector.shape_cast %9 : vector<1x32x5xf32> to vector<32x5xf32>
    %11 = vector.shape_cast %8 : vector<32x5xf32> to vector<1x32x5xf32>
    tpu.vector_store %arg5[%c0_6, %c0_7, %c0_8], %11 {strides = array<i32>} : memref<1x32x5xf32, #tpu.memory_space<vmem>>, vector<1x32x5xf32>,
    return
  }
  func.func @transform_0(%arg0: i32, %arg1: i32) -> (i32, i32, i32) {
    %c0_i32 = arith.constant 0 : i32
    %c0_i32_0 = arith.constant 0 : i32
    return %arg0, %c0_i32, %arg1 : i32, i32, i32
  }
  func.func @transform_1(%arg0: i32, %arg1: i32) -> (i32, i32) {
    %c0_i32 = arith.constant 0 : i32
    %c0_i32_0 = arith.constant 0 : i32
    %c0_i32_1 = arith.constant 0 : i32
    return %c0_i32, %c0_i32_0 : i32, i32
  }
  func.func @transform_2(%arg0: i32, %arg1: i32) -> (i32, i32) {
    %c0_i32 = arith.constant 0 : i32
    %c0_i32_0 = arith.constant 0 : i32
    %c0_i32_1 = arith.constant 0 : i32
    return %c0_i32, %c0_i32_0 : i32, i32
  }
  func.func @transform_3(%arg0: i32, %arg1: i32) -> (i32, i32, i32) {
    %c0_i32 = arith.constant 0 : i32
    %c0_i32_0 = arith.constant 0 : i32
    return %arg0, %c0_i32, %arg1 : i32, i32, i32
  }
}

module attributes {stable_mosaic.version = 11 : i64} {
  func.func @_conv_lrelu_stats_kernel(%arg0: i32, %arg1: i32, %arg2: memref<32x48xbf16, #tpu.memory_space<vmem>>, %arg3: memref<32x1xf32, #tpu.memory_space<vmem>>, %arg4: memref<1x48x5xbf16, #tpu.memory_space<vmem>>, %arg5: memref<1x32x5xbf16, #tpu.memory_space<vmem>>, %arg6: memref<1x1x32x1xf32, #tpu.memory_space<vmem>>, %arg7: memref<1x1x32x1xf32, #tpu.memory_space<vmem>>) attributes {dimension_semantics = [#tpu.dimension_semantics<parallel>, #tpu.dimension_semantics<parallel>], iteration_bounds = array<i64: 2, 1>, scalar_prefetch = 0 : i64, scratch_operands = 0 : i64, tpu.core_type = #tpu.core_type<tc>, window_params = [{pipeline_mode = #tpu.pipeline_mode<synchronous>, transform_indices = @transform_0, window_bounds = array<i64: 32, 48>}, {pipeline_mode = #tpu.pipeline_mode<synchronous>, transform_indices = @transform_1, window_bounds = array<i64: 32, 1>}, {transform_indices = @transform_2, window_bounds = array<i64: 1, 48, 5>}, {transform_indices = @transform_3, window_bounds = array<i64: 1, 32, 5>}, {transform_indices = @transform_4, window_bounds = array<i64: 1, 1, 32, 1>}, {transform_indices = @transform_5, window_bounds = array<i64: 1, 1, 32, 1>}]} {
    %c0 = arith.constant 0 : index
    %c0_0 = arith.constant 0 : index
    %0 = vector.load %arg2[%c0, %c0_0] : memref<32x48xbf16, #tpu.memory_space<vmem>>, vector<32x48xbf16>
    %c0_1 = arith.constant 0 : index
    %c0_2 = arith.constant 0 : index
    %c0_3 = arith.constant 0 : index
    %1 = vector.load %arg4[%c0_1, %c0_2, %c0_3] : memref<1x48x5xbf16, #tpu.memory_space<vmem>>, vector<1x48x5xbf16>
    %2 = vector.shape_cast %1 : vector<1x48x5xbf16> to vector<48x5xbf16>
    %cst = arith.constant dense<0.000000e+00> : vector<32x5xf32>
    %3 = tpu.matmul %0, %2, %cst {dimension_numbers = #tpu.dot_dimension_numbers<[1], [0], [0], [1], [0, 0, 1, 1], [], []>} : vector<32x48xbf16>, vector<48x5xbf16>, vector<32x5xf32> -> vector<32x5xf32>
    %c0_4 = arith.constant 0 : index
    %c0_5 = arith.constant 0 : index
    %4 = vector.load %arg3[%c0_4, %c0_5] : memref<32x1xf32, #tpu.memory_space<vmem>>, vector<32x1xf32>
    %5 = vector.broadcast %4 : vector<32x1xf32> to vector<32x5xf32>
    %6 = arith.addf %3, %5 : vector<32x5xf32>
    %cst_6 = arith.constant 0.000000e+00 : f32
    %7 = vector.broadcast %cst_6 : f32 to vector<32x5xf32>
    %8 = arith.cmpf oge, %6, %7 : vector<32x5xf32>
    %cst_7 = arith.constant 0.00999999977 : f32
    %9 = vector.broadcast %cst_7 : f32 to vector<32x5xf32>
    %10 = arith.mulf %9, %6 : vector<32x5xf32>
    %11 = arith.select %8, %6, %10 : vector<32x5xi1>, vector<32x5xf32>
    %12 = arith.truncf %11 : vector<32x5xf32> to vector<32x5xbf16>
    %c0_8 = arith.constant 0 : index
    %c0_9 = arith.constant 0 : index
    %c0_10 = arith.constant 0 : index
    %13 = vector.load %arg5[%c0_8, %c0_9, %c0_10] : memref<1x32x5xbf16, #tpu.memory_space<vmem>>, vector<1x32x5xbf16>
    %14 = vector.shape_cast %13 : vector<1x32x5xbf16> to vector<32x5xbf16>
    %15 = vector.shape_cast %12 : vector<32x5xbf16> to vector<1x32x5xbf16>
    tpu.vector_store %arg5[%c0_8, %c0_9, %c0_10], %15 {strides = array<i32>} : memref<1x32x5xbf16, #tpu.memory_space<vmem>>, vector<1x32x5xbf16>,
    %cst_11 = arith.constant dense<0.000000e+00> : vector<32xf32>
    %16 = vector.multi_reduction <add>, %11, %cst_11 [1] : vector<32x5xf32> to vector<32xf32>
    %17 = vector.shape_cast %16 : vector<32xf32> to vector<32x1xf32>
    %c0_12 = arith.constant 0 : index
    %c0_13 = arith.constant 0 : index
    %c0_14 = arith.constant 0 : index
    %c0_15 = arith.constant 0 : index
    %18 = vector.load %arg6[%c0_12, %c0_13, %c0_14, %c0_15] : memref<1x1x32x1xf32, #tpu.memory_space<vmem>>, vector<1x1x32x1xf32>
    %19 = vector.shape_cast %18 : vector<1x1x32x1xf32> to vector<32x1xf32>
    %20 = vector.shape_cast %17 : vector<32x1xf32> to vector<1x1x32x1xf32>
    tpu.vector_store %arg6[%c0_12, %c0_13, %c0_14, %c0_15], %20 {strides = array<i32>} : memref<1x1x32x1xf32, #tpu.memory_space<vmem>>, vector<1x1x32x1xf32>,
    %21 = arith.mulf %11, %11 : vector<32x5xf32>
    %cst_16 = arith.constant dense<0.000000e+00> : vector<32xf32>
    %22 = vector.multi_reduction <add>, %21, %cst_16 [1] : vector<32x5xf32> to vector<32xf32>
    %23 = vector.shape_cast %22 : vector<32xf32> to vector<32x1xf32>
    %c0_17 = arith.constant 0 : index
    %c0_18 = arith.constant 0 : index
    %c0_19 = arith.constant 0 : index
    %c0_20 = arith.constant 0 : index
    %24 = vector.load %arg7[%c0_17, %c0_18, %c0_19, %c0_20] : memref<1x1x32x1xf32, #tpu.memory_space<vmem>>, vector<1x1x32x1xf32>
    %25 = vector.shape_cast %24 : vector<1x1x32x1xf32> to vector<32x1xf32>
    %26 = vector.shape_cast %23 : vector<32x1xf32> to vector<1x1x32x1xf32>
    tpu.vector_store %arg7[%c0_17, %c0_18, %c0_19, %c0_20], %26 {strides = array<i32>} : memref<1x1x32x1xf32, #tpu.memory_space<vmem>>, vector<1x1x32x1xf32>,
    return
  }
  func.func @transform_0(%arg0: i32, %arg1: i32) -> (i32, i32) {
    %c0_i32 = arith.constant 0 : i32
    %c0_i32_0 = arith.constant 0 : i32
    %c0_i32_1 = arith.constant 0 : i32
    return %c0_i32, %c0_i32_0 : i32, i32
  }
  func.func @transform_1(%arg0: i32, %arg1: i32) -> (i32, i32) {
    %c0_i32 = arith.constant 0 : i32
    %c0_i32_0 = arith.constant 0 : i32
    %c0_i32_1 = arith.constant 0 : i32
    return %c0_i32, %c0_i32_0 : i32, i32
  }
  func.func @transform_2(%arg0: i32, %arg1: i32) -> (i32, i32, i32) {
    %c0_i32 = arith.constant 0 : i32
    %c0_i32_0 = arith.constant 0 : i32
    return %arg0, %c0_i32, %arg1 : i32, i32, i32
  }
  func.func @transform_3(%arg0: i32, %arg1: i32) -> (i32, i32, i32) {
    %c0_i32 = arith.constant 0 : i32
    %c0_i32_0 = arith.constant 0 : i32
    return %arg0, %c0_i32, %arg1 : i32, i32, i32
  }
  func.func @transform_4(%arg0: i32, %arg1: i32) -> (i32, i32, i32, i32) {
    %c0_i32 = arith.constant 0 : i32
    %c0_i32_0 = arith.constant 0 : i32
    %c0_i32_1 = arith.constant 0 : i32
    return %arg0, %arg1, %c0_i32, %c0_i32_0 : i32, i32, i32, i32
  }
  func.func @transform_5(%arg0: i32, %arg1: i32) -> (i32, i32, i32, i32) {
    %c0_i32 = arith.constant 0 : i32
    %c0_i32_0 = arith.constant 0 : i32
    %c0_i32_1 = arith.constant 0 : i32
    return %arg0, %arg1, %c0_i32, %c0_i32_0 : i32, i32, i32, i32
  }
}

module attributes {stable_mosaic.version = 11 : i64} {
  func.func @_conv_lrelu_stats_kernel(%arg0: i32, %arg1: i32, %arg2: memref<16x96xbf16, #tpu.memory_space<vmem>>, %arg3: memref<16x1xf32, #tpu.memory_space<vmem>>, %arg4: memref<1x96x7xbf16, #tpu.memory_space<vmem>>, %arg5: memref<1x16x7xbf16, #tpu.memory_space<vmem>>, %arg6: memref<1x1x16x1xf32, #tpu.memory_space<vmem>>, %arg7: memref<1x1x16x1xf32, #tpu.memory_space<vmem>>) attributes {dimension_semantics = [#tpu.dimension_semantics<parallel>, #tpu.dimension_semantics<parallel>], iteration_bounds = array<i64: 2, 1>, scalar_prefetch = 0 : i64, scratch_operands = 0 : i64, tpu.core_type = #tpu.core_type<tc>, window_params = [{pipeline_mode = #tpu.pipeline_mode<synchronous>, transform_indices = @transform_0, window_bounds = array<i64: 16, 96>}, {pipeline_mode = #tpu.pipeline_mode<synchronous>, transform_indices = @transform_1, window_bounds = array<i64: 16, 1>}, {transform_indices = @transform_2, window_bounds = array<i64: 1, 96, 7>}, {transform_indices = @transform_3, window_bounds = array<i64: 1, 16, 7>}, {transform_indices = @transform_4, window_bounds = array<i64: 1, 1, 16, 1>}, {transform_indices = @transform_5, window_bounds = array<i64: 1, 1, 16, 1>}]} {
    %c0 = arith.constant 0 : index
    %c0_0 = arith.constant 0 : index
    %0 = vector.load %arg2[%c0, %c0_0] : memref<16x96xbf16, #tpu.memory_space<vmem>>, vector<16x96xbf16>
    %c0_1 = arith.constant 0 : index
    %c0_2 = arith.constant 0 : index
    %c0_3 = arith.constant 0 : index
    %1 = vector.load %arg4[%c0_1, %c0_2, %c0_3] : memref<1x96x7xbf16, #tpu.memory_space<vmem>>, vector<1x96x7xbf16>
    %2 = vector.shape_cast %1 : vector<1x96x7xbf16> to vector<96x7xbf16>
    %cst = arith.constant dense<0.000000e+00> : vector<16x7xf32>
    %3 = tpu.matmul %0, %2, %cst {dimension_numbers = #tpu.dot_dimension_numbers<[1], [0], [0], [1], [0, 0, 1, 1], [], []>} : vector<16x96xbf16>, vector<96x7xbf16>, vector<16x7xf32> -> vector<16x7xf32>
    %c0_4 = arith.constant 0 : index
    %c0_5 = arith.constant 0 : index
    %4 = vector.load %arg3[%c0_4, %c0_5] : memref<16x1xf32, #tpu.memory_space<vmem>>, vector<16x1xf32>
    %5 = vector.broadcast %4 : vector<16x1xf32> to vector<16x7xf32>
    %6 = arith.addf %3, %5 : vector<16x7xf32>
    %cst_6 = arith.constant 0.000000e+00 : f32
    %7 = vector.broadcast %cst_6 : f32 to vector<16x7xf32>
    %8 = arith.cmpf oge, %6, %7 : vector<16x7xf32>
    %cst_7 = arith.constant 0.00999999977 : f32
    %9 = vector.broadcast %cst_7 : f32 to vector<16x7xf32>
    %10 = arith.mulf %9, %6 : vector<16x7xf32>
    %11 = arith.select %8, %6, %10 : vector<16x7xi1>, vector<16x7xf32>
    %12 = arith.truncf %11 : vector<16x7xf32> to vector<16x7xbf16>
    %c0_8 = arith.constant 0 : index
    %c0_9 = arith.constant 0 : index
    %c0_10 = arith.constant 0 : index
    %13 = vector.load %arg5[%c0_8, %c0_9, %c0_10] : memref<1x16x7xbf16, #tpu.memory_space<vmem>>, vector<1x16x7xbf16>
    %14 = vector.shape_cast %13 : vector<1x16x7xbf16> to vector<16x7xbf16>
    %15 = vector.shape_cast %12 : vector<16x7xbf16> to vector<1x16x7xbf16>
    tpu.vector_store %arg5[%c0_8, %c0_9, %c0_10], %15 {strides = array<i32>} : memref<1x16x7xbf16, #tpu.memory_space<vmem>>, vector<1x16x7xbf16>,
    %cst_11 = arith.constant dense<0.000000e+00> : vector<16xf32>
    %16 = vector.multi_reduction <add>, %11, %cst_11 [1] : vector<16x7xf32> to vector<16xf32>
    %17 = vector.shape_cast %16 : vector<16xf32> to vector<16x1xf32>
    %c0_12 = arith.constant 0 : index
    %c0_13 = arith.constant 0 : index
    %c0_14 = arith.constant 0 : index
    %c0_15 = arith.constant 0 : index
    %18 = vector.load %arg6[%c0_12, %c0_13, %c0_14, %c0_15] : memref<1x1x16x1xf32, #tpu.memory_space<vmem>>, vector<1x1x16x1xf32>
    %19 = vector.shape_cast %18 : vector<1x1x16x1xf32> to vector<16x1xf32>
    %20 = vector.shape_cast %17 : vector<16x1xf32> to vector<1x1x16x1xf32>
    tpu.vector_store %arg6[%c0_12, %c0_13, %c0_14, %c0_15], %20 {strides = array<i32>} : memref<1x1x16x1xf32, #tpu.memory_space<vmem>>, vector<1x1x16x1xf32>,
    %21 = arith.mulf %11, %11 : vector<16x7xf32>
    %cst_16 = arith.constant dense<0.000000e+00> : vector<16xf32>
    %22 = vector.multi_reduction <add>, %21, %cst_16 [1] : vector<16x7xf32> to vector<16xf32>
    %23 = vector.shape_cast %22 : vector<16xf32> to vector<16x1xf32>
    %c0_17 = arith.constant 0 : index
    %c0_18 = arith.constant 0 : index
    %c0_19 = arith.constant 0 : index
    %c0_20 = arith.constant 0 : index
    %24 = vector.load %arg7[%c0_17, %c0_18, %c0_19, %c0_20] : memref<1x1x16x1xf32, #tpu.memory_space<vmem>>, vector<1x1x16x1xf32>
    %25 = vector.shape_cast %24 : vector<1x1x16x1xf32> to vector<16x1xf32>
    %26 = vector.shape_cast %23 : vector<16x1xf32> to vector<1x1x16x1xf32>
    tpu.vector_store %arg7[%c0_17, %c0_18, %c0_19, %c0_20], %26 {strides = array<i32>} : memref<1x1x16x1xf32, #tpu.memory_space<vmem>>, vector<1x1x16x1xf32>,
    return
  }
  func.func @transform_0(%arg0: i32, %arg1: i32) -> (i32, i32) {
    %c0_i32 = arith.constant 0 : i32
    %c0_i32_0 = arith.constant 0 : i32
    %c0_i32_1 = arith.constant 0 : i32
    return %c0_i32, %c0_i32_0 : i32, i32
  }
  func.func @transform_1(%arg0: i32, %arg1: i32) -> (i32, i32) {
    %c0_i32 = arith.constant 0 : i32
    %c0_i32_0 = arith.constant 0 : i32
    %c0_i32_1 = arith.constant 0 : i32
    return %c0_i32, %c0_i32_0 : i32, i32
  }
  func.func @transform_2(%arg0: i32, %arg1: i32) -> (i32, i32, i32) {
    %c0_i32 = arith.constant 0 : i32
    %c0_i32_0 = arith.constant 0 : i32
    return %arg0, %c0_i32, %arg1 : i32, i32, i32
  }
  func.func @transform_3(%arg0: i32, %arg1: i32) -> (i32, i32, i32) {
    %c0_i32 = arith.constant 0 : i32
    %c0_i32_0 = arith.constant 0 : i32
    return %arg0, %c0_i32, %arg1 : i32, i32, i32
  }
  func.func @transform_4(%arg0: i32, %arg1: i32) -> (i32, i32, i32, i32) {
    %c0_i32 = arith.constant 0 : i32
    %c0_i32_0 = arith.constant 0 : i32
    %c0_i32_1 = arith.constant 0 : i32
    return %arg0, %arg1, %c0_i32, %c0_i32_0 : i32, i32, i32, i32
  }
  func.func @transform_5(%arg0: i32, %arg1: i32) -> (i32, i32, i32, i32) {
    %c0_i32 = arith.constant 0 : i32
    %c0_i32_0 = arith.constant 0 : i32
    %c0_i32_1 = arith.constant 0 : i32
    return %arg0, %arg1, %c0_i32, %c0_i32_0 : i32, i32, i32, i32
  }
}

module attributes {stable_mosaic.version = 11 : i64} {
  func.func @_conv_lrelu_stats_kernel(%arg0: i32, %arg1: i32, %arg2: memref<8x48xbf16, #tpu.memory_space<vmem>>, %arg3: memref<8x1xf32, #tpu.memory_space<vmem>>, %arg4: memref<1x48x16xbf16, #tpu.memory_space<vmem>>, %arg5: memref<1x8x16xbf16, #tpu.memory_space<vmem>>, %arg6: memref<1x1x8x1xf32, #tpu.memory_space<vmem>>, %arg7: memref<1x1x8x1xf32, #tpu.memory_space<vmem>>) attributes {dimension_semantics = [#tpu.dimension_semantics<parallel>, #tpu.dimension_semantics<parallel>], iteration_bounds = array<i64: 2, 1>, scalar_prefetch = 0 : i64, scratch_operands = 0 : i64, tpu.core_type = #tpu.core_type<tc>, window_params = [{pipeline_mode = #tpu.pipeline_mode<synchronous>, transform_indices = @transform_0, window_bounds = array<i64: 8, 48>}, {pipeline_mode = #tpu.pipeline_mode<synchronous>, transform_indices = @transform_1, window_bounds = array<i64: 8, 1>}, {transform_indices = @transform_2, window_bounds = array<i64: 1, 48, 16>}, {transform_indices = @transform_3, window_bounds = array<i64: 1, 8, 16>}, {transform_indices = @transform_4, window_bounds = array<i64: 1, 1, 8, 1>}, {transform_indices = @transform_5, window_bounds = array<i64: 1, 1, 8, 1>}]} {
    %c0 = arith.constant 0 : index
    %c0_0 = arith.constant 0 : index
    %0 = vector.load %arg2[%c0, %c0_0] : memref<8x48xbf16, #tpu.memory_space<vmem>>, vector<8x48xbf16>
    %c0_1 = arith.constant 0 : index
    %c0_2 = arith.constant 0 : index
    %c0_3 = arith.constant 0 : index
    %1 = vector.load %arg4[%c0_1, %c0_2, %c0_3] : memref<1x48x16xbf16, #tpu.memory_space<vmem>>, vector<1x48x16xbf16>
    %2 = vector.shape_cast %1 : vector<1x48x16xbf16> to vector<48x16xbf16>
    %cst = arith.constant dense<0.000000e+00> : vector<8x16xf32>
    %3 = tpu.matmul %0, %2, %cst {dimension_numbers = #tpu.dot_dimension_numbers<[1], [0], [0], [1], [0, 0, 1, 1], [], []>} : vector<8x48xbf16>, vector<48x16xbf16>, vector<8x16xf32> -> vector<8x16xf32>
    %c0_4 = arith.constant 0 : index
    %c0_5 = arith.constant 0 : index
    %4 = vector.load %arg3[%c0_4, %c0_5] : memref<8x1xf32, #tpu.memory_space<vmem>>, vector<8x1xf32>
    %5 = vector.broadcast %4 : vector<8x1xf32> to vector<8x16xf32>
    %6 = arith.addf %3, %5 : vector<8x16xf32>
    %cst_6 = arith.constant 0.000000e+00 : f32
    %7 = vector.broadcast %cst_6 : f32 to vector<8x16xf32>
    %8 = arith.cmpf oge, %6, %7 : vector<8x16xf32>
    %cst_7 = arith.constant 0.00999999977 : f32
    %9 = vector.broadcast %cst_7 : f32 to vector<8x16xf32>
    %10 = arith.mulf %9, %6 : vector<8x16xf32>
    %11 = arith.select %8, %6, %10 : vector<8x16xi1>, vector<8x16xf32>
    %12 = arith.truncf %11 : vector<8x16xf32> to vector<8x16xbf16>
    %c0_8 = arith.constant 0 : index
    %c0_9 = arith.constant 0 : index
    %c0_10 = arith.constant 0 : index
    %13 = vector.load %arg5[%c0_8, %c0_9, %c0_10] : memref<1x8x16xbf16, #tpu.memory_space<vmem>>, vector<1x8x16xbf16>
    %14 = vector.shape_cast %13 : vector<1x8x16xbf16> to vector<8x16xbf16>
    %15 = vector.shape_cast %12 : vector<8x16xbf16> to vector<1x8x16xbf16>
    tpu.vector_store %arg5[%c0_8, %c0_9, %c0_10], %15 {strides = array<i32>} : memref<1x8x16xbf16, #tpu.memory_space<vmem>>, vector<1x8x16xbf16>,
    %cst_11 = arith.constant dense<0.000000e+00> : vector<8xf32>
    %16 = vector.multi_reduction <add>, %11, %cst_11 [1] : vector<8x16xf32> to vector<8xf32>
    %17 = vector.shape_cast %16 : vector<8xf32> to vector<8x1xf32>
    %c0_12 = arith.constant 0 : index
    %c0_13 = arith.constant 0 : index
    %c0_14 = arith.constant 0 : index
    %c0_15 = arith.constant 0 : index
    %18 = vector.load %arg6[%c0_12, %c0_13, %c0_14, %c0_15] : memref<1x1x8x1xf32, #tpu.memory_space<vmem>>, vector<1x1x8x1xf32>
    %19 = vector.shape_cast %18 : vector<1x1x8x1xf32> to vector<8x1xf32>
    %20 = vector.shape_cast %17 : vector<8x1xf32> to vector<1x1x8x1xf32>
    tpu.vector_store %arg6[%c0_12, %c0_13, %c0_14, %c0_15], %20 {strides = array<i32>} : memref<1x1x8x1xf32, #tpu.memory_space<vmem>>, vector<1x1x8x1xf32>,
    %21 = arith.mulf %11, %11 : vector<8x16xf32>
    %cst_16 = arith.constant dense<0.000000e+00> : vector<8xf32>
    %22 = vector.multi_reduction <add>, %21, %cst_16 [1] : vector<8x16xf32> to vector<8xf32>
    %23 = vector.shape_cast %22 : vector<8xf32> to vector<8x1xf32>
    %c0_17 = arith.constant 0 : index
    %c0_18 = arith.constant 0 : index
    %c0_19 = arith.constant 0 : index
    %c0_20 = arith.constant 0 : index
    %24 = vector.load %arg7[%c0_17, %c0_18, %c0_19, %c0_20] : memref<1x1x8x1xf32, #tpu.memory_space<vmem>>, vector<1x1x8x1xf32>
    %25 = vector.shape_cast %24 : vector<1x1x8x1xf32> to vector<8x1xf32>
    %26 = vector.shape_cast %23 : vector<8x1xf32> to vector<1x1x8x1xf32>
    tpu.vector_store %arg7[%c0_17, %c0_18, %c0_19, %c0_20], %26 {strides = array<i32>} : memref<1x1x8x1xf32, #tpu.memory_space<vmem>>, vector<1x1x8x1xf32>,
    return
  }
  func.func @transform_0(%arg0: i32, %arg1: i32) -> (i32, i32) {
    %c0_i32 = arith.constant 0 : i32
    %c0_i32_0 = arith.constant 0 : i32
    %c0_i32_1 = arith.constant 0 : i32
    return %c0_i32, %c0_i32_0 : i32, i32
  }
  func.func @transform_1(%arg0: i32, %arg1: i32) -> (i32, i32) {
    %c0_i32 = arith.constant 0 : i32
    %c0_i32_0 = arith.constant 0 : i32
    %c0_i32_1 = arith.constant 0 : i32
    return %c0_i32, %c0_i32_0 : i32, i32
  }
  func.func @transform_2(%arg0: i32, %arg1: i32) -> (i32, i32, i32) {
    %c0_i32 = arith.constant 0 : i32
    %c0_i32_0 = arith.constant 0 : i32
    return %arg0, %c0_i32, %arg1 : i32, i32, i32
  }
  func.func @transform_3(%arg0: i32, %arg1: i32) -> (i32, i32, i32) {
    %c0_i32 = arith.constant 0 : i32
    %c0_i32_0 = arith.constant 0 : i32
    return %arg0, %c0_i32, %arg1 : i32, i32, i32
  }
  func.func @transform_4(%arg0: i32, %arg1: i32) -> (i32, i32, i32, i32) {
    %c0_i32 = arith.constant 0 : i32
    %c0_i32_0 = arith.constant 0 : i32
    %c0_i32_1 = arith.constant 0 : i32
    return %arg0, %arg1, %c0_i32, %c0_i32_0 : i32, i32, i32, i32
  }
  func.func @transform_5(%arg0: i32, %arg1: i32) -> (i32, i32, i32, i32) {
    %c0_i32 = arith.constant 0 : i32
    %c0_i32_0 = arith.constant 0 : i32
    %c0_i32_1 = arith.constant 0 : i32
    return %arg0, %arg1, %c0_i32, %c0_i32_0 : i32, i32, i32, i32
  }
}

module attributes {stable_mosaic.version = 11 : i64} {
  func.func @_conv_lrelu_stats_kernel(%arg0: i32, %arg1: i32, %arg2: memref<8x24xbf16, #tpu.memory_space<vmem>>, %arg3: memref<8x1xf32, #tpu.memory_space<vmem>>, %arg4: memref<1x24x34xbf16, #tpu.memory_space<vmem>>, %arg5: memref<1x8x34xbf16, #tpu.memory_space<vmem>>, %arg6: memref<1x1x8x1xf32, #tpu.memory_space<vmem>>, %arg7: memref<1x1x8x1xf32, #tpu.memory_space<vmem>>) attributes {dimension_semantics = [#tpu.dimension_semantics<parallel>, #tpu.dimension_semantics<parallel>], iteration_bounds = array<i64: 2, 1>, scalar_prefetch = 0 : i64, scratch_operands = 0 : i64, tpu.core_type = #tpu.core_type<tc>, window_params = [{pipeline_mode = #tpu.pipeline_mode<synchronous>, transform_indices = @transform_0, window_bounds = array<i64: 8, 24>}, {pipeline_mode = #tpu.pipeline_mode<synchronous>, transform_indices = @transform_1, window_bounds = array<i64: 8, 1>}, {transform_indices = @transform_2, window_bounds = array<i64: 1, 24, 34>}, {transform_indices = @transform_3, window_bounds = array<i64: 1, 8, 34>}, {transform_indices = @transform_4, window_bounds = array<i64: 1, 1, 8, 1>}, {transform_indices = @transform_5, window_bounds = array<i64: 1, 1, 8, 1>}]} {
    %c0 = arith.constant 0 : index
    %c0_0 = arith.constant 0 : index
    %0 = vector.load %arg2[%c0, %c0_0] : memref<8x24xbf16, #tpu.memory_space<vmem>>, vector<8x24xbf16>
    %c0_1 = arith.constant 0 : index
    %c0_2 = arith.constant 0 : index
    %c0_3 = arith.constant 0 : index
    %1 = vector.load %arg4[%c0_1, %c0_2, %c0_3] : memref<1x24x34xbf16, #tpu.memory_space<vmem>>, vector<1x24x34xbf16>
    %2 = vector.shape_cast %1 : vector<1x24x34xbf16> to vector<24x34xbf16>
    %cst = arith.constant dense<0.000000e+00> : vector<8x34xf32>
    %3 = tpu.matmul %0, %2, %cst {dimension_numbers = #tpu.dot_dimension_numbers<[1], [0], [0], [1], [0, 0, 1, 1], [], []>} : vector<8x24xbf16>, vector<24x34xbf16>, vector<8x34xf32> -> vector<8x34xf32>
    %c0_4 = arith.constant 0 : index
    %c0_5 = arith.constant 0 : index
    %4 = vector.load %arg3[%c0_4, %c0_5] : memref<8x1xf32, #tpu.memory_space<vmem>>, vector<8x1xf32>
    %5 = vector.broadcast %4 : vector<8x1xf32> to vector<8x34xf32>
    %6 = arith.addf %3, %5 : vector<8x34xf32>
    %cst_6 = arith.constant 0.000000e+00 : f32
    %7 = vector.broadcast %cst_6 : f32 to vector<8x34xf32>
    %8 = arith.cmpf oge, %6, %7 : vector<8x34xf32>
    %cst_7 = arith.constant 0.00999999977 : f32
    %9 = vector.broadcast %cst_7 : f32 to vector<8x34xf32>
    %10 = arith.mulf %9, %6 : vector<8x34xf32>
    %11 = arith.select %8, %6, %10 : vector<8x34xi1>, vector<8x34xf32>
    %12 = arith.truncf %11 : vector<8x34xf32> to vector<8x34xbf16>
    %c0_8 = arith.constant 0 : index
    %c0_9 = arith.constant 0 : index
    %c0_10 = arith.constant 0 : index
    %13 = vector.load %arg5[%c0_8, %c0_9, %c0_10] : memref<1x8x34xbf16, #tpu.memory_space<vmem>>, vector<1x8x34xbf16>
    %14 = vector.shape_cast %13 : vector<1x8x34xbf16> to vector<8x34xbf16>
    %15 = vector.shape_cast %12 : vector<8x34xbf16> to vector<1x8x34xbf16>
    tpu.vector_store %arg5[%c0_8, %c0_9, %c0_10], %15 {strides = array<i32>} : memref<1x8x34xbf16, #tpu.memory_space<vmem>>, vector<1x8x34xbf16>,
    %cst_11 = arith.constant dense<0.000000e+00> : vector<8xf32>
    %16 = vector.multi_reduction <add>, %11, %cst_11 [1] : vector<8x34xf32> to vector<8xf32>
    %17 = vector.shape_cast %16 : vector<8xf32> to vector<8x1xf32>
    %c0_12 = arith.constant 0 : index
    %c0_13 = arith.constant 0 : index
    %c0_14 = arith.constant 0 : index
    %c0_15 = arith.constant 0 : index
    %18 = vector.load %arg6[%c0_12, %c0_13, %c0_14, %c0_15] : memref<1x1x8x1xf32, #tpu.memory_space<vmem>>, vector<1x1x8x1xf32>
    %19 = vector.shape_cast %18 : vector<1x1x8x1xf32> to vector<8x1xf32>
    %20 = vector.shape_cast %17 : vector<8x1xf32> to vector<1x1x8x1xf32>
    tpu.vector_store %arg6[%c0_12, %c0_13, %c0_14, %c0_15], %20 {strides = array<i32>} : memref<1x1x8x1xf32, #tpu.memory_space<vmem>>, vector<1x1x8x1xf32>,
    %21 = arith.mulf %11, %11 : vector<8x34xf32>
    %cst_16 = arith.constant dense<0.000000e+00> : vector<8xf32>
    %22 = vector.multi_reduction <add>, %21, %cst_16 [1] : vector<8x34xf32> to vector<8xf32>
    %23 = vector.shape_cast %22 : vector<8xf32> to vector<8x1xf32>
    %c0_17 = arith.constant 0 : index
    %c0_18 = arith.constant 0 : index
    %c0_19 = arith.constant 0 : index
    %c0_20 = arith.constant 0 : index
    %24 = vector.load %arg7[%c0_17, %c0_18, %c0_19, %c0_20] : memref<1x1x8x1xf32, #tpu.memory_space<vmem>>, vector<1x1x8x1xf32>
    %25 = vector.shape_cast %24 : vector<1x1x8x1xf32> to vector<8x1xf32>
    %26 = vector.shape_cast %23 : vector<8x1xf32> to vector<1x1x8x1xf32>
    tpu.vector_store %arg7[%c0_17, %c0_18, %c0_19, %c0_20], %26 {strides = array<i32>} : memref<1x1x8x1xf32, #tpu.memory_space<vmem>>, vector<1x1x8x1xf32>,
    return
  }
  func.func @transform_0(%arg0: i32, %arg1: i32) -> (i32, i32) {
    %c0_i32 = arith.constant 0 : i32
    %c0_i32_0 = arith.constant 0 : i32
    %c0_i32_1 = arith.constant 0 : i32
    return %c0_i32, %c0_i32_0 : i32, i32
  }
  func.func @transform_1(%arg0: i32, %arg1: i32) -> (i32, i32) {
    %c0_i32 = arith.constant 0 : i32
    %c0_i32_0 = arith.constant 0 : i32
    %c0_i32_1 = arith.constant 0 : i32
    return %c0_i32, %c0_i32_0 : i32, i32
  }
  func.func @transform_2(%arg0: i32, %arg1: i32) -> (i32, i32, i32) {
    %c0_i32 = arith.constant 0 : i32
    %c0_i32_0 = arith.constant 0 : i32
    return %arg0, %c0_i32, %arg1 : i32, i32, i32
  }
  func.func @transform_3(%arg0: i32, %arg1: i32) -> (i32, i32, i32) {
    %c0_i32 = arith.constant 0 : i32
    %c0_i32_0 = arith.constant 0 : i32
    return %arg0, %c0_i32, %arg1 : i32, i32, i32
  }
  func.func @transform_4(%arg0: i32, %arg1: i32) -> (i32, i32, i32, i32) {
    %c0_i32 = arith.constant 0 : i32
    %c0_i32_0 = arith.constant 0 : i32
    %c0_i32_1 = arith.constant 0 : i32
    return %arg0, %arg1, %c0_i32, %c0_i32_0 : i32, i32, i32, i32
  }
  func.func @transform_5(%arg0: i32, %arg1: i32) -> (i32, i32, i32, i32) {
    %c0_i32 = arith.constant 0 : i32
    %c0_i32_0 = arith.constant 0 : i32
    %c0_i32_1 = arith.constant 0 : i32
    return %arg0, %arg1, %c0_i32, %c0_i32_0 : i32, i32, i32, i32
  }
}

module attributes {stable_mosaic.version = 11 : i64} {
  func.func @_bn_apply_kernel(%arg0: i32, %arg1: i32, %arg2: memref<1x8x34xbf16, #tpu.memory_space<vmem>>, %arg3: memref<8x1xf32, #tpu.memory_space<vmem>>, %arg4: memref<8x1xf32, #tpu.memory_space<vmem>>, %arg5: memref<1x8x34xf32, #tpu.memory_space<vmem>>) attributes {dimension_semantics = [#tpu.dimension_semantics<parallel>, #tpu.dimension_semantics<parallel>], iteration_bounds = array<i64: 2, 1>, scalar_prefetch = 0 : i64, scratch_operands = 0 : i64, tpu.core_type = #tpu.core_type<tc>, window_params = [{transform_indices = @transform_0, window_bounds = array<i64: 1, 8, 34>}, {pipeline_mode = #tpu.pipeline_mode<synchronous>, transform_indices = @transform_1, window_bounds = array<i64: 8, 1>}, {pipeline_mode = #tpu.pipeline_mode<synchronous>, transform_indices = @transform_2, window_bounds = array<i64: 8, 1>}, {transform_indices = @transform_3, window_bounds = array<i64: 1, 8, 34>}]} {
    %c0 = arith.constant 0 : index
    %c0_0 = arith.constant 0 : index
    %c0_1 = arith.constant 0 : index
    %0 = vector.load %arg2[%c0, %c0_0, %c0_1] : memref<1x8x34xbf16, #tpu.memory_space<vmem>>, vector<1x8x34xbf16>
    %1 = vector.shape_cast %0 : vector<1x8x34xbf16> to vector<8x34xbf16>
    %2 = arith.extf %1 : vector<8x34xbf16> to vector<8x34xf32>
    %c0_2 = arith.constant 0 : index
    %c0_3 = arith.constant 0 : index
    %3 = vector.load %arg3[%c0_2, %c0_3] : memref<8x1xf32, #tpu.memory_space<vmem>>, vector<8x1xf32>
    %4 = vector.broadcast %3 : vector<8x1xf32> to vector<8x34xf32>
    %5 = arith.subf %2, %4 : vector<8x34xf32>
    %c0_4 = arith.constant 0 : index
    %c0_5 = arith.constant 0 : index
    %6 = vector.load %arg4[%c0_4, %c0_5] : memref<8x1xf32, #tpu.memory_space<vmem>>, vector<8x1xf32>
    %7 = vector.broadcast %6 : vector<8x1xf32> to vector<8x34xf32>
    %8 = arith.mulf %5, %7 : vector<8x34xf32>
    %c0_6 = arith.constant 0 : index
    %c0_7 = arith.constant 0 : index
    %c0_8 = arith.constant 0 : index
    %9 = vector.load %arg5[%c0_6, %c0_7, %c0_8] : memref<1x8x34xf32, #tpu.memory_space<vmem>>, vector<1x8x34xf32>
    %10 = vector.shape_cast %9 : vector<1x8x34xf32> to vector<8x34xf32>
    %11 = vector.shape_cast %8 : vector<8x34xf32> to vector<1x8x34xf32>
    tpu.vector_store %arg5[%c0_6, %c0_7, %c0_8], %11 {strides = array<i32>} : memref<1x8x34xf32, #tpu.memory_space<vmem>>, vector<1x8x34xf32>,
    return
  }
  func.func @transform_0(%arg0: i32, %arg1: i32) -> (i32, i32, i32) {
    %c0_i32 = arith.constant 0 : i32
    %c0_i32_0 = arith.constant 0 : i32
    return %arg0, %c0_i32, %arg1 : i32, i32, i32
  }
  func.func @transform_1(%arg0: i32, %arg1: i32) -> (i32, i32) {
    %c0_i32 = arith.constant 0 : i32
    %c0_i32_0 = arith.constant 0 : i32
    %c0_i32_1 = arith.constant 0 : i32
    return %c0_i32, %c0_i32_0 : i32, i32
  }
  func.func @transform_2(%arg0: i32, %arg1: i32) -> (i32, i32) {
    %c0_i32 = arith.constant 0 : i32
    %c0_i32_0 = arith.constant 0 : i32
    %c0_i32_1 = arith.constant 0 : i32
    return %c0_i32, %c0_i32_0 : i32, i32
  }
  func.func @transform_3(%arg0: i32, %arg1: i32) -> (i32, i32, i32) {
    %c0_i32 = arith.constant 0 : i32
    %c0_i32_0 = arith.constant 0 : i32
    return %arg0, %c0_i32, %arg1 : i32, i32, i32
  }
}

</mosaic_0001>

<llo_original>
// kernel: cae_3_bn_forward.8
$region0: #{cae_3_bn_forward.8}
  #allocation0 [shape = 'u32[]', space=smem, size = 0x4, offset = 0x4, fixed_abs, tag = 'smem constant byte address 0x4 - core index']
  #allocation1 [shape = 'u32[144,128]{1,0:T(1,128)}', space=vmem, size = 0x12000, scoped, tag = 'internal scratch']
  %s0 = inlined_call_operand.vmem [shape: bf16[8,24], index: 0, kind: input, shape index: {}]
  %s1 = inlined_call_operand.vmem [shape: f32[8,1], index: 1, kind: input, shape index: {}]
  %s2 = inlined_call_operand.vmem [shape: bf16[2,24,15], index: 2, kind: input, shape index: {}]
  %s3 = inlined_call_operand.vmem [shape: bf16[2,8,15], index: 3, kind: output, shape index: {0}]
  %s4 = inlined_call_operand.vmem [shape: f32[2,1,8,1], index: 4, kind: output, shape index: {1}]
  %s5 = inlined_call_operand.vmem [shape: f32[2,1,8,1], index: 5, kind: output, shape index: {2}]
  %6 = xla_tuple %s3, %s4, %s5
  %s7 = sld [smem:[#allocation0]]
  $region61: #{cae_3_bn_forward.8} parent=0
    _
  %s9 = ssub.s32 1, %s7
  %s10 = scalar_select 0, %s9, %s7
  loop: start=0, step=1, limit=4
  $region2: #{cae_3_bn_forward.8} parent=0 // loop_pre_header
    _
  $region3: #{cae_3_bn_forward.8} parent=0 // loop_header
    %s12 = sphi 0, %s16
    %p13 = scmp.ge.s32.totalorder %s12, 4
    %s19 = sphi 0, %s31
    %s20 = sphi 0, %s27
    %s21 = sphi 0, %s19
    %s22 = sphi 0, %s20
    %s23 = sphi 0, %s21
    %s24 = sphi 0, %s22
    %s32 = sphi 0, %s32
    %s34 = sphi 0, %s32
    %s35 = sphi 0, %s34
    %s49 = sphi 0, %s35
    %s53 = sphi 0, %s53
    %s55 = sphi 0, %s53
    %s56 = sphi 0, %s55
    %s70 = sphi 0, %s56
    %s78 = sphi 0, %s80
    %s81 = sphi 0, %s78
    %s82 = sphi 0, %s81
    %s98 = sphi 0, %s82
    %s106 = sphi 0, %s108
    %s109 = sphi 0, %s106
    %s110 = sphi 0, %s109
    %s126 = sphi 0, %s110
    %s134 = sphi 0, %s136
    %s137 = sphi 0, %s134
    %s138 = sphi 0, %s137
    %s154 = sphi 0, %s138
    %s162 = sphi 0, %s164
    %s165 = sphi 0, %s162
    %s166 = sphi 0, %s165
    %s182 = sphi 0, %s166
  $region4: #{cae_3_bn_forward.8} parent=0 // loop_header_branch
    %15 = sbr.rel (%p13) target = $region8
  $region5: #{cae_3_bn_forward.8} parent=0 // loop_body
    %s17 = ssub.s32 %s12, 1
    %s18 = ssub.s32 %s12, 2
    %s25 = sadd.s32 1, %s20
    %p26 = scmp.ge.s32.totalorder %s25, 1
    %s27 = scalar_select %p26, 0, %s25
    %s28 = sadd.s32 1, %s19
    %s29 = scalar_select %p26, %s28, %s19
    %p30 = scmp.ge.s32.totalorder %s29, 2
    %s31 = scalar_select %p30, 0, %s29
    %s33 = sadd.s32 %s32, 1
    %p36 = scmp.eq.s32.totalorder %s12, 1
    %p37 = scmp.ne.s32.totalorder %s32, %s34
    %p38 = scmp.eq.s32.totalorder %s12, 0
    %p39 = por %p37, %p38
    %p40 = scmp.ne.s32.totalorder %s32, %s34
    %p41 = scmp.eq.s32.totalorder %s17, 1
    %p42 = por %p40, %p41
    %p43 = scmp.ne.s32.totalorder %s34, %s35
    %p44 = scmp.eq.s32.totalorder %s17, 0
    %p45 = por %p43, %p44
    %p46 = scmp.ne.s32.totalorder %s34, %s35
    %p47 = scmp.eq.s32.totalorder %s18, 1
    %p48 = por %p46, %p47
    %p50 = scmp.ne.s32.totalorder %s35, %s49
    %p51 = scmp.eq.s32.totalorder %s18, 0
    %p52 = por %p50, %p51
    %s54 = sadd.s32 %s53, 1
    %p57 = scmp.eq.s32.totalorder %s12, 1
    %p58 = scmp.ne.s32.totalorder %s53, %s55
    %p59 = scmp.eq.s32.totalorder %s12, 0
    %p60 = por %p58, %p59
    %p61 = scmp.ne.s32.totalorder %s53, %s55
    %p62 = scmp.eq.s32.totalorder %s17, 1
    %p63 = por %p61, %p62
    %p64 = scmp.ne.s32.totalorder %s55, %s56
    %p65 = scmp.eq.s32.totalorder %s17, 0
    %p66 = por %p64, %p65
    %p67 = scmp.ne.s32.totalorder %s55, %s56
    %p68 = scmp.eq.s32.totalorder %s18, 1
    %p69 = por %p67, %p68
    %p71 = scmp.ne.s32.totalorder %s56, %s70
    %p72 = scmp.eq.s32.totalorder %s18, 0
    %p73 = por %p71, %p72
    %s74 = ssub.s32 %s19, %s31
    %s75 = ssub.s32 %s20, %s27
    %s76 = sor.u32 %s74, %s75
    %p77 = scmp.eq.s32.totalorder %s76, 0
    %s79 = sadd.s32 %s78, 1
    %s80 = scalar_select %p77, %s78, %s79
    %p83 = pneg %p77
    %p84 = scmp.eq.s32.totalorder %s12, 1
    %p85 = por %p83, %p84
    %p86 = scmp.ne.s32.totalorder %s78, %s81
    %p87 = scmp.eq.s32.totalorder %s12, 0
    %p88 = por %p86, %p87
    %p89 = scmp.ne.s32.totalorder %s78, %s81
    %p90 = scmp.eq.s32.totalorder %s17, 1
    %p91 = por %p89, %p90
    %p92 = scmp.ne.s32.totalorder %s81, %s82
    %p93 = scmp.eq.s32.totalorder %s17, 0
    %p94 = por %p92, %p93
    %p95 = scmp.ne.s32.totalorder %s81, %s82
    %p96 = scmp.eq.s32.totalorder %s18, 1
    %p97 = por %p95, %p96
    %p99 = scmp.ne.s32.totalorder %s82, %s98
    %p100 = scmp.eq.s32.totalorder %s18, 0
    %p101 = por %p99, %p100
    %s102 = ssub.s32 %s19, %s31
    %s103 = ssub.s32 %s20, %s27
    %s104 = sor.u32 %s102, %s103
    %p105 = scmp.eq.s32.totalorder %s104, 0
    %s107 = sadd.s32 %s106, 1
    %s108 = scalar_select %p105, %s106, %s107
    %p111 = pneg %p105
    %p112 = scmp.eq.s32.totalorder %s12, 1
    %p113 = por %p111, %p112
    %p114 = scmp.ne.s32.totalorder %s106, %s109
    %p115 = scmp.eq.s32.totalorder %s12, 0
    %p116 = por %p114, %p115
    %p117 = scmp.ne.s32.totalorder %s106, %s109
    %p118 = scmp.eq.s32.totalorder %s17, 1
    %p119 = por %p117, %p118
    %p120 = scmp.ne.s32.totalorder %s109, %s110
    %p121 = scmp.eq.s32.totalorder %s17, 0
    %p122 = por %p120, %p121
    %p123 = scmp.ne.s32.totalorder %s109, %s110
    %p124 = scmp.eq.s32.totalorder %s18, 1
    %p125 = por %p123, %p124
    %p127 = scmp.ne.s32.totalorder %s110, %s126
    %p128 = scmp.eq.s32.totalorder %s18, 0
    %p129 = por %p127, %p128
    %s130 = ssub.s32 %s19, %s31
    %s131 = ssub.s32 %s20, %s27
    %s132 = sor.u32 %s130, %s131
    %p133 = scmp.eq.s32.totalorder %s132, 0
    %s135 = sadd.s32 %s134, 1
    %s136 = scalar_select %p133, %s134, %s135
    %p139 = pneg %p133
    %p140 = scmp.eq.s32.totalorder %s12, 1
    %p141 = por %p139, %p140
    %p142 = scmp.ne.s32.totalorder %s134, %s137
    %p143 = scmp.eq.s32.totalorder %s12, 0
    %p144 = por %p142, %p143
    %p145 = scmp.ne.s32.totalorder %s134, %s137
    %p146 = scmp.eq.s32.totalorder %s17, 1
    %p147 = por %p145, %p146
    %p148 = scmp.ne.s32.totalorder %s137, %s138
    %p149 = scmp.eq.s32.totalorder %s17, 0
    %p150 = por %p148, %p149
    %p151 = scmp.ne.s32.totalorder %s137, %s138
    %p152 = scmp.eq.s32.totalorder %s18, 1
    %p153 = por %p151, %p152
    %p155 = scmp.ne.s32.totalorder %s138, %s154
    %p156 = scmp.eq.s32.totalorder %s18, 0
    %p157 = por %p155, %p156
    %s158 = ssub.s32 %s19, %s31
    %s159 = ssub.s32 %s20, %s27
    %s160 = sor.u32 %s158, %s159
    %p161 = scmp.eq.s32.totalorder %s160, 0
    %s163 = sadd.s32 %s162, 1
    %s164 = scalar_select %p161, %s162, %s163
    %p167 = pneg %p161
    %p168 = scmp.eq.s32.totalorder %s12, 1
    %p169 = por %p167, %p168
    %p170 = scmp.ne.s32.totalorder %s162, %s165
    %p171 = scmp.eq.s32.totalorder %s12, 0
    %p172 = por %p170, %p171
    %p173 = scmp.ne.s32.totalorder %s162, %s165
    %p174 = scmp.eq.s32.totalorder %s17, 1
    %p175 = por %p173, %p174
    %p176 = scmp.ne.s32.totalorder %s165, %s166
    %p177 = scmp.eq.s32.totalorder %s17, 0
    %p178 = por %p176, %p177
    %p179 = scmp.ne.s32.totalorder %s165, %s166
    %p180 = scmp.eq.s32.totalorder %s18, 1
    %p181 = por %p179, %p180
    %p183 = scmp.ne.s32.totalorder %s166, %s182
    %p184 = scmp.eq.s32.totalorder %s18, 0
    %p185 = por %p183, %p184
    %p186 = scmp.le.s32.totalorder 1, %s12
    %p187 = scmp.lt.s32.totalorder %s12, 3
    %p188 = pnand %p186, %p187
    %p189 = pneg %p188
    // Predicated region
    $region9: #{cae_3_bn_forward.8} parent=5 // pred_check
      _
    $region10: #{cae_3_bn_forward.8} parent=5 // pred_check_branch
      %191 = sbr.rel (%p188) target = $region12
    $region11: #{cae_3_bn_forward.8} parent=5 // pred_region
      %s192 = ssub.s32 %s12, 1
      // Predicated region
      $region13: #{cae_3_bn_forward.8} parent=11 // pred_check
        %p193 = pneg %p45
      $region14: #{cae_3_bn_forward.8} parent=11 // pred_check_branch
        %195 = sbr.rel (%p193) target = $region16
      $region15: #{cae_3_bn_forward.8} parent=11 // pred_region
        _
      $region16: #{cae_3_bn_forward.8} parent=11 // pred_fallthru
        _
      // Predicated region
      $region17: #{cae_3_bn_forward.8} parent=11 // pred_check
        %p196 = pneg %p66
      $region18: #{cae_3_bn_forward.8} parent=11 // pred_check_branch
        %198 = sbr.rel (%p196) target = $region20
      $region19: #{cae_3_bn_forward.8} parent=11 // pred_region
        _
      $region20: #{cae_3_bn_forward.8} parent=11 // pred_fallthru
        _
    $region12: #{cae_3_bn_forward.8} parent=5 // pred_fallthru
      _
    %p199 = scmp.lt.s32.totalorder %s12, 2
    // Predicated region
    $region21: #{cae_3_bn_forward.8} parent=5 // pred_check
      %p200 = pneg %p199
    $region22: #{cae_3_bn_forward.8} parent=5 // pred_check_branch
      %202 = sbr.rel (%p200) target = $region24
    $region23: #{cae_3_bn_forward.8} parent=5 // pred_region
      // Predicated region
      $region25: #{cae_3_bn_forward.8} parent=23 // pred_check
        %p203 = pneg %p88
      $region26: #{cae_3_bn_forward.8} parent=23 // pred_check_branch
        %205 = sbr.rel (%p203) target = $region28
      $region27: #{cae_3_bn_forward.8} parent=23 // pred_region
        %p206 = scmp.lt.s32.totalorder %s19, 1
        %s207 = scalar_select %p206, %s19, 1
        %p208 = scmp.lt.s32.totalorder %s20, 0
        %s209 = scalar_select %p208, %s20, 0
        %s210 = smul.addr %s207, 3
        %s211 = sadd.s32 %s209, %s210
        %s212 = smul.addr %s211, 4
        %s213 = scalar_lea.vmem %s2, %s212
      $region28: #{cae_3_bn_forward.8} parent=23 // pred_fallthru
        _
    $region24: #{cae_3_bn_forward.8} parent=5 // pred_fallthru
      _
    %p214 = scmp.le.s32.totalorder 1, %s12
    %p215 = scmp.lt.s32.totalorder %s12, 3
    %p216 = pnand %p214, %p215
    %p217 = pneg %p216
    // Predicated region
    $region29: #{cae_3_bn_forward.8} parent=5 // pred_check
      _
    $region30: #{cae_3_bn_forward.8} parent=5 // pred_check_branch
      %219 = sbr.rel (%p216) target = $region32
    $region31: #{cae_3_bn_forward.8} parent=5 // pred_region
      %s220 = ssub.s32 %s12, 1
      %p221 = pneg %p45
      %p222 = pneg %p42
      %p223 = pneg %p66
      %p224 = pneg %p63
      %p225 = scmp.lt.s32.totalorder %s21, 1
      %s226 = scalar_select %p225, %s21, 1
      %p227 = scmp.lt.s32.totalorder %s22, 0
      %s228 = scalar_select %p227, %s22, 0
      %s229 = smul.addr %s226, 3
      %s230 = sadd.s32 %s228, %s229
      %s231 = smul.addr %s230, 4
      %s232 = scalar_lea.vmem %s2, %s231
      %p233 = pneg %p94
      %p234 = pneg %p91
      %p235 = pneg %p122
      %p236 = pneg %p119
      %p237 = scmp.lt.s32.totalorder %s21, 1
      %s238 = scalar_select %p237, %s21, 1
      %p239 = scmp.lt.s32.totalorder %s22, 0
      %s240 = scalar_select %p239, %s22, 0
      %s241 = sadd.s32 %s240, %s238
      %s242 = smul.addr %s241, 4
      %s243 = scalar_lea.vmem %s3, %s242
      %p244 = pneg %p150
      %p245 = pneg %p147
      %p246 = scmp.lt.s32.totalorder %s21, 1
      %s247 = scalar_select %p246, %s21, 1
      %p248 = scmp.lt.s32.totalorder %s22, 0
      %s249 = scalar_select %p248, %s22, 0
      %s250 = sadd.s32 %s249, %s247
      %s251 = smul.addr %s250, 8
      %s252 = scalar_lea.vmem %s4, %s251
      %p253 = pneg %p178
      %p254 = pneg %p175
      %p255 = scmp.lt.s32.totalorder %s21, 1
      %s256 = scalar_select %p255, %s21, 1
      %p257 = scmp.lt.s32.totalorder %s22, 0
      %s258 = scalar_select %p257, %s22, 0
      %s259 = sadd.s32 %s258, %s256
      %s260 = smul.addr %s259, 8
      %s261 = scalar_lea.vmem %s5, %s260
      %p262 = scmp.lt.s32.totalorder %s21, 1
      %s263 = scalar_select %p262, %s21, 1
      %p264 = scmp.lt.s32.totalorder %s22, 0
      %s265 = scalar_select %p264, %s22, 0
      %s266 = smul.addr %s263, 3
      %s267 = sadd.s32 %s265, %s266
      %s268 = smul.addr %s267, 4
      %s269 = scalar_lea.vmem %s2, %s268
      %p270 = scmp.lt.s32.totalorder %s21, 1
      %s271 = scalar_select %p270, %s21, 1
      %p272 = scmp.lt.s32.totalorder %s22, 0
      %s273 = scalar_select %p272, %s22, 0
      %s274 = sadd.s32 %s273, %s271
      %s275 = smul.addr %s274, 4
      %s276 = scalar_lea.vmem %s3, %s275
      %p277 = scmp.lt.s32.totalorder %s21, 1
      %s278 = scalar_select %p277, %s21, 1
      %p279 = scmp.lt.s32.totalorder %s22, 0
      %s280 = scalar_select %p279, %s22, 0
      %s281 = sadd.s32 %s280, %s278
      %s282 = smul.addr %s281, 8
      %s283 = scalar_lea.vmem %s4, %s282
      %p284 = scmp.lt.s32.totalorder %s21, 1
      %s285 = scalar_select %p284, %s21, 1
      %p286 = scmp.lt.s32.totalorder %s22, 0
      %s287 = scalar_select %p286, %s22, 0
      %s288 = sadd.s32 %s287, %s285
      %s289 = smul.addr %s288, 8
      %s290 = scalar_lea.vmem %s5, %s289
      %v292 = vld [vmem:[%s0] sm:$0xf]
      %v293 = vld [vmem:[%s269] sm:$0xf]
      %v294 = vld [vmem:[%s269 + $0x4] sm:$0xf]
      %v295 = vld [vmem:[%s269 + $0x8] sm:$0xf]
      %v296 = vld [vmem:[%s1] sm:$0xff]
      %298 = vset.pattern.permute.xlu0 0
      %299 = vperm.xlu0 %298, %v296
      %v300 = vpop.permute.xlu0 %299
      %v305 = vunpack.c.l.b16 %v293
      %v306 = vunpack.c.l.b16 %v294
      %v307 = vunpack.c.l.b16 %v295
      %v308 = vpack.c.b16 %v306, %v305
      %v309 = vpack.c.b16 %v307, %v307
      %vm311 = vcmask 195584
      %v313 = vsel %vm311, %v292, 0
      %vm315 = vcmask 1043456
      %v317 = vsel %vm315, %v309, 0
      %319 = vmatprep.subr.bf16.mxu0 0
      %320 = vmatpush1.bf16.msra.mxu0 %v308
      %321 = vmatprep.subr.bf16.mxu0 0
      %322 = vmatpush1.bf16.msra.mxu0 %v317
      %323 = vmatprep.subr.bf16.mxu0 0
      %324 = vmatpush1.bf16.msra.mxu0 0
      %325 = vmatprep.subr.bf16.mxu0 0
      %326 = vmatpush1.bf16.msra.mxu0 0
      %327 = vmatprep.subr.bf16.mxu0 0
      %328 = vmatpush1.bf16.msra.mxu0 0
      %329 = vmatprep.subr.bf16.mxu0 0
      %330 = vmatpush1.bf16.msra.mxu0 0
      %331 = vmatprep.subr.bf16.mxu0 0
      %332 = vmatpush1.bf16.msra.mxu0 0
      %333 = vmatprep.subr.bf16.mxu0 0
      %334 = vmatpush1.bf16.msra.mxu0 0
      %335 = vmatprep.subr.bf16.mxu0 0
      %336 = vmatpush1.bf16.msra.mxu0 0
      %337 = vmatprep.subr.bf16.mxu0 0
      %338 = vmatpush1.bf16.msra.mxu0 0
      %339 = vmatprep.subr.bf16.mxu0 0
      %340 = vmatpush1.bf16.msra.mxu0 0
      %341 = vmatprep.subr.bf16.mxu0 0
      %342 = vmatpush1.bf16.msra.mxu0 0
      %343 = vmatprep.subr.bf16.mxu0 0
      %344 = vmatpush1.bf16.msra.mxu0 0
      %345 = vmatprep.subr.bf16.mxu0 0
      %346 = vmatpush1.bf16.msra.mxu0 0
      %347 = vmatprep.subr.bf16.mxu0 0
      %348 = vmatpush1.bf16.msra.mxu0 0
      %349 = vmatprep.subr.bf16.mxu0 0
      %350 = vmatpush1.bf16.msra.mxu0 0
      %351 = vmatprep.mubr.bf16.mxu0 0
      %352 = vmatmul.mubr.bf16.gmra.mrb[0].mxu0 %v313
      %v353 = vpop.f32.mrb[0].mxu0
      %v354 = vadd.f32 %v300, %v353
      %v355 = vpop.f32.mrb[0].mxu0
      %v356 = vpop.f32.mrb[0].mxu0
      %v357 = vpop.f32.mrb[0].mxu0
      %358 = vdwg.mxu0
      %vm359 = vcmp.ge.f32.partialorder %v354, 0.0
      %v360 = vmul.f32 %v354, 0.01
      %v361 = vsel %vm359, %v354, %v360
      %v362 = vpack.c.bf16 %v361, %v361
      %vm363 = vcmask 117760
      %364 = vst.msk [vmem:[%s276] sm:$0xf] %vm363, %v362
      %vm365 = vcmask 121856
      %v366 = vsel %vm365, %v361, 0.0
      %367 = vadd.xlane.f32.xlu0 %v366
      %v368 = vpop.xlane.xlu0 %367
      %vm369 = vcmask 7168
      %370 = vst.msk [vmem:[%s283] sm:$0xff] %vm369, %v368
      %v371 = vmul.f32 %v361, %v361
      %v372 = vsel %vm365, %v371, 0.0
      %373 = vadd.xlane.f32.xlu0 %v372
      %v374 = vpop.xlane.xlu0 %373
      %375 = vst.msk [vmem:[%s290] sm:$0xff] %vm369, %v374
      %p376 = scmp.lt.s32.totalorder %s21, 1
      %s377 = scalar_select %p376, %s21, 1
      %p378 = scmp.lt.s32.totalorder %s22, 0
      %s379 = scalar_select %p378, %s22, 0
      %s380 = sadd.s32 %s379, %s377
      %s381 = smul.addr %s380, 4
      %s382 = scalar_lea.vmem %s3, %s381
      %p383 = scmp.lt.s32.totalorder %s21, 1
      %s384 = scalar_select %p383, %s21, 1
      %p385 = scmp.lt.s32.totalorder %s22, 0
      %s386 = scalar_select %p385, %s22, 0
      %s387 = sadd.s32 %s386, %s384
      %s388 = smul.addr %s387, 8
      %s389 = scalar_lea.vmem %s4, %s388
      %p390 = scmp.lt.s32.totalorder %s21, 1
      %s391 = scalar_select %p390, %s21, 1
      %p392 = scmp.lt.s32.totalorder %s22, 0
      %s393 = scalar_select %p392, %s22, 0
      %s394 = sadd.s32 %s393, %s391
      %s395 = smul.addr %s394, 8
      %s396 = scalar_lea.vmem %s5, %s395
      // Predicated region
      $region33: #{cae_3_bn_forward.8} parent=31 // pred_check
        %p397 = pneg %p119
      $region34: #{cae_3_bn_forward.8} parent=31 // pred_check_branch
        %399 = sbr.rel (%p397) target = $region36
      $region35: #{cae_3_bn_forward.8} parent=31 // pred_region
        _
      $region36: #{cae_3_bn_forward.8} parent=31 // pred_fallthru
        _
      // Predicated region
      $region37: #{cae_3_bn_forward.8} parent=31 // pred_check
        %p400 = pneg %p147
      $region38: #{cae_3_bn_forward.8} parent=31 // pred_check_branch
        %402 = sbr.rel (%p400) target = $region40
      $region39: #{cae_3_bn_forward.8} parent=31 // pred_region
        _
      $region40: #{cae_3_bn_forward.8} parent=31 // pred_fallthru
        _
      // Predicated region
      $region41: #{cae_3_bn_forward.8} parent=31 // pred_check
        %p403 = pneg %p175
      $region42: #{cae_3_bn_forward.8} parent=31 // pred_check_branch
        %405 = sbr.rel (%p403) target = $region44
      $region43: #{cae_3_bn_forward.8} parent=31 // pred_region
        _
      $region44: #{cae_3_bn_forward.8} parent=31 // pred_fallthru
        _
    $region32: #{cae_3_bn_forward.8} parent=5 // pred_fallthru
      _
    %p406 = scmp.le.s32.totalorder 2, %s12
    // Predicated region
    $region45: #{cae_3_bn_forward.8} parent=5 // pred_check
      %p407 = pneg %p406
    $region46: #{cae_3_bn_forward.8} parent=5 // pred_check_branch
      %409 = sbr.rel (%p407) target = $region48
    $region47: #{cae_3_bn_forward.8} parent=5 // pred_region
      %s410 = ssub.s32 %s12, 2
      // Predicated region
      $region49: #{cae_3_bn_forward.8} parent=47 // pred_check
        %p411 = pneg %p125
      $region50: #{cae_3_bn_forward.8} parent=47 // pred_check_branch
        %413 = sbr.rel (%p411) target = $region52
      $region51: #{cae_3_bn_forward.8} parent=47 // pred_region
        %p414 = scmp.lt.s32.totalorder %s23, 1
        %s415 = scalar_select %p414, %s23, 1
        %p416 = scmp.lt.s32.totalorder %s24, 0
        %s417 = scalar_select %p416, %s24, 0
        %s418 = sadd.s32 %s417, %s415
        %s419 = smul.addr %s418, 4
        %s420 = scalar_lea.vmem %s3, %s419
      $region52: #{cae_3_bn_forward.8} parent=47 // pred_fallthru
        _
      // Predicated region
      $region53: #{cae_3_bn_forward.8} parent=47 // pred_check
        %p421 = pneg %p153
      $region54: #{cae_3_bn_forward.8} parent=47 // pred_check_branch
        %423 = sbr.rel (%p421) target = $region56
      $region55: #{cae_3_bn_forward.8} parent=47 // pred_region
        %p424 = scmp.lt.s32.totalorder %s23, 1
        %s425 = scalar_select %p424, %s23, 1
        %p426 = scmp.lt.s32.totalorder %s24, 0
        %s427 = scalar_select %p426, %s24, 0
        %s428 = sadd.s32 %s427, %s425
        %s429 = smul.addr %s428, 8
        %s430 = scalar_lea.vmem %s4, %s429
      $region56: #{cae_3_bn_forward.8} parent=47 // pred_fallthru
        _
      // Predicated region
      $region57: #{cae_3_bn_forward.8} parent=47 // pred_check
        %p431 = pneg %p181
      $region58: #{cae_3_bn_forward.8} parent=47 // pred_check_branch
        %433 = sbr.rel (%p431) target = $region60
      $region59: #{cae_3_bn_forward.8} parent=47 // pred_region
        %p434 = scmp.lt.s32.totalorder %s23, 1
        %s435 = scalar_select %p434, %s23, 1
        %p436 = scmp.lt.s32.totalorder %s24, 0
        %s437 = scalar_select %p436, %s24, 0
        %s438 = sadd.s32 %s437, %s435
        %s439 = smul.addr %s438, 8
        %s440 = scalar_lea.vmem %s5, %s439
      $region60: #{cae_3_bn_forward.8} parent=47 // pred_fallthru
        _
    $region48: #{cae_3_bn_forward.8} parent=5 // pred_fallthru
      _
  $region6: #{cae_3_bn_forward.8} parent=0 // loop_footer
    %s16 = sadd.s32 1, %s12
  $region7: #{cae_3_bn_forward.8} parent=0 // loop_footer_branch
    %11 = sbr.rel target = $region3
  $region8: #{cae_3_bn_forward.8} parent=0 // loop_exit
    _

// kernel: cae_3_bn_forward.11
$region0: #{cae_3_bn_forward.11}
  #allocation0 [shape = 'u32[]', space=smem, size = 0x4, offset = 0x4, fixed_abs, tag = 'smem constant byte address 0x4 - core index']
  #allocation1 [shape = 'u32[144,128]{1,0:T(1,128)}', space=vmem, size = 0x12000, scoped, tag = 'internal scratch']
  %s0 = inlined_call_operand.vmem [shape: bf16[2,32,5], index: 0, kind: input, shape index: {}]
  %s1 = inlined_call_operand.vmem [shape: f32[32,1], index: 1, kind: input, shape index: {}]
  %s2 = inlined_call_operand.vmem [shape: f32[32,1], index: 2, kind: input, shape index: {}]
  %s3 = inlined_call_operand.vmem [shape: f32[2,32,5], index: 3, kind: output, shape index: {}]
  %s4 = sld [smem:[#allocation0]]
  $region45: #{cae_3_bn_forward.11} parent=0
    _
  %s6 = ssub.s32 1, %s4
  %s7 = scalar_select 0, %s6, %s4
  loop: start=0, step=1, limit=4
  $region2: #{cae_3_bn_forward.11} parent=0 // loop_pre_header
    _
  $region3: #{cae_3_bn_forward.11} parent=0 // loop_header
    %s9 = sphi 0, %s13
    %p10 = scmp.ge.s32.totalorder %s9, 4
    %s16 = sphi 0, %s28
    %s17 = sphi 0, %s24
    %s18 = sphi 0, %s16
    %s19 = sphi 0, %s17
    %s20 = sphi 0, %s18
    %s21 = sphi 0, %s19
    %s33 = sphi 0, %s35
    %s36 = sphi 0, %s33
    %s37 = sphi 0, %s36
    %s53 = sphi 0, %s37
    %s57 = sphi 0, %s57
    %s59 = sphi 0, %s57
    %s60 = sphi 0, %s59
    %s74 = sphi 0, %s60
    %s78 = sphi 0, %s78
    %s80 = sphi 0, %s78
    %s81 = sphi 0, %s80
    %s95 = sphi 0, %s81
    %s103 = sphi 0, %s105
    %s106 = sphi 0, %s103
    %s107 = sphi 0, %s106
    %s123 = sphi 0, %s107
  $region4: #{cae_3_bn_forward.11} parent=0 // loop_header_branch
    %12 = sbr.rel (%p10) target = $region8
  $region5: #{cae_3_bn_forward.11} parent=0 // loop_body
    %s14 = ssub.s32 %s9, 1
    %s15 = ssub.s32 %s9, 2
    %s22 = sadd.s32 1, %s17
    %p23 = scmp.ge.s32.totalorder %s22, 1
    %s24 = scalar_select %p23, 0, %s22
    %s25 = sadd.s32 1, %s16
    %s26 = scalar_select %p23, %s25, %s16
    %p27 = scmp.ge.s32.totalorder %s26, 2
    %s28 = scalar_select %p27, 0, %s26
    %s29 = ssub.s32 %s16, %s28
    %s30 = ssub.s32 %s17, %s24
    %s31 = sor.u32 %s29, %s30
    %p32 = scmp.eq.s32.totalorder %s31, 0
    %s34 = sadd.s32 %s33, 1
    %s35 = scalar_select %p32, %s33, %s34
    %p38 = pneg %p32
    %p39 = scmp.eq.s32.totalorder %s9, 1
    %p40 = por %p38, %p39
    %p41 = scmp.ne.s32.totalorder %s33, %s36
    %p42 = scmp.eq.s32.totalorder %s9, 0
    %p43 = por %p41, %p42
    %p44 = scmp.ne.s32.totalorder %s33, %s36
    %p45 = scmp.eq.s32.totalorder %s14, 1
    %p46 = por %p44, %p45
    %p47 = scmp.ne.s32.totalorder %s36, %s37
    %p48 = scmp.eq.s32.totalorder %s14, 0
    %p49 = por %p47, %p48
    %p50 = scmp.ne.s32.totalorder %s36, %s37
    %p51 = scmp.eq.s32.totalorder %s15, 1
    %p52 = por %p50, %p51
    %p54 = scmp.ne.s32.totalorder %s37, %s53
    %p55 = scmp.eq.s32.totalorder %s15, 0
    %p56 = por %p54, %p55
    %s58 = sadd.s32 %s57, 1
    %p61 = scmp.eq.s32.totalorder %s9, 1
    %p62 = scmp.ne.s32.totalorder %s57, %s59
    %p63 = scmp.eq.s32.totalorder %s9, 0
    %p64 = por %p62, %p63
    %p65 = scmp.ne.s32.totalorder %s57, %s59
    %p66 = scmp.eq.s32.totalorder %s14, 1
    %p67 = por %p65, %p66
    %p68 = scmp.ne.s32.totalorder %s59, %s60
    %p69 = scmp.eq.s32.totalorder %s14, 0
    %p70 = por %p68, %p69
    %p71 = scmp.ne.s32.totalorder %s59, %s60
    %p72 = scmp.eq.s32.totalorder %s15, 1
    %p73 = por %p71, %p72
    %p75 = scmp.ne.s32.totalorder %s60, %s74
    %p76 = scmp.eq.s32.totalorder %s15, 0
    %p77 = por %p75, %p76
    %s79 = sadd.s32 %s78, 1
    %p82 = scmp.eq.s32.totalorder %s9, 1
    %p83 = scmp.ne.s32.totalorder %s78, %s80
    %p84 = scmp.eq.s32.totalorder %s9, 0
    %p85 = por %p83, %p84
    %p86 = scmp.ne.s32.totalorder %s78, %s80
    %p87 = scmp.eq.s32.totalorder %s14, 1
    %p88 = por %p86, %p87
    %p89 = scmp.ne.s32.totalorder %s80, %s81
    %p90 = scmp.eq.s32.totalorder %s14, 0
    %p91 = por %p89, %p90
    %p92 = scmp.ne.s32.totalorder %s80, %s81
    %p93 = scmp.eq.s32.totalorder %s15, 1
    %p94 = por %p92, %p93
    %p96 = scmp.ne.s32.totalorder %s81, %s95
    %p97 = scmp.eq.s32.totalorder %s15, 0
    %p98 = por %p96, %p97
    %s99 = ssub.s32 %s16, %s28
    %s100 = ssub.s32 %s17, %s24
    %s101 = sor.u32 %s99, %s100
    %p102 = scmp.eq.s32.totalorder %s101, 0
    %s104 = sadd.s32 %s103, 1
    %s105 = scalar_select %p102, %s103, %s104
    %p108 = pneg %p102
    %p109 = scmp.eq.s32.totalorder %s9, 1
    %p110 = por %p108, %p109
    %p111 = scmp.ne.s32.totalorder %s103, %s106
    %p112 = scmp.eq.s32.totalorder %s9, 0
    %p113 = por %p111, %p112
    %p114 = scmp.ne.s32.totalorder %s103, %s106
    %p115 = scmp.eq.s32.totalorder %s14, 1
    %p116 = por %p114, %p115
    %p117 = scmp.ne.s32.totalorder %s106, %s107
    %p118 = scmp.eq.s32.totalorder %s14, 0
    %p119 = por %p117, %p118
    %p120 = scmp.ne.s32.totalorder %s106, %s107
    %p121 = scmp.eq.s32.totalorder %s15, 1
    %p122 = por %p120, %p121
    %p124 = scmp.ne.s32.totalorder %s107, %s123
    %p125 = scmp.eq.s32.totalorder %s15, 0
    %p126 = por %p124, %p125
    %p127 = scmp.le.s32.totalorder 1, %s9
    %p128 = scmp.lt.s32.totalorder %s9, 3
    %p129 = pnand %p127, %p128
    %p130 = pneg %p129
    // Predicated region
    $region9: #{cae_3_bn_forward.11} parent=5 // pred_check
      _
    $region10: #{cae_3_bn_forward.11} parent=5 // pred_check_branch
      %132 = sbr.rel (%p129) target = $region12
    $region11: #{cae_3_bn_forward.11} parent=5 // pred_region
      %s133 = ssub.s32 %s9, 1
      // Predicated region
      $region13: #{cae_3_bn_forward.11} parent=11 // pred_check
        %p134 = pneg %p70
      $region14: #{cae_3_bn_forward.11} parent=11 // pred_check_branch
        %136 = sbr.rel (%p134) target = $region16
      $region15: #{cae_3_bn_forward.11} parent=11 // pred_region
        _
      $region16: #{cae_3_bn_forward.11} parent=11 // pred_fallthru
        _
      // Predicated region
      $region17: #{cae_3_bn_forward.11} parent=11 // pred_check
        %p137 = pneg %p91
      $region18: #{cae_3_bn_forward.11} parent=11 // pred_check_branch
        %139 = sbr.rel (%p137) target = $region20
      $region19: #{cae_3_bn_forward.11} parent=11 // pred_region
        _
      $region20: #{cae_3_bn_forward.11} parent=11 // pred_fallthru
        _
    $region12: #{cae_3_bn_forward.11} parent=5 // pred_fallthru
      _
    %p140 = scmp.lt.s32.totalorder %s9, 2
    // Predicated region
    $region21: #{cae_3_bn_forward.11} parent=5 // pred_check
      %p141 = pneg %p140
    $region22: #{cae_3_bn_forward.11} parent=5 // pred_check_branch
      %143 = sbr.rel (%p141) target = $region24
    $region23: #{cae_3_bn_forward.11} parent=5 // pred_region
      // Predicated region
      $region25: #{cae_3_bn_forward.11} parent=23 // pred_check
        %p144 = pneg %p43
      $region26: #{cae_3_bn_forward.11} parent=23 // pred_check_branch
        %146 = sbr.rel (%p144) target = $region28
      $region27: #{cae_3_bn_forward.11} parent=23 // pred_region
        %p147 = scmp.lt.s32.totalorder %s16, 1
        %s148 = scalar_select %p147, %s16, 1
        %p149 = scmp.lt.s32.totalorder %s17, 0
        %s150 = scalar_select %p149, %s17, 0
        %s151 = smul.addr %s148, 4
        %s152 = sadd.s32 %s150, %s151
        %s153 = smul.addr %s152, 4
        %s154 = scalar_lea.vmem %s0, %s153
      $region28: #{cae_3_bn_forward.11} parent=23 // pred_fallthru
        _
    $region24: #{cae_3_bn_forward.11} parent=5 // pred_fallthru
      _
    %p155 = scmp.le.s32.totalorder 1, %s9
    %p156 = scmp.lt.s32.totalorder %s9, 3
    %p157 = pnand %p155, %p156
    %p158 = pneg %p157
    // Predicated region
    $region29: #{cae_3_bn_forward.11} parent=5 // pred_check
      _
    $region30: #{cae_3_bn_forward.11} parent=5 // pred_check_branch
      %160 = sbr.rel (%p157) target = $region32
    $region31: #{cae_3_bn_forward.11} parent=5 // pred_region
      %s161 = ssub.s32 %s9, 1
      %p162 = scmp.lt.s32.totalorder %s18, 1
      %s163 = scalar_select %p162, %s18, 1
      %p164 = scmp.lt.s32.totalorder %s19, 0
      %s165 = scalar_select %p164, %s19, 0
      %s166 = smul.addr %s163, 4
      %s167 = sadd.s32 %s165, %s166
      %s168 = smul.addr %s167, 4
      %s169 = scalar_lea.vmem %s0, %s168
      %p170 = pneg %p49
      %p171 = pneg %p46
      %p172 = pneg %p70
      %p173 = pneg %p67
      %p174 = pneg %p91
      %p175 = pneg %p88
      %p176 = pneg %p119
      %p177 = pneg %p116
      %p178 = scmp.lt.s32.totalorder %s18, 1
      %s179 = scalar_select %p178, %s18, 1
      %p180 = scmp.lt.s32.totalorder %s19, 0
      %s181 = scalar_select %p180, %s19, 0
      %s182 = smul.addr %s179, 4
      %s183 = sadd.s32 %s181, %s182
      %s184 = smul.addr %s183, 8
      %s185 = scalar_lea.vmem %s3, %s184
      %p186 = scmp.lt.s32.totalorder %s18, 1
      %s187 = scalar_select %p186, %s18, 1
      %p188 = scmp.lt.s32.totalorder %s19, 0
      %s189 = scalar_select %p188, %s19, 0
      %s190 = smul.addr %s187, 4
      %s191 = sadd.s32 %s189, %s190
      %s192 = smul.addr %s191, 4
      %s193 = scalar_lea.vmem %s0, %s192
      %p194 = scmp.lt.s32.totalorder %s18, 1
      %s195 = scalar_select %p194, %s18, 1
      %p196 = scmp.lt.s32.totalorder %s19, 0
      %s197 = scalar_select %p196, %s19, 0
      %s198 = smul.addr %s195, 4
      %s199 = sadd.s32 %s197, %s198
      %s200 = smul.addr %s199, 8
      %s201 = scalar_lea.vmem %s3, %s200
      %v202 = vld [vmem:[%s193] sm:$0xf]
      %v203 = vld [vmem:[%s193 + $0x4] sm:$0xf]
      %v204 = vld [vmem:[%s193 + $0x8] sm:$0xf]
      %v205 = vld [vmem:[%s193 + $0xc] sm:$0xf]
      %v206 = vunpack.c.l.bf16 %v202
      %v207 = vunpack.c.l.bf16 %v203
      %v208 = vunpack.c.l.bf16 %v204
      %v209 = vunpack.c.l.bf16 %v205
      %v210 = vld [vmem:[%s1] sm:$0xff]
      %v211 = vld [vmem:[%s1 + $0x8] sm:$0xff]
      %v212 = vld [vmem:[%s1 + $0x10] sm:$0xff]
      %v213 = vld [vmem:[%s1 + $0x18] sm:$0xff]
      %215 = vset.pattern.permute.xlu0 0
      %216 = vperm.xlu0 %215, %v210
      %v217 = vpop.permute.xlu0 %216
      %220 = vset.pattern.permute.xlu0 0
      %221 = vperm.xlu0 %220, %v211
      %v222 = vpop.permute.xlu0 %221
      %225 = vset.pattern.permute.xlu0 0
      %226 = vperm.xlu0 %225, %v212
      %v227 = vpop.permute.xlu0 %226
      %230 = vset.pattern.permute.xlu0 0
      %231 = vperm.xlu0 %230, %v213
      %v232 = vpop.permute.xlu0 %231
      %v234 = vsub.f32 %v206, %v217
      %v235 = vsub.f32 %v207, %v222
      %v236 = vsub.f32 %v208, %v227
      %v237 = vsub.f32 %v209, %v232
      %v238 = vld [vmem:[%s2] sm:$0xff]
      %v239 = vld [vmem:[%s2 + $0x8] sm:$0xff]
      %v240 = vld [vmem:[%s2 + $0x10] sm:$0xff]
      %v241 = vld [vmem:[%s2 + $0x18] sm:$0xff]
      %243 = vset.pattern.permute.xlu0 0
      %244 = vperm.xlu0 %243, %v238
      %v245 = vpop.permute.xlu0 %244
      %248 = vset.pattern.permute.xlu0 0
      %249 = vperm.xlu0 %248, %v239
      %v250 = vpop.permute.xlu0 %249
      %253 = vset.pattern.permute.xlu0 0
      %254 = vperm.xlu0 %253, %v240
      %v255 = vpop.permute.xlu0 %254
      %258 = vset.pattern.permute.xlu0 0
      %259 = vperm.xlu0 %258, %v241
      %v260 = vpop.permute.xlu0 %259
      %v262 = vmul.f32 %v234, %v245
      %v263 = vmul.f32 %v235, %v250
      %v264 = vmul.f32 %v236, %v255
      %v265 = vmul.f32 %v237, %v260
      %vm266 = vcmask 39936
      %267 = vst.msk [vmem:[%s201] sm:$0xff] %vm266, %v262
      %268 = vst.msk [vmem:[%s201 + $0x8] sm:$0xff] %vm266, %v263
      %269 = vst.msk [vmem:[%s201 + $0x10] sm:$0xff] %vm266, %v264
      %270 = vst.msk [vmem:[%s201 + $0x18] sm:$0xff] %vm266, %v265
      %p271 = scmp.lt.s32.totalorder %s18, 1
      %s272 = scalar_select %p271, %s18, 1
      %p273 = scmp.lt.s32.totalorder %s19, 0
      %s274 = scalar_select %p273, %s19, 0
      %s275 = smul.addr %s272, 4
      %s276 = sadd.s32 %s274, %s275
      %s277 = smul.addr %s276, 8
      %s278 = scalar_lea.vmem %s3, %s277
      // Predicated region
      $region33: #{cae_3_bn_forward.11} parent=31 // pred_check
        %p279 = pneg %p116
      $region34: #{cae_3_bn_forward.11} parent=31 // pred_check_branch
        %281 = sbr.rel (%p279) target = $region36
      $region35: #{cae_3_bn_forward.11} parent=31 // pred_region
        _
      $region36: #{cae_3_bn_forward.11} parent=31 // pred_fallthru
        _
    $region32: #{cae_3_bn_forward.11} parent=5 // pred_fallthru
      _
    %p282 = scmp.le.s32.totalorder 2, %s9
    // Predicated region
    $region37: #{cae_3_bn_forward.11} parent=5 // pred_check
      %p283 = pneg %p282
    $region38: #{cae_3_bn_forward.11} parent=5 // pred_check_branch
      %285 = sbr.rel (%p283) target = $region40
    $region39: #{cae_3_bn_forward.11} parent=5 // pred_region
      %s286 = ssub.s32 %s9, 2
      // Predicated region
      $region41: #{cae_3_bn_forward.11} parent=39 // pred_check
        %p287 = pneg %p122
      $region42: #{cae_3_bn_forward.11} parent=39 // pred_check_branch
        %289 = sbr.rel (%p287) target = $region44
      $region43: #{cae_3_bn_forward.11} parent=39 // pred_region
        %p290 = scmp.lt.s32.totalorder %s20, 1
        %s291 = scalar_select %p290, %s20, 1
        %p292 = scmp.lt.s32.totalorder %s21, 0
        %s293 = scalar_select %p292, %s21, 0
        %s294 = smul.addr %s291, 4
        %s295 = sadd.s32 %s293, %s294
        %s296 = smul.addr %s295, 8
        %s297 = scalar_lea.vmem %s3, %s296
      $region44: #{cae_3_bn_forward.11} parent=39 // pred_fallthru
        _
    $region40: #{cae_3_bn_forward.11} parent=5 // pred_fallthru
      _
  $region6: #{cae_3_bn_forward.11} parent=0 // loop_footer
    %s13 = sadd.s32 1, %s9
  $region7: #{cae_3_bn_forward.11} parent=0 // loop_footer_branch
    %8 = sbr.rel target = $region3
  $region8: #{cae_3_bn_forward.11} parent=0 // loop_exit
    _

// kernel: cae_3_bn_forward.9
$region0: #{cae_3_bn_forward.9}
  #allocation0 [shape = 'u32[]', space=smem, size = 0x4, offset = 0x4, fixed_abs, tag = 'smem constant byte address 0x4 - core index']
  #allocation1 [shape = 'u32[144,128]{1,0:T(1,128)}', space=vmem, size = 0x12000, scoped, tag = 'internal scratch']
  %s0 = inlined_call_operand.vmem [shape: bf16[16,24], index: 0, kind: input, shape index: {}]
  %s1 = inlined_call_operand.vmem [shape: f32[16,1], index: 1, kind: input, shape index: {}]
  %s2 = inlined_call_operand.vmem [shape: bf16[2,24,7], index: 2, kind: input, shape index: {}]
  %s3 = inlined_call_operand.vmem [shape: bf16[2,16,7], index: 3, kind: output, shape index: {0}]
  %s4 = inlined_call_operand.vmem [shape: f32[2,1,16,1], index: 4, kind: output, shape index: {1}]
  %s5 = inlined_call_operand.vmem [shape: f32[2,1,16,1], index: 5, kind: output, shape index: {2}]
  %6 = xla_tuple %s3, %s4, %s5
  %s7 = sld [smem:[#allocation0]]
  $region61: #{cae_3_bn_forward.9} parent=0
    _
  %s9 = ssub.s32 1, %s7
  %s10 = scalar_select 0, %s9, %s7
  loop: start=0, step=1, limit=4
  $region2: #{cae_3_bn_forward.9} parent=0 // loop_pre_header
    _
  $region3: #{cae_3_bn_forward.9} parent=0 // loop_header
    %s12 = sphi 0, %s16
    %p13 = scmp.ge.s32.totalorder %s12, 4
    %s19 = sphi 0, %s31
    %s20 = sphi 0, %s27
    %s21 = sphi 0, %s19
    %s22 = sphi 0, %s20
    %s23 = sphi 0, %s21
    %s24 = sphi 0, %s22
    %s32 = sphi 0, %s32
    %s34 = sphi 0, %s32
    %s35 = sphi 0, %s34
    %s49 = sphi 0, %s35
    %s53 = sphi 0, %s53
    %s55 = sphi 0, %s53
    %s56 = sphi 0, %s55
    %s70 = sphi 0, %s56
    %s78 = sphi 0, %s80
    %s81 = sphi 0, %s78
    %s82 = sphi 0, %s81
    %s98 = sphi 0, %s82
    %s106 = sphi 0, %s108
    %s109 = sphi 0, %s106
    %s110 = sphi 0, %s109
    %s126 = sphi 0, %s110
    %s134 = sphi 0, %s136
    %s137 = sphi 0, %s134
    %s138 = sphi 0, %s137
    %s154 = sphi 0, %s138
    %s162 = sphi 0, %s164
    %s165 = sphi 0, %s162
    %s166 = sphi 0, %s165
    %s182 = sphi 0, %s166
  $region4: #{cae_3_bn_forward.9} parent=0 // loop_header_branch
    %15 = sbr.rel (%p13) target = $region8
  $region5: #{cae_3_bn_forward.9} parent=0 // loop_body
    %s17 = ssub.s32 %s12, 1
    %s18 = ssub.s32 %s12, 2
    %s25 = sadd.s32 1, %s20
    %p26 = scmp.ge.s32.totalorder %s25, 1
    %s27 = scalar_select %p26, 0, %s25
    %s28 = sadd.s32 1, %s19
    %s29 = scalar_select %p26, %s28, %s19
    %p30 = scmp.ge.s32.totalorder %s29, 2
    %s31 = scalar_select %p30, 0, %s29
    %s33 = sadd.s32 %s32, 1
    %p36 = scmp.eq.s32.totalorder %s12, 1
    %p37 = scmp.ne.s32.totalorder %s32, %s34
    %p38 = scmp.eq.s32.totalorder %s12, 0
    %p39 = por %p37, %p38
    %p40 = scmp.ne.s32.totalorder %s32, %s34
    %p41 = scmp.eq.s32.totalorder %s17, 1
    %p42 = por %p40, %p41
    %p43 = scmp.ne.s32.totalorder %s34, %s35
    %p44 = scmp.eq.s32.totalorder %s17, 0
    %p45 = por %p43, %p44
    %p46 = scmp.ne.s32.totalorder %s34, %s35
    %p47 = scmp.eq.s32.totalorder %s18, 1
    %p48 = por %p46, %p47
    %p50 = scmp.ne.s32.totalorder %s35, %s49
    %p51 = scmp.eq.s32.totalorder %s18, 0
    %p52 = por %p50, %p51
    %s54 = sadd.s32 %s53, 1
    %p57 = scmp.eq.s32.totalorder %s12, 1
    %p58 = scmp.ne.s32.totalorder %s53, %s55
    %p59 = scmp.eq.s32.totalorder %s12, 0
    %p60 = por %p58, %p59
    %p61 = scmp.ne.s32.totalorder %s53, %s55
    %p62 = scmp.eq.s32.totalorder %s17, 1
    %p63 = por %p61, %p62
    %p64 = scmp.ne.s32.totalorder %s55, %s56
    %p65 = scmp.eq.s32.totalorder %s17, 0
    %p66 = por %p64, %p65
    %p67 = scmp.ne.s32.totalorder %s55, %s56
    %p68 = scmp.eq.s32.totalorder %s18, 1
    %p69 = por %p67, %p68
    %p71 = scmp.ne.s32.totalorder %s56, %s70
    %p72 = scmp.eq.s32.totalorder %s18, 0
    %p73 = por %p71, %p72
    %s74 = ssub.s32 %s19, %s31
    %s75 = ssub.s32 %s20, %s27
    %s76 = sor.u32 %s74, %s75
    %p77 = scmp.eq.s32.totalorder %s76, 0
    %s79 = sadd.s32 %s78, 1
    %s80 = scalar_select %p77, %s78, %s79
    %p83 = pneg %p77
    %p84 = scmp.eq.s32.totalorder %s12, 1
    %p85 = por %p83, %p84
    %p86 = scmp.ne.s32.totalorder %s78, %s81
    %p87 = scmp.eq.s32.totalorder %s12, 0
    %p88 = por %p86, %p87
    %p89 = scmp.ne.s32.totalorder %s78, %s81
    %p90 = scmp.eq.s32.totalorder %s17, 1
    %p91 = por %p89, %p90
    %p92 = scmp.ne.s32.totalorder %s81, %s82
    %p93 = scmp.eq.s32.totalorder %s17, 0
    %p94 = por %p92, %p93
    %p95 = scmp.ne.s32.totalorder %s81, %s82
    %p96 = scmp.eq.s32.totalorder %s18, 1
    %p97 = por %p95, %p96
    %p99 = scmp.ne.s32.totalorder %s82, %s98
    %p100 = scmp.eq.s32.totalorder %s18, 0
    %p101 = por %p99, %p100
    %s102 = ssub.s32 %s19, %s31
    %s103 = ssub.s32 %s20, %s27
    %s104 = sor.u32 %s102, %s103
    %p105 = scmp.eq.s32.totalorder %s104, 0
    %s107 = sadd.s32 %s106, 1
    %s108 = scalar_select %p105, %s106, %s107
    %p111 = pneg %p105
    %p112 = scmp.eq.s32.totalorder %s12, 1
    %p113 = por %p111, %p112
    %p114 = scmp.ne.s32.totalorder %s106, %s109
    %p115 = scmp.eq.s32.totalorder %s12, 0
    %p116 = por %p114, %p115
    %p117 = scmp.ne.s32.totalorder %s106, %s109
    %p118 = scmp.eq.s32.totalorder %s17, 1
    %p119 = por %p117, %p118
    %p120 = scmp.ne.s32.totalorder %s109, %s110
    %p121 = scmp.eq.s32.totalorder %s17, 0
    %p122 = por %p120, %p121
    %p123 = scmp.ne.s32.totalorder %s109, %s110
    %p124 = scmp.eq.s32.totalorder %s18, 1
    %p125 = por %p123, %p124
    %p127 = scmp.ne.s32.totalorder %s110, %s126
    %p128 = scmp.eq.s32.totalorder %s18, 0
    %p129 = por %p127, %p128
    %s130 = ssub.s32 %s19, %s31
    %s131 = ssub.s32 %s20, %s27
    %s132 = sor.u32 %s130, %s131
    %p133 = scmp.eq.s32.totalorder %s132, 0
    %s135 = sadd.s32 %s134, 1
    %s136 = scalar_select %p133, %s134, %s135
    %p139 = pneg %p133
    %p140 = scmp.eq.s32.totalorder %s12, 1
    %p141 = por %p139, %p140
    %p142 = scmp.ne.s32.totalorder %s134, %s137
    %p143 = scmp.eq.s32.totalorder %s12, 0
    %p144 = por %p142, %p143
    %p145 = scmp.ne.s32.totalorder %s134, %s137
    %p146 = scmp.eq.s32.totalorder %s17, 1
    %p147 = por %p145, %p146
    %p148 = scmp.ne.s32.totalorder %s137, %s138
    %p149 = scmp.eq.s32.totalorder %s17, 0
    %p150 = por %p148, %p149
    %p151 = scmp.ne.s32.totalorder %s137, %s138
    %p152 = scmp.eq.s32.totalorder %s18, 1
    %p153 = por %p151, %p152
    %p155 = scmp.ne.s32.totalorder %s138, %s154
    %p156 = scmp.eq.s32.totalorder %s18, 0
    %p157 = por %p155, %p156
    %s158 = ssub.s32 %s19, %s31
    %s159 = ssub.s32 %s20, %s27
    %s160 = sor.u32 %s158, %s159
    %p161 = scmp.eq.s32.totalorder %s160, 0
    %s163 = sadd.s32 %s162, 1
    %s164 = scalar_select %p161, %s162, %s163
    %p167 = pneg %p161
    %p168 = scmp.eq.s32.totalorder %s12, 1
    %p169 = por %p167, %p168
    %p170 = scmp.ne.s32.totalorder %s162, %s165
    %p171 = scmp.eq.s32.totalorder %s12, 0
    %p172 = por %p170, %p171
    %p173 = scmp.ne.s32.totalorder %s162, %s165
    %p174 = scmp.eq.s32.totalorder %s17, 1
    %p175 = por %p173, %p174
    %p176 = scmp.ne.s32.totalorder %s165, %s166
    %p177 = scmp.eq.s32.totalorder %s17, 0
    %p178 = por %p176, %p177
    %p179 = scmp.ne.s32.totalorder %s165, %s166
    %p180 = scmp.eq.s32.totalorder %s18, 1
    %p181 = por %p179, %p180
    %p183 = scmp.ne.s32.totalorder %s166, %s182
    %p184 = scmp.eq.s32.totalorder %s18, 0
    %p185 = por %p183, %p184
    %p186 = scmp.le.s32.totalorder 1, %s12
    %p187 = scmp.lt.s32.totalorder %s12, 3
    %p188 = pnand %p186, %p187
    %p189 = pneg %p188
    // Predicated region
    $region9: #{cae_3_bn_forward.9} parent=5 // pred_check
      _
    $region10: #{cae_3_bn_forward.9} parent=5 // pred_check_branch
      %191 = sbr.rel (%p188) target = $region12
    $region11: #{cae_3_bn_forward.9} parent=5 // pred_region
      %s192 = ssub.s32 %s12, 1
      // Predicated region
      $region13: #{cae_3_bn_forward.9} parent=11 // pred_check
        %p193 = pneg %p45
      $region14: #{cae_3_bn_forward.9} parent=11 // pred_check_branch
        %195 = sbr.rel (%p193) target = $region16
      $region15: #{cae_3_bn_forward.9} parent=11 // pred_region
        _
      $region16: #{cae_3_bn_forward.9} parent=11 // pred_fallthru
        _
      // Predicated region
      $region17: #{cae_3_bn_forward.9} parent=11 // pred_check
        %p196 = pneg %p66
      $region18: #{cae_3_bn_forward.9} parent=11 // pred_check_branch
        %198 = sbr.rel (%p196) target = $region20
      $region19: #{cae_3_bn_forward.9} parent=11 // pred_region
        _
      $region20: #{cae_3_bn_forward.9} parent=11 // pred_fallthru
        _
    $region12: #{cae_3_bn_forward.9} parent=5 // pred_fallthru
      _
    %p199 = scmp.lt.s32.totalorder %s12, 2
    // Predicated region
    $region21: #{cae_3_bn_forward.9} parent=5 // pred_check
      %p200 = pneg %p199
    $region22: #{cae_3_bn_forward.9} parent=5 // pred_check_branch
      %202 = sbr.rel (%p200) target = $region24
    $region23: #{cae_3_bn_forward.9} parent=5 // pred_region
      // Predicated region
      $region25: #{cae_3_bn_forward.9} parent=23 // pred_check
        %p203 = pneg %p88
      $region26: #{cae_3_bn_forward.9} parent=23 // pred_check_branch
        %205 = sbr.rel (%p203) target = $region28
      $region27: #{cae_3_bn_forward.9} parent=23 // pred_region
        %p206 = scmp.lt.s32.totalorder %s19, 1
        %s207 = scalar_select %p206, %s19, 1
        %p208 = scmp.lt.s32.totalorder %s20, 0
        %s209 = scalar_select %p208, %s20, 0
        %s210 = smul.addr %s207, 3
        %s211 = sadd.s32 %s209, %s210
        %s212 = smul.addr %s211, 4
        %s213 = scalar_lea.vmem %s2, %s212
      $region28: #{cae_3_bn_forward.9} parent=23 // pred_fallthru
        _
    $region24: #{cae_3_bn_forward.9} parent=5 // pred_fallthru
      _
    %p214 = scmp.le.s32.totalorder 1, %s12
    %p215 = scmp.lt.s32.totalorder %s12, 3
    %p216 = pnand %p214, %p215
    %p217 = pneg %p216
    // Predicated region
    $region29: #{cae_3_bn_forward.9} parent=5 // pred_check
      _
    $region30: #{cae_3_bn_forward.9} parent=5 // pred_check_branch
      %219 = sbr.rel (%p216) target = $region32
    $region31: #{cae_3_bn_forward.9} parent=5 // pred_region
      %s220 = ssub.s32 %s12, 1
      %p221 = pneg %p45
      %p222 = pneg %p42
      %p223 = pneg %p66
      %p224 = pneg %p63
      %p225 = scmp.lt.s32.totalorder %s21, 1
      %s226 = scalar_select %p225, %s21, 1
      %p227 = scmp.lt.s32.totalorder %s22, 0
      %s228 = scalar_select %p227, %s22, 0
      %s229 = smul.addr %s226, 3
      %s230 = sadd.s32 %s228, %s229
      %s231 = smul.addr %s230, 4
      %s232 = scalar_lea.vmem %s2, %s231
      %p233 = pneg %p94
      %p234 = pneg %p91
      %p235 = pneg %p122
      %p236 = pneg %p119
      %p237 = scmp.lt.s32.totalorder %s21, 1
      %s238 = scalar_select %p237, %s21, 1
      %p239 = scmp.lt.s32.totalorder %s22, 0
      %s240 = scalar_select %p239, %s22, 0
      %s241 = smul.addr %s238, 2
      %s242 = sadd.s32 %s240, %s241
      %s243 = smul.addr %s242, 4
      %s244 = scalar_lea.vmem %s3, %s243
      %p245 = pneg %p150
      %p246 = pneg %p147
      %p247 = scmp.lt.s32.totalorder %s21, 1
      %s248 = scalar_select %p247, %s21, 1
      %p249 = scmp.lt.s32.totalorder %s22, 0
      %s250 = scalar_select %p249, %s22, 0
      %s251 = smul.addr %s250, 2
      %s252 = smul.addr %s248, 2
      %s253 = sadd.s32 %s251, %s252
      %s254 = smul.addr %s253, 8
      %s255 = scalar_lea.vmem %s4, %s254
      %p256 = pneg %p178
      %p257 = pneg %p175
      %p258 = scmp.lt.s32.totalorder %s21, 1
      %s259 = scalar_select %p258, %s21, 1
      %p260 = scmp.lt.s32.totalorder %s22, 0
      %s261 = scalar_select %p260, %s22, 0
      %s262 = smul.addr %s261, 2
      %s263 = smul.addr %s259, 2
      %s264 = sadd.s32 %s262, %s263
      %s265 = smul.addr %s264, 8
      %s266 = scalar_lea.vmem %s5, %s265
      %p267 = scmp.lt.s32.totalorder %s21, 1
      %s268 = scalar_select %p267, %s21, 1
      %p269 = scmp.lt.s32.totalorder %s22, 0
      %s270 = scalar_select %p269, %s22, 0
      %s271 = smul.addr %s268, 3
      %s272 = sadd.s32 %s270, %s271
      %s273 = smul.addr %s272, 4
      %s274 = scalar_lea.vmem %s2, %s273
      %p275 = scmp.lt.s32.totalorder %s21, 1
      %s276 = scalar_select %p275, %s21, 1
      %p277 = scmp.lt.s32.totalorder %s22, 0
      %s278 = scalar_select %p277, %s22, 0
      %s279 = smul.addr %s276, 2
      %s280 = sadd.s32 %s278, %s279
      %s281 = smul.addr %s280, 4
      %s282 = scalar_lea.vmem %s3, %s281
      %p283 = scmp.lt.s32.totalorder %s21, 1
      %s284 = scalar_select %p283, %s21, 1
      %p285 = scmp.lt.s32.totalorder %s22, 0
      %s286 = scalar_select %p285, %s22, 0
      %s287 = smul.addr %s286, 2
      %s288 = smul.addr %s284, 2
      %s289 = sadd.s32 %s287, %s288
      %s290 = smul.addr %s289, 8
      %s291 = scalar_lea.vmem %s4, %s290
      %p292 = scmp.lt.s32.totalorder %s21, 1
      %s293 = scalar_select %p292, %s21, 1
      %p294 = scmp.lt.s32.totalorder %s22, 0
      %s295 = scalar_select %p294, %s22, 0
      %s296 = smul.addr %s295, 2
      %s297 = smul.addr %s293, 2
      %s298 = sadd.s32 %s296, %s297
      %s299 = smul.addr %s298, 8
      %s300 = scalar_lea.vmem %s5, %s299
      %v302 = vld [vmem:[%s0] sm:$0xf]
      %v303 = vld [vmem:[%s0 + $0x4] sm:$0xf]
      %v304 = vld [vmem:[%s274] sm:$0xf]
      %v305 = vld [vmem:[%s274 + $0x4] sm:$0xf]
      %v306 = vld [vmem:[%s274 + $0x8] sm:$0xf]
      %v307 = vld [vmem:[%s1] sm:$0xff]
      %v308 = vld [vmem:[%s1 + $0x8] sm:$0xff]
      %310 = vset.pattern.permute.xlu0 0
      %311 = vperm.xlu0 %310, %v307
      %v312 = vpop.permute.xlu0 %311
      %315 = vset.pattern.permute.xlu0 0
      %316 = vperm.xlu0 %315, %v308
      %v317 = vpop.permute.xlu0 %316
      %v321 = vunpack.c.l.b16 %v302
      %v322 = vunpack.c.l.b16 %v303
      %v323 = vpack.c.b16 %v322, %v321
      %v327 = vunpack.c.l.b16 %v304
      %v328 = vunpack.c.l.b16 %v305
      %v329 = vunpack.c.l.b16 %v306
      %v330 = vpack.c.b16 %v328, %v327
      %v331 = vpack.c.b16 %v329, %v329
      %vm333 = vcmask 195584
      %v335 = vsel %vm333, %v323, 0
      %vm337 = vcmask 1043456
      %v339 = vsel %vm337, %v331, 0
      %341 = vmatprep.subr.bf16.mxu0 0
      %342 = vmatpush1.bf16.msra.mxu0 %v330
      %343 = vmatprep.subr.bf16.mxu0 0
      %344 = vmatpush1.bf16.msra.mxu0 %v339
      %345 = vmatprep.subr.bf16.mxu0 0
      %346 = vmatpush1.bf16.msra.mxu0 0
      %347 = vmatprep.subr.bf16.mxu0 0
      %348 = vmatpush1.bf16.msra.mxu0 0
      %349 = vmatprep.subr.bf16.mxu0 0
      %350 = vmatpush1.bf16.msra.mxu0 0
      %351 = vmatprep.subr.bf16.mxu0 0
      %352 = vmatpush1.bf16.msra.mxu0 0
      %353 = vmatprep.subr.bf16.mxu0 0
      %354 = vmatpush1.bf16.msra.mxu0 0
      %355 = vmatprep.subr.bf16.mxu0 0
      %356 = vmatpush1.bf16.msra.mxu0 0
      %357 = vmatprep.subr.bf16.mxu0 0
      %358 = vmatpush1.bf16.msra.mxu0 0
      %359 = vmatprep.subr.bf16.mxu0 0
      %360 = vmatpush1.bf16.msra.mxu0 0
      %361 = vmatprep.subr.bf16.mxu0 0
      %362 = vmatpush1.bf16.msra.mxu0 0
      %363 = vmatprep.subr.bf16.mxu0 0
      %364 = vmatpush1.bf16.msra.mxu0 0
      %365 = vmatprep.subr.bf16.mxu0 0
      %366 = vmatpush1.bf16.msra.mxu0 0
      %367 = vmatprep.subr.bf16.mxu0 0
      %368 = vmatpush1.bf16.msra.mxu0 0
      %369 = vmatprep.subr.bf16.mxu0 0
      %370 = vmatpush1.bf16.msra.mxu0 0
      %371 = vmatprep.subr.bf16.mxu0 0
      %372 = vmatpush1.bf16.msra.mxu0 0
      %373 = vmatprep.mubr.bf16.mxu0 0
      %374 = vmatmul.mubr.bf16.gmra.mrb[0].mxu0 %v335
      %v375 = vpop.f32.mrb[0].mxu0
      %v376 = vadd.f32 %v312, %v375
      %v377 = vpop.f32.mrb[0].mxu0
      %v378 = vpop.f32.mrb[0].mxu0
      %v379 = vadd.f32 %v317, %v378
      %v380 = vpop.f32.mrb[0].mxu0
      %381 = vdwg.mxu0
      %vm382 = vcmp.ge.f32.partialorder %v376, 0.0
      %vm383 = vcmp.ge.f32.partialorder %v379, 0.0
      %v384 = vmul.f32 %v376, 0.01
      %v385 = vmul.f32 %v379, 0.01
      %v386 = vsel %vm382, %v376, %v384
      %v387 = vsel %vm383, %v379, %v385
      %v388 = vpack.c.bf16 %v387, %v386
      %v390 = vunpack.c.l.b16 %v388
      %v391 = vunpack.c.h.b16 %v388
      %v392 = vpack.c.b16 %v390, %v390
      %v393 = vpack.c.b16 %v391, %v391
      %vm396 = vcmask 52224
      %397 = vst.msk [vmem:[%s282] sm:$0xf] %vm396, %v392
      %398 = vst.msk [vmem:[%s282 + $0x4] sm:$0xf] %vm396, %v393
      %vm399 = vcmask 56320
      %v400 = vsel %vm399, %v386, 0.0
      %401 = vadd.xlane.f32.xlu0 %v400
      %v402 = vpop.xlane.xlu0 %401
      %v403 = vsel %vm399, %v387, 0.0
      %404 = vadd.xlane.f32.xlu0 %v403
      %v405 = vpop.xlane.xlu0 %404
      %vm406 = vcmask 7168
      %407 = vst.msk [vmem:[%s291] sm:$0xff] %vm406, %v402
      %408 = vst.msk [vmem:[%s291 + $0x8] sm:$0xff] %vm406, %v405
      %v409 = vmul.f32 %v386, %v386
      %v410 = vmul.f32 %v387, %v387
      %v411 = vsel %vm399, %v409, 0.0
      %412 = vadd.xlane.f32.xlu0 %v411
      %v413 = vpop.xlane.xlu0 %412
      %v414 = vsel %vm399, %v410, 0.0
      %415 = vadd.xlane.f32.xlu0 %v414
      %v416 = vpop.xlane.xlu0 %415
      %417 = vst.msk [vmem:[%s300] sm:$0xff] %vm406, %v413
      %418 = vst.msk [vmem:[%s300 + $0x8] sm:$0xff] %vm406, %v416
      %p419 = scmp.lt.s32.totalorder %s21, 1
      %s420 = scalar_select %p419, %s21, 1
      %p421 = scmp.lt.s32.totalorder %s22, 0
      %s422 = scalar_select %p421, %s22, 0
      %s423 = smul.addr %s420, 2
      %s424 = sadd.s32 %s422, %s423
      %s425 = smul.addr %s424, 4
      %s426 = scalar_lea.vmem %s3, %s425
      %p427 = scmp.lt.s32.totalorder %s21, 1
      %s428 = scalar_select %p427, %s21, 1
      %p429 = scmp.lt.s32.totalorder %s22, 0
      %s430 = scalar_select %p429, %s22, 0
      %s431 = smul.addr %s430, 2
      %s432 = smul.addr %s428, 2
      %s433 = sadd.s32 %s431, %s432
      %s434 = smul.addr %s433, 8
      %s435 = scalar_lea.vmem %s4, %s434
      %p436 = scmp.lt.s32.totalorder %s21, 1
      %s437 = scalar_select %p436, %s21, 1
      %p438 = scmp.lt.s32.totalorder %s22, 0
      %s439 = scalar_select %p438, %s22, 0
      %s440 = smul.addr %s439, 2
      %s441 = smul.addr %s437, 2
      %s442 = sadd.s32 %s440, %s441
      %s443 = smul.addr %s442, 8
      %s444 = scalar_lea.vmem %s5, %s443
      // Predicated region
      $region33: #{cae_3_bn_forward.9} parent=31 // pred_check
        %p445 = pneg %p119
      $region34: #{cae_3_bn_forward.9} parent=31 // pred_check_branch
        %447 = sbr.rel (%p445) target = $region36
      $region35: #{cae_3_bn_forward.9} parent=31 // pred_region
        _
      $region36: #{cae_3_bn_forward.9} parent=31 // pred_fallthru
        _
      // Predicated region
      $region37: #{cae_3_bn_forward.9} parent=31 // pred_check
        %p448 = pneg %p147
      $region38: #{cae_3_bn_forward.9} parent=31 // pred_check_branch
        %450 = sbr.rel (%p448) target = $region40
      $region39: #{cae_3_bn_forward.9} parent=31 // pred_region
        _
      $region40: #{cae_3_bn_forward.9} parent=31 // pred_fallthru
        _
      // Predicated region
      $region41: #{cae_3_bn_forward.9} parent=31 // pred_check
        %p451 = pneg %p175
      $region42: #{cae_3_bn_forward.9} parent=31 // pred_check_branch
        %453 = sbr.rel (%p451) target = $region44
      $region43: #{cae_3_bn_forward.9} parent=31 // pred_region
        _
      $region44: #{cae_3_bn_forward.9} parent=31 // pred_fallthru
        _
    $region32: #{cae_3_bn_forward.9} parent=5 // pred_fallthru
      _
    %p454 = scmp.le.s32.totalorder 2, %s12
    // Predicated region
    $region45: #{cae_3_bn_forward.9} parent=5 // pred_check
      %p455 = pneg %p454
    $region46: #{cae_3_bn_forward.9} parent=5 // pred_check_branch
      %457 = sbr.rel (%p455) target = $region48
    $region47: #{cae_3_bn_forward.9} parent=5 // pred_region
      %s458 = ssub.s32 %s12, 2
      // Predicated region
      $region49: #{cae_3_bn_forward.9} parent=47 // pred_check
        %p459 = pneg %p125
      $region50: #{cae_3_bn_forward.9} parent=47 // pred_check_branch
        %461 = sbr.rel (%p459) target = $region52
      $region51: #{cae_3_bn_forward.9} parent=47 // pred_region
        %p462 = scmp.lt.s32.totalorder %s23, 1
        %s463 = scalar_select %p462, %s23, 1
        %p464 = scmp.lt.s32.totalorder %s24, 0
        %s465 = scalar_select %p464, %s24, 0
        %s466 = smul.addr %s463, 2
        %s467 = sadd.s32 %s465, %s466
        %s468 = smul.addr %s467, 4
        %s469 = scalar_lea.vmem %s3, %s468
      $region52: #{cae_3_bn_forward.9} parent=47 // pred_fallthru
        _
      // Predicated region
      $region53: #{cae_3_bn_forward.9} parent=47 // pred_check
        %p470 = pneg %p153
      $region54: #{cae_3_bn_forward.9} parent=47 // pred_check_branch
        %472 = sbr.rel (%p470) target = $region56
      $region55: #{cae_3_bn_forward.9} parent=47 // pred_region
        %p473 = scmp.lt.s32.totalorder %s23, 1
        %s474 = scalar_select %p473, %s23, 1
        %p475 = scmp.lt.s32.totalorder %s24, 0
        %s476 = scalar_select %p475, %s24, 0
        %s477 = smul.addr %s476, 2
        %s478 = smul.addr %s474, 2
        %s479 = sadd.s32 %s477, %s478
        %s480 = smul.addr %s479, 8
        %s481 = scalar_lea.vmem %s4, %s480
      $region56: #{cae_3_bn_forward.9} parent=47 // pred_fallthru
        _
      // Predicated region
      $region57: #{cae_3_bn_forward.9} parent=47 // pred_check
        %p482 = pneg %p181
      $region58: #{cae_3_bn_forward.9} parent=47 // pred_check_branch
        %484 = sbr.rel (%p482) target = $region60
      $region59: #{cae_3_bn_forward.9} parent=47 // pred_region
        %p485 = scmp.lt.s32.totalorder %s23, 1
        %s486 = scalar_select %p485, %s23, 1
        %p487 = scmp.lt.s32.totalorder %s24, 0
        %s488 = scalar_select %p487, %s24, 0
        %s489 = smul.addr %s488, 2
        %s490 = smul.addr %s486, 2
        %s491 = sadd.s32 %s489, %s490
        %s492 = smul.addr %s491, 8
        %s493 = scalar_lea.vmem %s5, %s492
      $region60: #{cae_3_bn_forward.9} parent=47 // pred_fallthru
        _
    $region48: #{cae_3_bn_forward.9} parent=5 // pred_fallthru
      _
  $region6: #{cae_3_bn_forward.9} parent=0 // loop_footer
    %s16 = sadd.s32 1, %s12
  $region7: #{cae_3_bn_forward.9} parent=0 // loop_footer_branch
    %11 = sbr.rel target = $region3
  $region8: #{cae_3_bn_forward.9} parent=0 // loop_exit
    _

// kernel: cae_3_bn_forward.10
$region0: #{cae_3_bn_forward.10}
  #allocation0 [shape = 'u32[]', space=smem, size = 0x4, offset = 0x4, fixed_abs, tag = 'smem constant byte address 0x4 - core index']
  #allocation1 [shape = 'u32[144,128]{1,0:T(1,128)}', space=vmem, size = 0x12000, scoped, tag = 'internal scratch']
  %s0 = inlined_call_operand.vmem [shape: bf16[32,48], index: 0, kind: input, shape index: {}]
  %s1 = inlined_call_operand.vmem [shape: f32[32,1], index: 1, kind: input, shape index: {}]
  %s2 = inlined_call_operand.vmem [shape: bf16[2,48,5], index: 2, kind: input, shape index: {}]
  %s3 = inlined_call_operand.vmem [shape: bf16[2,32,5], index: 3, kind: output, shape index: {0}]
  %s4 = inlined_call_operand.vmem [shape: f32[2,1,32,1], index: 4, kind: output, shape index: {1}]
  %s5 = inlined_call_operand.vmem [shape: f32[2,1,32,1], index: 5, kind: output, shape index: {2}]
  %6 = xla_tuple %s3, %s4, %s5
  %s7 = sld [smem:[#allocation0]]
  $region61: #{cae_3_bn_forward.10} parent=0
    _
  %s9 = ssub.s32 1, %s7
  %s10 = scalar_select 0, %s9, %s7
  loop: start=0, step=1, limit=4
  $region2: #{cae_3_bn_forward.10} parent=0 // loop_pre_header
    _
  $region3: #{cae_3_bn_forward.10} parent=0 // loop_header
    %s12 = sphi 0, %s16
    %p13 = scmp.ge.s32.totalorder %s12, 4
    %s19 = sphi 0, %s31
    %s20 = sphi 0, %s27
    %s21 = sphi 0, %s19
    %s22 = sphi 0, %s20
    %s23 = sphi 0, %s21
    %s24 = sphi 0, %s22
    %s32 = sphi 0, %s32
    %s34 = sphi 0, %s32
    %s35 = sphi 0, %s34
    %s49 = sphi 0, %s35
    %s53 = sphi 0, %s53
    %s55 = sphi 0, %s53
    %s56 = sphi 0, %s55
    %s70 = sphi 0, %s56
    %s78 = sphi 0, %s80
    %s81 = sphi 0, %s78
    %s82 = sphi 0, %s81
    %s98 = sphi 0, %s82
    %s106 = sphi 0, %s108
    %s109 = sphi 0, %s106
    %s110 = sphi 0, %s109
    %s126 = sphi 0, %s110
    %s134 = sphi 0, %s136
    %s137 = sphi 0, %s134
    %s138 = sphi 0, %s137
    %s154 = sphi 0, %s138
    %s162 = sphi 0, %s164
    %s165 = sphi 0, %s162
    %s166 = sphi 0, %s165
    %s182 = sphi 0, %s166
  $region4: #{cae_3_bn_forward.10} parent=0 // loop_header_branch
    %15 = sbr.rel (%p13) target = $region8
  $region5: #{cae_3_bn_forward.10} parent=0 // loop_body
    %s17 = ssub.s32 %s12, 1
    %s18 = ssub.s32 %s12, 2
    %s25 = sadd.s32 1, %s20
    %p26 = scmp.ge.s32.totalorder %s25, 1
    %s27 = scalar_select %p26, 0, %s25
    %s28 = sadd.s32 1, %s19
    %s29 = scalar_select %p26, %s28, %s19
    %p30 = scmp.ge.s32.totalorder %s29, 2
    %s31 = scalar_select %p30, 0, %s29
    %s33 = sadd.s32 %s32, 1
    %p36 = scmp.eq.s32.totalorder %s12, 1
    %p37 = scmp.ne.s32.totalorder %s32, %s34
    %p38 = scmp.eq.s32.totalorder %s12, 0
    %p39 = por %p37, %p38
    %p40 = scmp.ne.s32.totalorder %s32, %s34
    %p41 = scmp.eq.s32.totalorder %s17, 1
    %p42 = por %p40, %p41
    %p43 = scmp.ne.s32.totalorder %s34, %s35
    %p44 = scmp.eq.s32.totalorder %s17, 0
    %p45 = por %p43, %p44
    %p46 = scmp.ne.s32.totalorder %s34, %s35
    %p47 = scmp.eq.s32.totalorder %s18, 1
    %p48 = por %p46, %p47
    %p50 = scmp.ne.s32.totalorder %s35, %s49
    %p51 = scmp.eq.s32.totalorder %s18, 0
    %p52 = por %p50, %p51
    %s54 = sadd.s32 %s53, 1
    %p57 = scmp.eq.s32.totalorder %s12, 1
    %p58 = scmp.ne.s32.totalorder %s53, %s55
    %p59 = scmp.eq.s32.totalorder %s12, 0
    %p60 = por %p58, %p59
    %p61 = scmp.ne.s32.totalorder %s53, %s55
    %p62 = scmp.eq.s32.totalorder %s17, 1
    %p63 = por %p61, %p62
    %p64 = scmp.ne.s32.totalorder %s55, %s56
    %p65 = scmp.eq.s32.totalorder %s17, 0
    %p66 = por %p64, %p65
    %p67 = scmp.ne.s32.totalorder %s55, %s56
    %p68 = scmp.eq.s32.totalorder %s18, 1
    %p69 = por %p67, %p68
    %p71 = scmp.ne.s32.totalorder %s56, %s70
    %p72 = scmp.eq.s32.totalorder %s18, 0
    %p73 = por %p71, %p72
    %s74 = ssub.s32 %s19, %s31
    %s75 = ssub.s32 %s20, %s27
    %s76 = sor.u32 %s74, %s75
    %p77 = scmp.eq.s32.totalorder %s76, 0
    %s79 = sadd.s32 %s78, 1
    %s80 = scalar_select %p77, %s78, %s79
    %p83 = pneg %p77
    %p84 = scmp.eq.s32.totalorder %s12, 1
    %p85 = por %p83, %p84
    %p86 = scmp.ne.s32.totalorder %s78, %s81
    %p87 = scmp.eq.s32.totalorder %s12, 0
    %p88 = por %p86, %p87
    %p89 = scmp.ne.s32.totalorder %s78, %s81
    %p90 = scmp.eq.s32.totalorder %s17, 1
    %p91 = por %p89, %p90
    %p92 = scmp.ne.s32.totalorder %s81, %s82
    %p93 = scmp.eq.s32.totalorder %s17, 0
    %p94 = por %p92, %p93
    %p95 = scmp.ne.s32.totalorder %s81, %s82
    %p96 = scmp.eq.s32.totalorder %s18, 1
    %p97 = por %p95, %p96
    %p99 = scmp.ne.s32.totalorder %s82, %s98
    %p100 = scmp.eq.s32.totalorder %s18, 0
    %p101 = por %p99, %p100
    %s102 = ssub.s32 %s19, %s31
    %s103 = ssub.s32 %s20, %s27
    %s104 = sor.u32 %s102, %s103
    %p105 = scmp.eq.s32.totalorder %s104, 0
    %s107 = sadd.s32 %s106, 1
    %s108 = scalar_select %p105, %s106, %s107
    %p111 = pneg %p105
    %p112 = scmp.eq.s32.totalorder %s12, 1
    %p113 = por %p111, %p112
    %p114 = scmp.ne.s32.totalorder %s106, %s109
    %p115 = scmp.eq.s32.totalorder %s12, 0
    %p116 = por %p114, %p115
    %p117 = scmp.ne.s32.totalorder %s106, %s109
    %p118 = scmp.eq.s32.totalorder %s17, 1
    %p119 = por %p117, %p118
    %p120 = scmp.ne.s32.totalorder %s109, %s110
    %p121 = scmp.eq.s32.totalorder %s17, 0
    %p122 = por %p120, %p121
    %p123 = scmp.ne.s32.totalorder %s109, %s110
    %p124 = scmp.eq.s32.totalorder %s18, 1
    %p125 = por %p123, %p124
    %p127 = scmp.ne.s32.totalorder %s110, %s126
    %p128 = scmp.eq.s32.totalorder %s18, 0
    %p129 = por %p127, %p128
    %s130 = ssub.s32 %s19, %s31
    %s131 = ssub.s32 %s20, %s27
    %s132 = sor.u32 %s130, %s131
    %p133 = scmp.eq.s32.totalorder %s132, 0
    %s135 = sadd.s32 %s134, 1
    %s136 = scalar_select %p133, %s134, %s135
    %p139 = pneg %p133
    %p140 = scmp.eq.s32.totalorder %s12, 1
    %p141 = por %p139, %p140
    %p142 = scmp.ne.s32.totalorder %s134, %s137
    %p143 = scmp.eq.s32.totalorder %s12, 0
    %p144 = por %p142, %p143
    %p145 = scmp.ne.s32.totalorder %s134, %s137
    %p146 = scmp.eq.s32.totalorder %s17, 1
    %p147 = por %p145, %p146
    %p148 = scmp.ne.s32.totalorder %s137, %s138
    %p149 = scmp.eq.s32.totalorder %s17, 0
    %p150 = por %p148, %p149
    %p151 = scmp.ne.s32.totalorder %s137, %s138
    %p152 = scmp.eq.s32.totalorder %s18, 1
    %p153 = por %p151, %p152
    %p155 = scmp.ne.s32.totalorder %s138, %s154
    %p156 = scmp.eq.s32.totalorder %s18, 0
    %p157 = por %p155, %p156
    %s158 = ssub.s32 %s19, %s31
    %s159 = ssub.s32 %s20, %s27
    %s160 = sor.u32 %s158, %s159
    %p161 = scmp.eq.s32.totalorder %s160, 0
    %s163 = sadd.s32 %s162, 1
    %s164 = scalar_select %p161, %s162, %s163
    %p167 = pneg %p161
    %p168 = scmp.eq.s32.totalorder %s12, 1
    %p169 = por %p167, %p168
    %p170 = scmp.ne.s32.totalorder %s162, %s165
    %p171 = scmp.eq.s32.totalorder %s12, 0
    %p172 = por %p170, %p171
    %p173 = scmp.ne.s32.totalorder %s162, %s165
    %p174 = scmp.eq.s32.totalorder %s17, 1
    %p175 = por %p173, %p174
    %p176 = scmp.ne.s32.totalorder %s165, %s166
    %p177 = scmp.eq.s32.totalorder %s17, 0
    %p178 = por %p176, %p177
    %p179 = scmp.ne.s32.totalorder %s165, %s166
    %p180 = scmp.eq.s32.totalorder %s18, 1
    %p181 = por %p179, %p180
    %p183 = scmp.ne.s32.totalorder %s166, %s182
    %p184 = scmp.eq.s32.totalorder %s18, 0
    %p185 = por %p183, %p184
    %p186 = scmp.le.s32.totalorder 1, %s12
    %p187 = scmp.lt.s32.totalorder %s12, 3
    %p188 = pnand %p186, %p187
    %p189 = pneg %p188
    // Predicated region
    $region9: #{cae_3_bn_forward.10} parent=5 // pred_check
      _
    $region10: #{cae_3_bn_forward.10} parent=5 // pred_check_branch
      %191 = sbr.rel (%p188) target = $region12
    $region11: #{cae_3_bn_forward.10} parent=5 // pred_region
      %s192 = ssub.s32 %s12, 1
      // Predicated region
      $region13: #{cae_3_bn_forward.10} parent=11 // pred_check
        %p193 = pneg %p45
      $region14: #{cae_3_bn_forward.10} parent=11 // pred_check_branch
        %195 = sbr.rel (%p193) target = $region16
      $region15: #{cae_3_bn_forward.10} parent=11 // pred_region
        _
      $region16: #{cae_3_bn_forward.10} parent=11 // pred_fallthru
        _
      // Predicated region
      $region17: #{cae_3_bn_forward.10} parent=11 // pred_check
        %p196 = pneg %p66
      $region18: #{cae_3_bn_forward.10} parent=11 // pred_check_branch
        %198 = sbr.rel (%p196) target = $region20
      $region19: #{cae_3_bn_forward.10} parent=11 // pred_region
        _
      $region20: #{cae_3_bn_forward.10} parent=11 // pred_fallthru
        _
    $region12: #{cae_3_bn_forward.10} parent=5 // pred_fallthru
      _
    %p199 = scmp.lt.s32.totalorder %s12, 2
    // Predicated region
    $region21: #{cae_3_bn_forward.10} parent=5 // pred_check
      %p200 = pneg %p199
    $region22: #{cae_3_bn_forward.10} parent=5 // pred_check_branch
      %202 = sbr.rel (%p200) target = $region24
    $region23: #{cae_3_bn_forward.10} parent=5 // pred_region
      // Predicated region
      $region25: #{cae_3_bn_forward.10} parent=23 // pred_check
        %p203 = pneg %p88
      $region26: #{cae_3_bn_forward.10} parent=23 // pred_check_branch
        %205 = sbr.rel (%p203) target = $region28
      $region27: #{cae_3_bn_forward.10} parent=23 // pred_region
        %p206 = scmp.lt.s32.totalorder %s19, 1
        %s207 = scalar_select %p206, %s19, 1
        %p208 = scmp.lt.s32.totalorder %s20, 0
        %s209 = scalar_select %p208, %s20, 0
        %s210 = smul.addr %s207, 6
        %s211 = sadd.s32 %s209, %s210
        %s212 = smul.addr %s211, 4
        %s213 = scalar_lea.vmem %s2, %s212
      $region28: #{cae_3_bn_forward.10} parent=23 // pred_fallthru
        _
    $region24: #{cae_3_bn_forward.10} parent=5 // pred_fallthru
      _
    %p214 = scmp.le.s32.totalorder 1, %s12
    %p215 = scmp.lt.s32.totalorder %s12, 3
    %p216 = pnand %p214, %p215
    %p217 = pneg %p216
    // Predicated region
    $region29: #{cae_3_bn_forward.10} parent=5 // pred_check
      _
    $region30: #{cae_3_bn_forward.10} parent=5 // pred_check_branch
      %219 = sbr.rel (%p216) target = $region32
    $region31: #{cae_3_bn_forward.10} parent=5 // pred_region
      %s220 = ssub.s32 %s12, 1
      %p221 = pneg %p45
      %p222 = pneg %p42
      %p223 = pneg %p66
      %p224 = pneg %p63
      %p225 = scmp.lt.s32.totalorder %s21, 1
      %s226 = scalar_select %p225, %s21, 1
      %p227 = scmp.lt.s32.totalorder %s22, 0
      %s228 = scalar_select %p227, %s22, 0
      %s229 = smul.addr %s226, 6
      %s230 = sadd.s32 %s228, %s229
      %s231 = smul.addr %s230, 4
      %s232 = scalar_lea.vmem %s2, %s231
      %p233 = pneg %p94
      %p234 = pneg %p91
      %p235 = pneg %p122
      %p236 = pneg %p119
      %p237 = scmp.lt.s32.totalorder %s21, 1
      %s238 = scalar_select %p237, %s21, 1
      %p239 = scmp.lt.s32.totalorder %s22, 0
      %s240 = scalar_select %p239, %s22, 0
      %s241 = smul.addr %s238, 4
      %s242 = sadd.s32 %s240, %s241
      %s243 = smul.addr %s242, 4
      %s244 = scalar_lea.vmem %s3, %s243
      %p245 = pneg %p150
      %p246 = pneg %p147
      %p247 = scmp.lt.s32.totalorder %s21, 1
      %s248 = scalar_select %p247, %s21, 1
      %p249 = scmp.lt.s32.totalorder %s22, 0
      %s250 = scalar_select %p249, %s22, 0
      %s251 = smul.addr %s250, 4
      %s252 = smul.addr %s248, 4
      %s253 = sadd.s32 %s251, %s252
      %s254 = smul.addr %s253, 8
      %s255 = scalar_lea.vmem %s4, %s254
      %p256 = pneg %p178
      %p257 = pneg %p175
      %p258 = scmp.lt.s32.totalorder %s21, 1
      %s259 = scalar_select %p258, %s21, 1
      %p260 = scmp.lt.s32.totalorder %s22, 0
      %s261 = scalar_select %p260, %s22, 0
      %s262 = smul.addr %s261, 4
      %s263 = smul.addr %s259, 4
      %s264 = sadd.s32 %s262, %s263
      %s265 = smul.addr %s264, 8
      %s266 = scalar_lea.vmem %s5, %s265
      %p267 = scmp.lt.s32.totalorder %s21, 1
      %s268 = scalar_select %p267, %s21, 1
      %p269 = scmp.lt.s32.totalorder %s22, 0
      %s270 = scalar_select %p269, %s22, 0
      %s271 = smul.addr %s268, 6
      %s272 = sadd.s32 %s270, %s271
      %s273 = smul.addr %s272, 4
      %s274 = scalar_lea.vmem %s2, %s273
      %p275 = scmp.lt.s32.totalorder %s21, 1
      %s276 = scalar_select %p275, %s21, 1
      %p277 = scmp.lt.s32.totalorder %s22, 0
      %s278 = scalar_select %p277, %s22, 0
      %s279 = smul.addr %s276, 4
      %s280 = sadd.s32 %s278, %s279
      %s281 = smul.addr %s280, 4
      %s282 = scalar_lea.vmem %s3, %s281
      %p283 = scmp.lt.s32.totalorder %s21, 1
      %s284 = scalar_select %p283, %s21, 1
      %p285 = scmp.lt.s32.totalorder %s22, 0
      %s286 = scalar_select %p285, %s22, 0
      %s287 = smul.addr %s286, 4
      %s288 = smul.addr %s284, 4
      %s289 = sadd.s32 %s287, %s288
      %s290 = smul.addr %s289, 8
      %s291 = scalar_lea.vmem %s4, %s290
      %p292 = scmp.lt.s32.totalorder %s21, 1
      %s293 = scalar_select %p292, %s21, 1
      %p294 = scmp.lt.s32.totalorder %s22, 0
      %s295 = scalar_select %p294, %s22, 0
      %s296 = smul.addr %s295, 4
      %s297 = smul.addr %s293, 4
      %s298 = sadd.s32 %s296, %s297
      %s299 = smul.addr %s298, 8
      %s300 = scalar_lea.vmem %s5, %s299
      %v302 = vld [vmem:[%s0] sm:$0xf]
      %v303 = vld [vmem:[%s0 + $0x4] sm:$0xf]
      %v304 = vld [vmem:[%s0 + $0x8] sm:$0xf]
      %v305 = vld [vmem:[%s0 + $0xc] sm:$0xf]
      %v306 = vld [vmem:[%s274] sm:$0xf]
      %v307 = vld [vmem:[%s274 + $0x4] sm:$0xf]
      %v308 = vld [vmem:[%s274 + $0x8] sm:$0xf]
      %v309 = vld [vmem:[%s274 + $0xc] sm:$0xf]
      %v310 = vld [vmem:[%s274 + $0x10] sm:$0xf]
      %v311 = vld [vmem:[%s274 + $0x14] sm:$0xf]
      %v312 = vld [vmem:[%s1] sm:$0xff]
      %v313 = vld [vmem:[%s1 + $0x8] sm:$0xff]
      %v314 = vld [vmem:[%s1 + $0x10] sm:$0xff]
      %v315 = vld [vmem:[%s1 + $0x18] sm:$0xff]
      %317 = vset.pattern.permute.xlu0 0
      %318 = vperm.xlu0 %317, %v312
      %v319 = vpop.permute.xlu0 %318
      %322 = vset.pattern.permute.xlu0 0
      %323 = vperm.xlu0 %322, %v313
      %v324 = vpop.permute.xlu0 %323
      %327 = vset.pattern.permute.xlu0 0
      %328 = vperm.xlu0 %327, %v314
      %v329 = vpop.permute.xlu0 %328
      %332 = vset.pattern.permute.xlu0 0
      %333 = vperm.xlu0 %332, %v315
      %v334 = vpop.permute.xlu0 %333
      %v340 = vunpack.c.l.b16 %v302
      %v341 = vunpack.c.l.b16 %v303
      %v342 = vunpack.c.l.b16 %v304
      %v343 = vunpack.c.l.b16 %v305
      %v344 = vpack.c.b16 %v341, %v340
      %v345 = vpack.c.b16 %v343, %v342
      %v352 = vunpack.c.l.b16 %v306
      %v353 = vunpack.c.l.b16 %v307
      %v354 = vunpack.c.l.b16 %v308
      %v355 = vunpack.c.l.b16 %v309
      %v356 = vunpack.c.l.b16 %v310
      %v357 = vunpack.c.l.b16 %v311
      %v358 = vpack.c.b16 %v353, %v352
      %v359 = vpack.c.b16 %v355, %v354
      %v360 = vpack.c.b16 %v357, %v356
      %vm364 = vcmask 392192
      %v366 = vsel %vm364, %v344, 0
      %v369 = vsel %vm364, %v345, 0
      %371 = vmatprep.subr.bf16.mxu0 0
      %372 = vmatpush1.bf16.msra.mxu0 %v358
      %373 = vmatprep.subr.bf16.mxu0 0
      %374 = vmatpush1.bf16.msra.mxu0 %v359
      %375 = vmatprep.subr.bf16.mxu0 0
      %376 = vmatpush1.bf16.msra.mxu0 %v360
      %377 = vmatprep.subr.bf16.mxu0 0
      %378 = vmatpush1.bf16.msra.mxu0 0
      %379 = vmatprep.subr.bf16.mxu0 0
      %380 = vmatpush1.bf16.msra.mxu0 0
      %381 = vmatprep.subr.bf16.mxu0 0
      %382 = vmatpush1.bf16.msra.mxu0 0
      %383 = vmatprep.subr.bf16.mxu0 0
      %384 = vmatpush1.bf16.msra.mxu0 0
      %385 = vmatprep.subr.bf16.mxu0 0
      %386 = vmatpush1.bf16.msra.mxu0 0
      %387 = vmatprep.subr.bf16.mxu0 0
      %388 = vmatpush1.bf16.msra.mxu0 0
      %389 = vmatprep.subr.bf16.mxu0 0
      %390 = vmatpush1.bf16.msra.mxu0 0
      %391 = vmatprep.subr.bf16.mxu0 0
      %392 = vmatpush1.bf16.msra.mxu0 0
      %393 = vmatprep.subr.bf16.mxu0 0
      %394 = vmatpush1.bf16.msra.mxu0 0
      %395 = vmatprep.subr.bf16.mxu0 0
      %396 = vmatpush1.bf16.msra.mxu0 0
      %397 = vmatprep.subr.bf16.mxu0 0
      %398 = vmatpush1.bf16.msra.mxu0 0
      %399 = vmatprep.subr.bf16.mxu0 0
      %400 = vmatpush1.bf16.msra.mxu0 0
      %401 = vmatprep.subr.bf16.mxu0 0
      %402 = vmatpush1.bf16.msra.mxu0 0
      %403 = vmatprep.mubr.bf16.mxu0 0
      %404 = vmatmul.mubr.bf16.gmra.mrb[0].mxu0 %v366
      %v405 = vpop.f32.mrb[0].mxu0
      %v406 = vadd.f32 %v319, %v405
      %v407 = vpop.f32.mrb[0].mxu0
      %v408 = vpop.f32.mrb[0].mxu0
      %v409 = vadd.f32 %v324, %v408
      %v410 = vpop.f32.mrb[0].mxu0
      %411 = vmatprep.mubr.bf16.mxu0 0
      %412 = vmatmul.mubr.bf16.gmra.mrb[0].mxu0 %v369
      %v413 = vpop.f32.mrb[0].mxu0
      %v414 = vadd.f32 %v329, %v413
      %v415 = vpop.f32.mrb[0].mxu0
      %v416 = vpop.f32.mrb[0].mxu0
      %v417 = vadd.f32 %v334, %v416
      %v418 = vpop.f32.mrb[0].mxu0
      %419 = vdwg.mxu0
      %vm420 = vcmp.ge.f32.partialorder %v406, 0.0
      %vm421 = vcmp.ge.f32.partialorder %v409, 0.0
      %vm422 = vcmp.ge.f32.partialorder %v414, 0.0
      %vm423 = vcmp.ge.f32.partialorder %v417, 0.0
      %v424 = vmul.f32 %v406, 0.01
      %v425 = vmul.f32 %v409, 0.01
      %v426 = vmul.f32 %v414, 0.01
      %v427 = vmul.f32 %v417, 0.01
      %v428 = vsel %vm420, %v406, %v424
      %v429 = vsel %vm421, %v409, %v425
      %v430 = vsel %vm422, %v414, %v426
      %v431 = vsel %vm423, %v417, %v427
      %v432 = vpack.c.bf16 %v429, %v428
      %v433 = vpack.c.bf16 %v431, %v430
      %v436 = vunpack.c.l.b16 %v432
      %v437 = vunpack.c.h.b16 %v432
      %v438 = vunpack.c.l.b16 %v433
      %v439 = vunpack.c.h.b16 %v433
      %v440 = vpack.c.b16 %v436, %v436
      %v441 = vpack.c.b16 %v437, %v437
      %v442 = vpack.c.b16 %v438, %v438
      %v443 = vpack.c.b16 %v439, %v439
      %vm448 = vcmask 35840
      %449 = vst.msk [vmem:[%s282] sm:$0xf] %vm448, %v440
      %450 = vst.msk [vmem:[%s282 + $0x4] sm:$0xf] %vm448, %v441
      %451 = vst.msk [vmem:[%s282 + $0x8] sm:$0xf] %vm448, %v442
      %452 = vst.msk [vmem:[%s282 + $0xc] sm:$0xf] %vm448, %v443
      %vm453 = vcmask 39936
      %v454 = vsel %vm453, %v428, 0.0
      %455 = vadd.xlane.f32.xlu0 %v454
      %v456 = vpop.xlane.xlu0 %455
      %v457 = vsel %vm453, %v429, 0.0
      %458 = vadd.xlane.f32.xlu0 %v457
      %v459 = vpop.xlane.xlu0 %458
      %v460 = vsel %vm453, %v430, 0.0
      %461 = vadd.xlane.f32.xlu0 %v460
      %v462 = vpop.xlane.xlu0 %461
      %v463 = vsel %vm453, %v431, 0.0
      %464 = vadd.xlane.f32.xlu0 %v463
      %v465 = vpop.xlane.xlu0 %464
      %vm466 = vcmask 7168
      %467 = vst.msk [vmem:[%s291] sm:$0xff] %vm466, %v456
      %468 = vst.msk [vmem:[%s291 + $0x8] sm:$0xff] %vm466, %v459
      %469 = vst.msk [vmem:[%s291 + $0x10] sm:$0xff] %vm466, %v462
      %470 = vst.msk [vmem:[%s291 + $0x18] sm:$0xff] %vm466, %v465
      %v471 = vmul.f32 %v428, %v428
      %v472 = vmul.f32 %v429, %v429
      %v473 = vmul.f32 %v430, %v430
      %v474 = vmul.f32 %v431, %v431
      %v475 = vsel %vm453, %v471, 0.0
      %476 = vadd.xlane.f32.xlu0 %v475
      %v477 = vpop.xlane.xlu0 %476
      %v478 = vsel %vm453, %v472, 0.0
      %479 = vadd.xlane.f32.xlu0 %v478
      %v480 = vpop.xlane.xlu0 %479
      %v481 = vsel %vm453, %v473, 0.0
      %482 = vadd.xlane.f32.xlu0 %v481
      %v483 = vpop.xlane.xlu0 %482
      %v484 = vsel %vm453, %v474, 0.0
      %485 = vadd.xlane.f32.xlu0 %v484
      %v486 = vpop.xlane.xlu0 %485
      %487 = vst.msk [vmem:[%s300] sm:$0xff] %vm466, %v477
      %488 = vst.msk [vmem:[%s300 + $0x8] sm:$0xff] %vm466, %v480
      %489 = vst.msk [vmem:[%s300 + $0x10] sm:$0xff] %vm466, %v483
      %490 = vst.msk [vmem:[%s300 + $0x18] sm:$0xff] %vm466, %v486
      %p491 = scmp.lt.s32.totalorder %s21, 1
      %s492 = scalar_select %p491, %s21, 1
      %p493 = scmp.lt.s32.totalorder %s22, 0
      %s494 = scalar_select %p493, %s22, 0
      %s495 = smul.addr %s492, 4
      %s496 = sadd.s32 %s494, %s495
      %s497 = smul.addr %s496, 4
      %s498 = scalar_lea.vmem %s3, %s497
      %p499 = scmp.lt.s32.totalorder %s21, 1
      %s500 = scalar_select %p499, %s21, 1
      %p501 = scmp.lt.s32.totalorder %s22, 0
      %s502 = scalar_select %p501, %s22, 0
      %s503 = smul.addr %s502, 4
      %s504 = smul.addr %s500, 4
      %s505 = sadd.s32 %s503, %s504
      %s506 = smul.addr %s505, 8
      %s507 = scalar_lea.vmem %s4, %s506
      %p508 = scmp.lt.s32.totalorder %s21, 1
      %s509 = scalar_select %p508, %s21, 1
      %p510 = scmp.lt.s32.totalorder %s22, 0
      %s511 = scalar_select %p510, %s22, 0
      %s512 = smul.addr %s511, 4
      %s513 = smul.addr %s509, 4
      %s514 = sadd.s32 %s512, %s513
      %s515 = smul.addr %s514, 8
      %s516 = scalar_lea.vmem %s5, %s515
      // Predicated region
      $region33: #{cae_3_bn_forward.10} parent=31 // pred_check
        %p517 = pneg %p119
      $region34: #{cae_3_bn_forward.10} parent=31 // pred_check_branch
        %519 = sbr.rel (%p517) target = $region36
      $region35: #{cae_3_bn_forward.10} parent=31 // pred_region
        _
      $region36: #{cae_3_bn_forward.10} parent=31 // pred_fallthru
        _
      // Predicated region
      $region37: #{cae_3_bn_forward.10} parent=31 // pred_check
        %p520 = pneg %p147
      $region38: #{cae_3_bn_forward.10} parent=31 // pred_check_branch
        %522 = sbr.rel (%p520) target = $region40
      $region39: #{cae_3_bn_forward.10} parent=31 // pred_region
        _
      $region40: #{cae_3_bn_forward.10} parent=31 // pred_fallthru
        _
      // Predicated region
      $region41: #{cae_3_bn_forward.10} parent=31 // pred_check
        %p523 = pneg %p175
      $region42: #{cae_3_bn_forward.10} parent=31 // pred_check_branch
        %525 = sbr.rel (%p523) target = $region44
      $region43: #{cae_3_bn_forward.10} parent=31 // pred_region
        _
      $region44: #{cae_3_bn_forward.10} parent=31 // pred_fallthru
        _
    $region32: #{cae_3_bn_forward.10} parent=5 // pred_fallthru
      _
    %p526 = scmp.le.s32.totalorder 2, %s12
    // Predicated region
    $region45: #{cae_3_bn_forward.10} parent=5 // pred_check
      %p527 = pneg %p526
    $region46: #{cae_3_bn_forward.10} parent=5 // pred_check_branch
      %529 = sbr.rel (%p527) target = $region48
    $region47: #{cae_3_bn_forward.10} parent=5 // pred_region
      %s530 = ssub.s32 %s12, 2
      // Predicated region
      $region49: #{cae_3_bn_forward.10} parent=47 // pred_check
        %p531 = pneg %p125
      $region50: #{cae_3_bn_forward.10} parent=47 // pred_check_branch
        %533 = sbr.rel (%p531) target = $region52
      $region51: #{cae_3_bn_forward.10} parent=47 // pred_region
        %p534 = scmp.lt.s32.totalorder %s23, 1
        %s535 = scalar_select %p534, %s23, 1
        %p536 = scmp.lt.s32.totalorder %s24, 0
        %s537 = scalar_select %p536, %s24, 0
        %s538 = smul.addr %s535, 4
        %s539 = sadd.s32 %s537, %s538
        %s540 = smul.addr %s539, 4
        %s541 = scalar_lea.vmem %s3, %s540
      $region52: #{cae_3_bn_forward.10} parent=47 // pred_fallthru
        _
      // Predicated region
      $region53: #{cae_3_bn_forward.10} parent=47 // pred_check
        %p542 = pneg %p153
      $region54: #{cae_3_bn_forward.10} parent=47 // pred_check_branch
        %544 = sbr.rel (%p542) target = $region56
      $region55: #{cae_3_bn_forward.10} parent=47 // pred_region
        %p545 = scmp.lt.s32.totalorder %s23, 1
        %s546 = scalar_select %p545, %s23, 1
        %p547 = scmp.lt.s32.totalorder %s24, 0
        %s548 = scalar_select %p547, %s24, 0
        %s549 = smul.addr %s548, 4
        %s550 = smul.addr %s546, 4
        %s551 = sadd.s32 %s549, %s550
        %s552 = smul.addr %s551, 8
        %s553 = scalar_lea.vmem %s4, %s552
      $region56: #{cae_3_bn_forward.10} parent=47 // pred_fallthru
        _
      // Predicated region
      $region57: #{cae_3_bn_forward.10} parent=47 // pred_check
        %p554 = pneg %p181
      $region58: #{cae_3_bn_forward.10} parent=47 // pred_check_branch
        %556 = sbr.rel (%p554) target = $region60
      $region59: #{cae_3_bn_forward.10} parent=47 // pred_region
        %p557 = scmp.lt.s32.totalorder %s23, 1
        %s558 = scalar_select %p557, %s23, 1
        %p559 = scmp.lt.s32.totalorder %s24, 0
        %s560 = scalar_select %p559, %s24, 0
        %s561 = smul.addr %s560, 4
        %s562 = smul.addr %s558, 4
        %s563 = sadd.s32 %s561, %s562
        %s564 = smul.addr %s563, 8
        %s565 = scalar_lea.vmem %s5, %s564
      $region60: #{cae_3_bn_forward.10} parent=47 // pred_fallthru
        _
    $region48: #{cae_3_bn_forward.10} parent=5 // pred_fallthru
      _
  $region6: #{cae_3_bn_forward.10} parent=0 // loop_footer
    %s16 = sadd.s32 1, %s12
  $region7: #{cae_3_bn_forward.10} parent=0 // loop_footer_branch
    %11 = sbr.rel target = $region3
  $region8: #{cae_3_bn_forward.10} parent=0 // loop_exit
    _

// kernel: cae_3_bn_forward.12
$region0: #{cae_3_bn_forward.12}
  #allocation0 [shape = 'u32[]', space=smem, size = 0x4, offset = 0x4, fixed_abs, tag = 'smem constant byte address 0x4 - core index']
  #allocation1 [shape = 'u32[144,128]{1,0:T(1,128)}', space=vmem, size = 0x12000, scoped, tag = 'internal scratch']
  %s0 = inlined_call_operand.vmem [shape: bf16[16,96], index: 0, kind: input, shape index: {}]
  %s1 = inlined_call_operand.vmem [shape: f32[16,1], index: 1, kind: input, shape index: {}]
  %s2 = inlined_call_operand.vmem [shape: bf16[2,96,7], index: 2, kind: input, shape index: {}]
  %s3 = inlined_call_operand.vmem [shape: bf16[2,16,7], index: 3, kind: output, shape index: {0}]
  %s4 = inlined_call_operand.vmem [shape: f32[2,1,16,1], index: 4, kind: output, shape index: {1}]
  %s5 = inlined_call_operand.vmem [shape: f32[2,1,16,1], index: 5, kind: output, shape index: {2}]
  %6 = xla_tuple %s3, %s4, %s5
  %s7 = sld [smem:[#allocation0]]
  $region61: #{cae_3_bn_forward.12} parent=0
    _
  %s9 = ssub.s32 1, %s7
  %s10 = scalar_select 0, %s9, %s7
  loop: start=0, step=1, limit=4
  $region2: #{cae_3_bn_forward.12} parent=0 // loop_pre_header
    _
  $region3: #{cae_3_bn_forward.12} parent=0 // loop_header
    %s12 = sphi 0, %s16
    %p13 = scmp.ge.s32.totalorder %s12, 4
    %s19 = sphi 0, %s31
    %s20 = sphi 0, %s27
    %s21 = sphi 0, %s19
    %s22 = sphi 0, %s20
    %s23 = sphi 0, %s21
    %s24 = sphi 0, %s22
    %s32 = sphi 0, %s32
    %s34 = sphi 0, %s32
    %s35 = sphi 0, %s34
    %s49 = sphi 0, %s35
    %s53 = sphi 0, %s53
    %s55 = sphi 0, %s53
    %s56 = sphi 0, %s55
    %s70 = sphi 0, %s56
    %s78 = sphi 0, %s80
    %s81 = sphi 0, %s78
    %s82 = sphi 0, %s81
    %s98 = sphi 0, %s82
    %s106 = sphi 0, %s108
    %s109 = sphi 0, %s106
    %s110 = sphi 0, %s109
    %s126 = sphi 0, %s110
    %s134 = sphi 0, %s136
    %s137 = sphi 0, %s134
    %s138 = sphi 0, %s137
    %s154 = sphi 0, %s138
    %s162 = sphi 0, %s164
    %s165 = sphi 0, %s162
    %s166 = sphi 0, %s165
    %s182 = sphi 0, %s166
  $region4: #{cae_3_bn_forward.12} parent=0 // loop_header_branch
    %15 = sbr.rel (%p13) target = $region8
  $region5: #{cae_3_bn_forward.12} parent=0 // loop_body
    %s17 = ssub.s32 %s12, 1
    %s18 = ssub.s32 %s12, 2
    %s25 = sadd.s32 1, %s20
    %p26 = scmp.ge.s32.totalorder %s25, 1
    %s27 = scalar_select %p26, 0, %s25
    %s28 = sadd.s32 1, %s19
    %s29 = scalar_select %p26, %s28, %s19
    %p30 = scmp.ge.s32.totalorder %s29, 2
    %s31 = scalar_select %p30, 0, %s29
    %s33 = sadd.s32 %s32, 1
    %p36 = scmp.eq.s32.totalorder %s12, 1
    %p37 = scmp.ne.s32.totalorder %s32, %s34
    %p38 = scmp.eq.s32.totalorder %s12, 0
    %p39 = por %p37, %p38
    %p40 = scmp.ne.s32.totalorder %s32, %s34
    %p41 = scmp.eq.s32.totalorder %s17, 1
    %p42 = por %p40, %p41
    %p43 = scmp.ne.s32.totalorder %s34, %s35
    %p44 = scmp.eq.s32.totalorder %s17, 0
    %p45 = por %p43, %p44
    %p46 = scmp.ne.s32.totalorder %s34, %s35
    %p47 = scmp.eq.s32.totalorder %s18, 1
    %p48 = por %p46, %p47
    %p50 = scmp.ne.s32.totalorder %s35, %s49
    %p51 = scmp.eq.s32.totalorder %s18, 0
    %p52 = por %p50, %p51
    %s54 = sadd.s32 %s53, 1
    %p57 = scmp.eq.s32.totalorder %s12, 1
    %p58 = scmp.ne.s32.totalorder %s53, %s55
    %p59 = scmp.eq.s32.totalorder %s12, 0
    %p60 = por %p58, %p59
    %p61 = scmp.ne.s32.totalorder %s53, %s55
    %p62 = scmp.eq.s32.totalorder %s17, 1
    %p63 = por %p61, %p62
    %p64 = scmp.ne.s32.totalorder %s55, %s56
    %p65 = scmp.eq.s32.totalorder %s17, 0
    %p66 = por %p64, %p65
    %p67 = scmp.ne.s32.totalorder %s55, %s56
    %p68 = scmp.eq.s32.totalorder %s18, 1
    %p69 = por %p67, %p68
    %p71 = scmp.ne.s32.totalorder %s56, %s70
    %p72 = scmp.eq.s32.totalorder %s18, 0
    %p73 = por %p71, %p72
    %s74 = ssub.s32 %s19, %s31
    %s75 = ssub.s32 %s20, %s27
    %s76 = sor.u32 %s74, %s75
    %p77 = scmp.eq.s32.totalorder %s76, 0
    %s79 = sadd.s32 %s78, 1
    %s80 = scalar_select %p77, %s78, %s79
    %p83 = pneg %p77
    %p84 = scmp.eq.s32.totalorder %s12, 1
    %p85 = por %p83, %p84
    %p86 = scmp.ne.s32.totalorder %s78, %s81
    %p87 = scmp.eq.s32.totalorder %s12, 0
    %p88 = por %p86, %p87
    %p89 = scmp.ne.s32.totalorder %s78, %s81
    %p90 = scmp.eq.s32.totalorder %s17, 1
    %p91 = por %p89, %p90
    %p92 = scmp.ne.s32.totalorder %s81, %s82
    %p93 = scmp.eq.s32.totalorder %s17, 0
    %p94 = por %p92, %p93
    %p95 = scmp.ne.s32.totalorder %s81, %s82
    %p96 = scmp.eq.s32.totalorder %s18, 1
    %p97 = por %p95, %p96
    %p99 = scmp.ne.s32.totalorder %s82, %s98
    %p100 = scmp.eq.s32.totalorder %s18, 0
    %p101 = por %p99, %p100
    %s102 = ssub.s32 %s19, %s31
    %s103 = ssub.s32 %s20, %s27
    %s104 = sor.u32 %s102, %s103
    %p105 = scmp.eq.s32.totalorder %s104, 0
    %s107 = sadd.s32 %s106, 1
    %s108 = scalar_select %p105, %s106, %s107
    %p111 = pneg %p105
    %p112 = scmp.eq.s32.totalorder %s12, 1
    %p113 = por %p111, %p112
    %p114 = scmp.ne.s32.totalorder %s106, %s109
    %p115 = scmp.eq.s32.totalorder %s12, 0
    %p116 = por %p114, %p115
    %p117 = scmp.ne.s32.totalorder %s106, %s109
    %p118 = scmp.eq.s32.totalorder %s17, 1
    %p119 = por %p117, %p118
    %p120 = scmp.ne.s32.totalorder %s109, %s110
    %p121 = scmp.eq.s32.totalorder %s17, 0
    %p122 = por %p120, %p121
    %p123 = scmp.ne.s32.totalorder %s109, %s110
    %p124 = scmp.eq.s32.totalorder %s18, 1
    %p125 = por %p123, %p124
    %p127 = scmp.ne.s32.totalorder %s110, %s126
    %p128 = scmp.eq.s32.totalorder %s18, 0
    %p129 = por %p127, %p128
    %s130 = ssub.s32 %s19, %s31
    %s131 = ssub.s32 %s20, %s27
    %s132 = sor.u32 %s130, %s131
    %p133 = scmp.eq.s32.totalorder %s132, 0
    %s135 = sadd.s32 %s134, 1
    %s136 = scalar_select %p133, %s134, %s135
    %p139 = pneg %p133
    %p140 = scmp.eq.s32.totalorder %s12, 1
    %p141 = por %p139, %p140
    %p142 = scmp.ne.s32.totalorder %s134, %s137
    %p143 = scmp.eq.s32.totalorder %s12, 0
    %p144 = por %p142, %p143
    %p145 = scmp.ne.s32.totalorder %s134, %s137
    %p146 = scmp.eq.s32.totalorder %s17, 1
    %p147 = por %p145, %p146
    %p148 = scmp.ne.s32.totalorder %s137, %s138
    %p149 = scmp.eq.s32.totalorder %s17, 0
    %p150 = por %p148, %p149
    %p151 = scmp.ne.s32.totalorder %s137, %s138
    %p152 = scmp.eq.s32.totalorder %s18, 1
    %p153 = por %p151, %p152
    %p155 = scmp.ne.s32.totalorder %s138, %s154
    %p156 = scmp.eq.s32.totalorder %s18, 0
    %p157 = por %p155, %p156
    %s158 = ssub.s32 %s19, %s31
    %s159 = ssub.s32 %s20, %s27
    %s160 = sor.u32 %s158, %s159
    %p161 = scmp.eq.s32.totalorder %s160, 0
    %s163 = sadd.s32 %s162, 1
    %s164 = scalar_select %p161, %s162, %s163
    %p167 = pneg %p161
    %p168 = scmp.eq.s32.totalorder %s12, 1
    %p169 = por %p167, %p168
    %p170 = scmp.ne.s32.totalorder %s162, %s165
    %p171 = scmp.eq.s32.totalorder %s12, 0
    %p172 = por %p170, %p171
    %p173 = scmp.ne.s32.totalorder %s162, %s165
    %p174 = scmp.eq.s32.totalorder %s17, 1
    %p175 = por %p173, %p174
    %p176 = scmp.ne.s32.totalorder %s165, %s166
    %p177 = scmp.eq.s32.totalorder %s17, 0
    %p178 = por %p176, %p177
    %p179 = scmp.ne.s32.totalorder %s165, %s166
    %p180 = scmp.eq.s32.totalorder %s18, 1
    %p181 = por %p179, %p180
    %p183 = scmp.ne.s32.totalorder %s166, %s182
    %p184 = scmp.eq.s32.totalorder %s18, 0
    %p185 = por %p183, %p184
    %p186 = scmp.le.s32.totalorder 1, %s12
    %p187 = scmp.lt.s32.totalorder %s12, 3
    %p188 = pnand %p186, %p187
    %p189 = pneg %p188
    // Predicated region
    $region9: #{cae_3_bn_forward.12} parent=5 // pred_check
      _
    $region10: #{cae_3_bn_forward.12} parent=5 // pred_check_branch
      %191 = sbr.rel (%p188) target = $region12
    $region11: #{cae_3_bn_forward.12} parent=5 // pred_region
      %s192 = ssub.s32 %s12, 1
      // Predicated region
      $region13: #{cae_3_bn_forward.12} parent=11 // pred_check
        %p193 = pneg %p45
      $region14: #{cae_3_bn_forward.12} parent=11 // pred_check_branch
        %195 = sbr.rel (%p193) target = $region16
      $region15: #{cae_3_bn_forward.12} parent=11 // pred_region
        _
      $region16: #{cae_3_bn_forward.12} parent=11 // pred_fallthru
        _
      // Predicated region
      $region17: #{cae_3_bn_forward.12} parent=11 // pred_check
        %p196 = pneg %p66
      $region18: #{cae_3_bn_forward.12} parent=11 // pred_check_branch
        %198 = sbr.rel (%p196) target = $region20
      $region19: #{cae_3_bn_forward.12} parent=11 // pred_region
        _
      $region20: #{cae_3_bn_forward.12} parent=11 // pred_fallthru
        _
    $region12: #{cae_3_bn_forward.12} parent=5 // pred_fallthru
      _
    %p199 = scmp.lt.s32.totalorder %s12, 2
    // Predicated region
    $region21: #{cae_3_bn_forward.12} parent=5 // pred_check
      %p200 = pneg %p199
    $region22: #{cae_3_bn_forward.12} parent=5 // pred_check_branch
      %202 = sbr.rel (%p200) target = $region24
    $region23: #{cae_3_bn_forward.12} parent=5 // pred_region
      // Predicated region
      $region25: #{cae_3_bn_forward.12} parent=23 // pred_check
        %p203 = pneg %p88
      $region26: #{cae_3_bn_forward.12} parent=23 // pred_check_branch
        %205 = sbr.rel (%p203) target = $region28
      $region27: #{cae_3_bn_forward.12} parent=23 // pred_region
        %p206 = scmp.lt.s32.totalorder %s19, 1
        %s207 = scalar_select %p206, %s19, 1
        %p208 = scmp.lt.s32.totalorder %s20, 0
        %s209 = scalar_select %p208, %s20, 0
        %s210 = smul.addr %s207, 12
        %s211 = sadd.s32 %s209, %s210
        %s212 = smul.addr %s211, 4
        %s213 = scalar_lea.vmem %s2, %s212
      $region28: #{cae_3_bn_forward.12} parent=23 // pred_fallthru
        _
    $region24: #{cae_3_bn_forward.12} parent=5 // pred_fallthru
      _
    %p214 = scmp.le.s32.totalorder 1, %s12
    %p215 = scmp.lt.s32.totalorder %s12, 3
    %p216 = pnand %p214, %p215
    %p217 = pneg %p216
    // Predicated region
    $region29: #{cae_3_bn_forward.12} parent=5 // pred_check
      _
    $region30: #{cae_3_bn_forward.12} parent=5 // pred_check_branch
      %219 = sbr.rel (%p216) target = $region32
    $region31: #{cae_3_bn_forward.12} parent=5 // pred_region
      %s220 = ssub.s32 %s12, 1
      %p221 = pneg %p45
      %p222 = pneg %p42
      %p223 = pneg %p66
      %p224 = pneg %p63
      %p225 = scmp.lt.s32.totalorder %s21, 1
      %s226 = scalar_select %p225, %s21, 1
      %p227 = scmp.lt.s32.totalorder %s22, 0
      %s228 = scalar_select %p227, %s22, 0
      %s229 = smul.addr %s226, 12
      %s230 = sadd.s32 %s228, %s229
      %s231 = smul.addr %s230, 4
      %s232 = scalar_lea.vmem %s2, %s231
      %p233 = pneg %p94
      %p234 = pneg %p91
      %p235 = pneg %p122
      %p236 = pneg %p119
      %p237 = scmp.lt.s32.totalorder %s21, 1
      %s238 = scalar_select %p237, %s21, 1
      %p239 = scmp.lt.s32.totalorder %s22, 0
      %s240 = scalar_select %p239, %s22, 0
      %s241 = smul.addr %s238, 2
      %s242 = sadd.s32 %s240, %s241
      %s243 = smul.addr %s242, 4
      %s244 = scalar_lea.vmem %s3, %s243
      %p245 = pneg %p150
      %p246 = pneg %p147
      %p247 = scmp.lt.s32.totalorder %s21, 1
      %s248 = scalar_select %p247, %s21, 1
      %p249 = scmp.lt.s32.totalorder %s22, 0
      %s250 = scalar_select %p249, %s22, 0
      %s251 = smul.addr %s250, 2
      %s252 = smul.addr %s248, 2
      %s253 = sadd.s32 %s251, %s252
      %s254 = smul.addr %s253, 8
      %s255 = scalar_lea.vmem %s4, %s254
      %p256 = pneg %p178
      %p257 = pneg %p175
      %p258 = scmp.lt.s32.totalorder %s21, 1
      %s259 = scalar_select %p258, %s21, 1
      %p260 = scmp.lt.s32.totalorder %s22, 0
      %s261 = scalar_select %p260, %s22, 0
      %s262 = smul.addr %s261, 2
      %s263 = smul.addr %s259, 2
      %s264 = sadd.s32 %s262, %s263
      %s265 = smul.addr %s264, 8
      %s266 = scalar_lea.vmem %s5, %s265
      %p267 = scmp.lt.s32.totalorder %s21, 1
      %s268 = scalar_select %p267, %s21, 1
      %p269 = scmp.lt.s32.totalorder %s22, 0
      %s270 = scalar_select %p269, %s22, 0
      %s271 = smul.addr %s268, 12
      %s272 = sadd.s32 %s270, %s271
      %s273 = smul.addr %s272, 4
      %s274 = scalar_lea.vmem %s2, %s273
      %p275 = scmp.lt.s32.totalorder %s21, 1
      %s276 = scalar_select %p275, %s21, 1
      %p277 = scmp.lt.s32.totalorder %s22, 0
      %s278 = scalar_select %p277, %s22, 0
      %s279 = smul.addr %s276, 2
      %s280 = sadd.s32 %s278, %s279
      %s281 = smul.addr %s280, 4
      %s282 = scalar_lea.vmem %s3, %s281
      %p283 = scmp.lt.s32.totalorder %s21, 1
      %s284 = scalar_select %p283, %s21, 1
      %p285 = scmp.lt.s32.totalorder %s22, 0
      %s286 = scalar_select %p285, %s22, 0
      %s287 = smul.addr %s286, 2
      %s288 = smul.addr %s284, 2
      %s289 = sadd.s32 %s287, %s288
      %s290 = smul.addr %s289, 8
      %s291 = scalar_lea.vmem %s4, %s290
      %p292 = scmp.lt.s32.totalorder %s21, 1
      %s293 = scalar_select %p292, %s21, 1
      %p294 = scmp.lt.s32.totalorder %s22, 0
      %s295 = scalar_select %p294, %s22, 0
      %s296 = smul.addr %s295, 2
      %s297 = smul.addr %s293, 2
      %s298 = sadd.s32 %s296, %s297
      %s299 = smul.addr %s298, 8
      %s300 = scalar_lea.vmem %s5, %s299
      %v302 = vld [vmem:[%s0] sm:$0xf]
      %v303 = vld [vmem:[%s0 + $0x4] sm:$0xf]
      %v304 = vld [vmem:[%s274] sm:$0xf]
      %v305 = vld [vmem:[%s274 + $0x4] sm:$0xf]
      %v306 = vld [vmem:[%s274 + $0x8] sm:$0xf]
      %v307 = vld [vmem:[%s274 + $0xc] sm:$0xf]
      %v308 = vld [vmem:[%s274 + $0x10] sm:$0xf]
      %v309 = vld [vmem:[%s274 + $0x14] sm:$0xf]
      %v310 = vld [vmem:[%s274 + $0x18] sm:$0xf]
      %v311 = vld [vmem:[%s274 + $0x1c] sm:$0xf]
      %v312 = vld [vmem:[%s274 + $0x20] sm:$0xf]
      %v313 = vld [vmem:[%s274 + $0x24] sm:$0xf]
      %v314 = vld [vmem:[%s274 + $0x28] sm:$0xf]
      %v315 = vld [vmem:[%s274 + $0x2c] sm:$0xf]
      %v316 = vld [vmem:[%s1] sm:$0xff]
      %v317 = vld [vmem:[%s1 + $0x8] sm:$0xff]
      %319 = vset.pattern.permute.xlu0 0
      %320 = vperm.xlu0 %319, %v316
      %v321 = vpop.permute.xlu0 %320
      %324 = vset.pattern.permute.xlu0 0
      %325 = vperm.xlu0 %324, %v317
      %v326 = vpop.permute.xlu0 %325
      %v330 = vunpack.c.l.b16 %v302
      %v331 = vunpack.c.l.b16 %v303
      %v332 = vpack.c.b16 %v331, %v330
      %v345 = vunpack.c.l.b16 %v304
      %v346 = vunpack.c.l.b16 %v305
      %v347 = vunpack.c.l.b16 %v306
      %v348 = vunpack.c.l.b16 %v307
      %v349 = vunpack.c.l.b16 %v308
      %v350 = vunpack.c.l.b16 %v309
      %v351 = vunpack.c.l.b16 %v310
      %v352 = vunpack.c.l.b16 %v311
      %v353 = vunpack.c.l.b16 %v312
      %v354 = vunpack.c.l.b16 %v313
      %v355 = vunpack.c.l.b16 %v314
      %v356 = vunpack.c.l.b16 %v315
      %v357 = vpack.c.b16 %v346, %v345
      %v358 = vpack.c.b16 %v348, %v347
      %v359 = vpack.c.b16 %v350, %v349
      %v360 = vpack.c.b16 %v352, %v351
      %v361 = vpack.c.b16 %v354, %v353
      %v362 = vpack.c.b16 %v356, %v355
      %vm369 = vcmask 785408
      %v371 = vsel %vm369, %v332, 0
      %373 = vmatprep.subr.bf16.mxu0 0
      %374 = vmatpush1.bf16.msra.mxu0 %v357
      %375 = vmatprep.subr.bf16.mxu0 0
      %376 = vmatpush1.bf16.msra.mxu0 %v358
      %377 = vmatprep.subr.bf16.mxu0 0
      %378 = vmatpush1.bf16.msra.mxu0 %v359
      %379 = vmatprep.subr.bf16.mxu0 0
      %380 = vmatpush1.bf16.msra.mxu0 %v360
      %381 = vmatprep.subr.bf16.mxu0 0
      %382 = vmatpush1.bf16.msra.mxu0 %v361
      %383 = vmatprep.subr.bf16.mxu0 0
      %384 = vmatpush1.bf16.msra.mxu0 %v362
      %385 = vmatprep.subr.bf16.mxu0 0
      %386 = vmatpush1.bf16.msra.mxu0 0
      %387 = vmatprep.subr.bf16.mxu0 0
      %388 = vmatpush1.bf16.msra.mxu0 0
      %389 = vmatprep.subr.bf16.mxu0 0
      %390 = vmatpush1.bf16.msra.mxu0 0
      %391 = vmatprep.subr.bf16.mxu0 0
      %392 = vmatpush1.bf16.msra.mxu0 0
      %393 = vmatprep.subr.bf16.mxu0 0
      %394 = vmatpush1.bf16.msra.mxu0 0
      %395 = vmatprep.subr.bf16.mxu0 0
      %396 = vmatpush1.bf16.msra.mxu0 0
      %397 = vmatprep.subr.bf16.mxu0 0
      %398 = vmatpush1.bf16.msra.mxu0 0
      %399 = vmatprep.subr.bf16.mxu0 0
      %400 = vmatpush1.bf16.msra.mxu0 0
      %401 = vmatprep.subr.bf16.mxu0 0
      %402 = vmatpush1.bf16.msra.mxu0 0
      %403 = vmatprep.subr.bf16.mxu0 0
      %404 = vmatpush1.bf16.msra.mxu0 0
      %405 = vmatprep.mubr.bf16.mxu0 0
      %406 = vmatmul.mubr.bf16.gmra.mrb[0].mxu0 %v371
      %v407 = vpop.f32.mrb[0].mxu0
      %v408 = vadd.f32 %v321, %v407
      %v409 = vpop.f32.mrb[0].mxu0
      %v410 = vpop.f32.mrb[0].mxu0
      %v411 = vadd.f32 %v326, %v410
      %v412 = vpop.f32.mrb[0].mxu0
      %413 = vdwg.mxu0
      %vm414 = vcmp.ge.f32.partialorder %v408, 0.0
      %vm415 = vcmp.ge.f32.partialorder %v411, 0.0
      %v416 = vmul.f32 %v408, 0.01
      %v417 = vmul.f32 %v411, 0.01
      %v418 = vsel %vm414, %v408, %v416
      %v419 = vsel %vm415, %v411, %v417
      %v420 = vpack.c.bf16 %v419, %v418
      %v422 = vunpack.c.l.b16 %v420
      %v423 = vunpack.c.h.b16 %v420
      %v424 = vpack.c.b16 %v422, %v422
      %v425 = vpack.c.b16 %v423, %v423
      %vm428 = vcmask 52224
      %429 = vst.msk [vmem:[%s282] sm:$0xf] %vm428, %v424
      %430 = vst.msk [vmem:[%s282 + $0x4] sm:$0xf] %vm428, %v425
      %vm431 = vcmask 56320
      %v432 = vsel %vm431, %v418, 0.0
      %433 = vadd.xlane.f32.xlu0 %v432
      %v434 = vpop.xlane.xlu0 %433
      %v435 = vsel %vm431, %v419, 0.0
      %436 = vadd.xlane.f32.xlu0 %v435
      %v437 = vpop.xlane.xlu0 %436
      %vm438 = vcmask 7168
      %439 = vst.msk [vmem:[%s291] sm:$0xff] %vm438, %v434
      %440 = vst.msk [vmem:[%s291 + $0x8] sm:$0xff] %vm438, %v437
      %v441 = vmul.f32 %v418, %v418
      %v442 = vmul.f32 %v419, %v419
      %v443 = vsel %vm431, %v441, 0.0
      %444 = vadd.xlane.f32.xlu0 %v443
      %v445 = vpop.xlane.xlu0 %444
      %v446 = vsel %vm431, %v442, 0.0
      %447 = vadd.xlane.f32.xlu0 %v446
      %v448 = vpop.xlane.xlu0 %447
      %449 = vst.msk [vmem:[%s300] sm:$0xff] %vm438, %v445
      %450 = vst.msk [vmem:[%s300 + $0x8] sm:$0xff] %vm438, %v448
      %p451 = scmp.lt.s32.totalorder %s21, 1
      %s452 = scalar_select %p451, %s21, 1
      %p453 = scmp.lt.s32.totalorder %s22, 0
      %s454 = scalar_select %p453, %s22, 0
      %s455 = smul.addr %s452, 2
      %s456 = sadd.s32 %s454, %s455
      %s457 = smul.addr %s456, 4
      %s458 = scalar_lea.vmem %s3, %s457
      %p459 = scmp.lt.s32.totalorder %s21, 1
      %s460 = scalar_select %p459, %s21, 1
      %p461 = scmp.lt.s32.totalorder %s22, 0
      %s462 = scalar_select %p461, %s22, 0
      %s463 = smul.addr %s462, 2
      %s464 = smul.addr %s460, 2
      %s465 = sadd.s32 %s463, %s464
      %s466 = smul.addr %s465, 8
      %s467 = scalar_lea.vmem %s4, %s466
      %p468 = scmp.lt.s32.totalorder %s21, 1
      %s469 = scalar_select %p468, %s21, 1
      %p470 = scmp.lt.s32.totalorder %s22, 0
      %s471 = scalar_select %p470, %s22, 0
      %s472 = smul.addr %s471, 2
      %s473 = smul.addr %s469, 2
      %s474 = sadd.s32 %s472, %s473
      %s475 = smul.addr %s474, 8
      %s476 = scalar_lea.vmem %s5, %s475
      // Predicated region
      $region33: #{cae_3_bn_forward.12} parent=31 // pred_check
        %p477 = pneg %p119
      $region34: #{cae_3_bn_forward.12} parent=31 // pred_check_branch
        %479 = sbr.rel (%p477) target = $region36
      $region35: #{cae_3_bn_forward.12} parent=31 // pred_region
        _
      $region36: #{cae_3_bn_forward.12} parent=31 // pred_fallthru
        _
      // Predicated region
      $region37: #{cae_3_bn_forward.12} parent=31 // pred_check
        %p480 = pneg %p147
      $region38: #{cae_3_bn_forward.12} parent=31 // pred_check_branch
        %482 = sbr.rel (%p480) target = $region40
      $region39: #{cae_3_bn_forward.12} parent=31 // pred_region
        _
      $region40: #{cae_3_bn_forward.12} parent=31 // pred_fallthru
        _
      // Predicated region
      $region41: #{cae_3_bn_forward.12} parent=31 // pred_check
        %p483 = pneg %p175
      $region42: #{cae_3_bn_forward.12} parent=31 // pred_check_branch
        %485 = sbr.rel (%p483) target = $region44
      $region43: #{cae_3_bn_forward.12} parent=31 // pred_region
        _
      $region44: #{cae_3_bn_forward.12} parent=31 // pred_fallthru
        _
    $region32: #{cae_3_bn_forward.12} parent=5 // pred_fallthru
      _
    %p486 = scmp.le.s32.totalorder 2, %s12
    // Predicated region
    $region45: #{cae_3_bn_forward.12} parent=5 // pred_check
      %p487 = pneg %p486
    $region46: #{cae_3_bn_forward.12} parent=5 // pred_check_branch
      %489 = sbr.rel (%p487) target = $region48
    $region47: #{cae_3_bn_forward.12} parent=5 // pred_region
      %s490 = ssub.s32 %s12, 2
      // Predicated region
      $region49: #{cae_3_bn_forward.12} parent=47 // pred_check
        %p491 = pneg %p125
      $region50: #{cae_3_bn_forward.12} parent=47 // pred_check_branch
        %493 = sbr.rel (%p491) target = $region52
      $region51: #{cae_3_bn_forward.12} parent=47 // pred_region
        %p494 = scmp.lt.s32.totalorder %s23, 1
        %s495 = scalar_select %p494, %s23, 1
        %p496 = scmp.lt.s32.totalorder %s24, 0
        %s497 = scalar_select %p496, %s24, 0
        %s498 = smul.addr %s495, 2
        %s499 = sadd.s32 %s497, %s498
        %s500 = smul.addr %s499, 4
        %s501 = scalar_lea.vmem %s3, %s500
      $region52: #{cae_3_bn_forward.12} parent=47 // pred_fallthru
        _
      // Predicated region
      $region53: #{cae_3_bn_forward.12} parent=47 // pred_check
        %p502 = pneg %p153
      $region54: #{cae_3_bn_forward.12} parent=47 // pred_check_branch
        %504 = sbr.rel (%p502) target = $region56
      $region55: #{cae_3_bn_forward.12} parent=47 // pred_region
        %p505 = scmp.lt.s32.totalorder %s23, 1
        %s506 = scalar_select %p505, %s23, 1
        %p507 = scmp.lt.s32.totalorder %s24, 0
        %s508 = scalar_select %p507, %s24, 0
        %s509 = smul.addr %s508, 2
        %s510 = smul.addr %s506, 2
        %s511 = sadd.s32 %s509, %s510
        %s512 = smul.addr %s511, 8
        %s513 = scalar_lea.vmem %s4, %s512
      $region56: #{cae_3_bn_forward.12} parent=47 // pred_fallthru
        _
      // Predicated region
      $region57: #{cae_3_bn_forward.12} parent=47 // pred_check
        %p514 = pneg %p181
      $region58: #{cae_3_bn_forward.12} parent=47 // pred_check_branch
        %516 = sbr.rel (%p514) target = $region60
      $region59: #{cae_3_bn_forward.12} parent=47 // pred_region
        %p517 = scmp.lt.s32.totalorder %s23, 1
        %s518 = scalar_select %p517, %s23, 1
        %p519 = scmp.lt.s32.totalorder %s24, 0
        %s520 = scalar_select %p519, %s24, 0
        %s521 = smul.addr %s520, 2
        %s522 = smul.addr %s518, 2
        %s523 = sadd.s32 %s521, %s522
        %s524 = smul.addr %s523, 8
        %s525 = scalar_lea.vmem %s5, %s524
      $region60: #{cae_3_bn_forward.12} parent=47 // pred_fallthru
        _
    $region48: #{cae_3_bn_forward.12} parent=5 // pred_fallthru
      _
  $region6: #{cae_3_bn_forward.12} parent=0 // loop_footer
    %s16 = sadd.s32 1, %s12
  $region7: #{cae_3_bn_forward.12} parent=0 // loop_footer_branch
    %11 = sbr.rel target = $region3
  $region8: #{cae_3_bn_forward.12} parent=0 // loop_exit
    _

// kernel: cae_3_bn_forward.13
$region0: #{cae_3_bn_forward.13}
  #allocation0 [shape = 'u32[]', space=smem, size = 0x4, offset = 0x4, fixed_abs, tag = 'smem constant byte address 0x4 - core index']
  #allocation1 [shape = 'u32[144,128]{1,0:T(1,128)}', space=vmem, size = 0x12000, scoped, tag = 'internal scratch']
  %s0 = inlined_call_operand.vmem [shape: bf16[8,48], index: 0, kind: input, shape index: {}]
  %s1 = inlined_call_operand.vmem [shape: f32[8,1], index: 1, kind: input, shape index: {}]
  %s2 = inlined_call_operand.vmem [shape: bf16[2,48,16], index: 2, kind: input, shape index: {}]
  %s3 = inlined_call_operand.vmem [shape: bf16[2,8,16], index: 3, kind: output, shape index: {0}]
  %s4 = inlined_call_operand.vmem [shape: f32[2,1,8,1], index: 4, kind: output, shape index: {1}]
  %s5 = inlined_call_operand.vmem [shape: f32[2,1,8,1], index: 5, kind: output, shape index: {2}]
  %6 = xla_tuple %s3, %s4, %s5
  %s7 = sld [smem:[#allocation0]]
  $region61: #{cae_3_bn_forward.13} parent=0
    _
  %s9 = ssub.s32 1, %s7
  %s10 = scalar_select 0, %s9, %s7
  loop: start=0, step=1, limit=4
  $region2: #{cae_3_bn_forward.13} parent=0 // loop_pre_header
    _
  $region3: #{cae_3_bn_forward.13} parent=0 // loop_header
    %s12 = sphi 0, %s16
    %p13 = scmp.ge.s32.totalorder %s12, 4
    %s19 = sphi 0, %s31
    %s20 = sphi 0, %s27
    %s21 = sphi 0, %s19
    %s22 = sphi 0, %s20
    %s23 = sphi 0, %s21
    %s24 = sphi 0, %s22
    %s32 = sphi 0, %s32
    %s34 = sphi 0, %s32
    %s35 = sphi 0, %s34
    %s49 = sphi 0, %s35
    %s53 = sphi 0, %s53
    %s55 = sphi 0, %s53
    %s56 = sphi 0, %s55
    %s70 = sphi 0, %s56
    %s78 = sphi 0, %s80
    %s81 = sphi 0, %s78
    %s82 = sphi 0, %s81
    %s98 = sphi 0, %s82
    %s106 = sphi 0, %s108
    %s109 = sphi 0, %s106
    %s110 = sphi 0, %s109
    %s126 = sphi 0, %s110
    %s134 = sphi 0, %s136
    %s137 = sphi 0, %s134
    %s138 = sphi 0, %s137
    %s154 = sphi 0, %s138
    %s162 = sphi 0, %s164
    %s165 = sphi 0, %s162
    %s166 = sphi 0, %s165
    %s182 = sphi 0, %s166
  $region4: #{cae_3_bn_forward.13} parent=0 // loop_header_branch
    %15 = sbr.rel (%p13) target = $region8
  $region5: #{cae_3_bn_forward.13} parent=0 // loop_body
    %s17 = ssub.s32 %s12, 1
    %s18 = ssub.s32 %s12, 2
    %s25 = sadd.s32 1, %s20
    %p26 = scmp.ge.s32.totalorder %s25, 1
    %s27 = scalar_select %p26, 0, %s25
    %s28 = sadd.s32 1, %s19
    %s29 = scalar_select %p26, %s28, %s19
    %p30 = scmp.ge.s32.totalorder %s29, 2
    %s31 = scalar_select %p30, 0, %s29
    %s33 = sadd.s32 %s32, 1
    %p36 = scmp.eq.s32.totalorder %s12, 1
    %p37 = scmp.ne.s32.totalorder %s32, %s34
    %p38 = scmp.eq.s32.totalorder %s12, 0
    %p39 = por %p37, %p38
    %p40 = scmp.ne.s32.totalorder %s32, %s34
    %p41 = scmp.eq.s32.totalorder %s17, 1
    %p42 = por %p40, %p41
    %p43 = scmp.ne.s32.totalorder %s34, %s35
    %p44 = scmp.eq.s32.totalorder %s17, 0
    %p45 = por %p43, %p44
    %p46 = scmp.ne.s32.totalorder %s34, %s35
    %p47 = scmp.eq.s32.totalorder %s18, 1
    %p48 = por %p46, %p47
    %p50 = scmp.ne.s32.totalorder %s35, %s49
    %p51 = scmp.eq.s32.totalorder %s18, 0
    %p52 = por %p50, %p51
    %s54 = sadd.s32 %s53, 1
    %p57 = scmp.eq.s32.totalorder %s12, 1
    %p58 = scmp.ne.s32.totalorder %s53, %s55
    %p59 = scmp.eq.s32.totalorder %s12, 0
    %p60 = por %p58, %p59
    %p61 = scmp.ne.s32.totalorder %s53, %s55
    %p62 = scmp.eq.s32.totalorder %s17, 1
    %p63 = por %p61, %p62
    %p64 = scmp.ne.s32.totalorder %s55, %s56
    %p65 = scmp.eq.s32.totalorder %s17, 0
    %p66 = por %p64, %p65
    %p67 = scmp.ne.s32.totalorder %s55, %s56
    %p68 = scmp.eq.s32.totalorder %s18, 1
    %p69 = por %p67, %p68
    %p71 = scmp.ne.s32.totalorder %s56, %s70
    %p72 = scmp.eq.s32.totalorder %s18, 0
    %p73 = por %p71, %p72
    %s74 = ssub.s32 %s19, %s31
    %s75 = ssub.s32 %s20, %s27
    %s76 = sor.u32 %s74, %s75
    %p77 = scmp.eq.s32.totalorder %s76, 0
    %s79 = sadd.s32 %s78, 1
    %s80 = scalar_select %p77, %s78, %s79
    %p83 = pneg %p77
    %p84 = scmp.eq.s32.totalorder %s12, 1
    %p85 = por %p83, %p84
    %p86 = scmp.ne.s32.totalorder %s78, %s81
    %p87 = scmp.eq.s32.totalorder %s12, 0
    %p88 = por %p86, %p87
    %p89 = scmp.ne.s32.totalorder %s78, %s81
    %p90 = scmp.eq.s32.totalorder %s17, 1
    %p91 = por %p89, %p90
    %p92 = scmp.ne.s32.totalorder %s81, %s82
    %p93 = scmp.eq.s32.totalorder %s17, 0
    %p94 = por %p92, %p93
    %p95 = scmp.ne.s32.totalorder %s81, %s82
    %p96 = scmp.eq.s32.totalorder %s18, 1
    %p97 = por %p95, %p96
    %p99 = scmp.ne.s32.totalorder %s82, %s98
    %p100 = scmp.eq.s32.totalorder %s18, 0
    %p101 = por %p99, %p100
    %s102 = ssub.s32 %s19, %s31
    %s103 = ssub.s32 %s20, %s27
    %s104 = sor.u32 %s102, %s103
    %p105 = scmp.eq.s32.totalorder %s104, 0
    %s107 = sadd.s32 %s106, 1
    %s108 = scalar_select %p105, %s106, %s107
    %p111 = pneg %p105
    %p112 = scmp.eq.s32.totalorder %s12, 1
    %p113 = por %p111, %p112
    %p114 = scmp.ne.s32.totalorder %s106, %s109
    %p115 = scmp.eq.s32.totalorder %s12, 0
    %p116 = por %p114, %p115
    %p117 = scmp.ne.s32.totalorder %s106, %s109
    %p118 = scmp.eq.s32.totalorder %s17, 1
    %p119 = por %p117, %p118
    %p120 = scmp.ne.s32.totalorder %s109, %s110
    %p121 = scmp.eq.s32.totalorder %s17, 0
    %p122 = por %p120, %p121
    %p123 = scmp.ne.s32.totalorder %s109, %s110
    %p124 = scmp.eq.s32.totalorder %s18, 1
    %p125 = por %p123, %p124
    %p127 = scmp.ne.s32.totalorder %s110, %s126
    %p128 = scmp.eq.s32.totalorder %s18, 0
    %p129 = por %p127, %p128
    %s130 = ssub.s32 %s19, %s31
    %s131 = ssub.s32 %s20, %s27
    %s132 = sor.u32 %s130, %s131
    %p133 = scmp.eq.s32.totalorder %s132, 0
    %s135 = sadd.s32 %s134, 1
    %s136 = scalar_select %p133, %s134, %s135
    %p139 = pneg %p133
    %p140 = scmp.eq.s32.totalorder %s12, 1
    %p141 = por %p139, %p140
    %p142 = scmp.ne.s32.totalorder %s134, %s137
    %p143 = scmp.eq.s32.totalorder %s12, 0
    %p144 = por %p142, %p143
    %p145 = scmp.ne.s32.totalorder %s134, %s137
    %p146 = scmp.eq.s32.totalorder %s17, 1
    %p147 = por %p145, %p146
    %p148 = scmp.ne.s32.totalorder %s137, %s138
    %p149 = scmp.eq.s32.totalorder %s17, 0
    %p150 = por %p148, %p149
    %p151 = scmp.ne.s32.totalorder %s137, %s138
    %p152 = scmp.eq.s32.totalorder %s18, 1
    %p153 = por %p151, %p152
    %p155 = scmp.ne.s32.totalorder %s138, %s154
    %p156 = scmp.eq.s32.totalorder %s18, 0
    %p157 = por %p155, %p156
    %s158 = ssub.s32 %s19, %s31
    %s159 = ssub.s32 %s20, %s27
    %s160 = sor.u32 %s158, %s159
    %p161 = scmp.eq.s32.totalorder %s160, 0
    %s163 = sadd.s32 %s162, 1
    %s164 = scalar_select %p161, %s162, %s163
    %p167 = pneg %p161
    %p168 = scmp.eq.s32.totalorder %s12, 1
    %p169 = por %p167, %p168
    %p170 = scmp.ne.s32.totalorder %s162, %s165
    %p171 = scmp.eq.s32.totalorder %s12, 0
    %p172 = por %p170, %p171
    %p173 = scmp.ne.s32.totalorder %s162, %s165
    %p174 = scmp.eq.s32.totalorder %s17, 1
    %p175 = por %p173, %p174
    %p176 = scmp.ne.s32.totalorder %s165, %s166
    %p177 = scmp.eq.s32.totalorder %s17, 0
    %p178 = por %p176, %p177
    %p179 = scmp.ne.s32.totalorder %s165, %s166
    %p180 = scmp.eq.s32.totalorder %s18, 1
    %p181 = por %p179, %p180
    %p183 = scmp.ne.s32.totalorder %s166, %s182
    %p184 = scmp.eq.s32.totalorder %s18, 0
    %p185 = por %p183, %p184
    %p186 = scmp.le.s32.totalorder 1, %s12
    %p187 = scmp.lt.s32.totalorder %s12, 3
    %p188 = pnand %p186, %p187
    %p189 = pneg %p188
    // Predicated region
    $region9: #{cae_3_bn_forward.13} parent=5 // pred_check
      _
    $region10: #{cae_3_bn_forward.13} parent=5 // pred_check_branch
      %191 = sbr.rel (%p188) target = $region12
    $region11: #{cae_3_bn_forward.13} parent=5 // pred_region
      %s192 = ssub.s32 %s12, 1
      // Predicated region
      $region13: #{cae_3_bn_forward.13} parent=11 // pred_check
        %p193 = pneg %p45
      $region14: #{cae_3_bn_forward.13} parent=11 // pred_check_branch
        %195 = sbr.rel (%p193) target = $region16
      $region15: #{cae_3_bn_forward.13} parent=11 // pred_region
        _
      $region16: #{cae_3_bn_forward.13} parent=11 // pred_fallthru
        _
      // Predicated region
      $region17: #{cae_3_bn_forward.13} parent=11 // pred_check
        %p196 = pneg %p66
      $region18: #{cae_3_bn_forward.13} parent=11 // pred_check_branch
        %198 = sbr.rel (%p196) target = $region20
      $region19: #{cae_3_bn_forward.13} parent=11 // pred_region
        _
      $region20: #{cae_3_bn_forward.13} parent=11 // pred_fallthru
        _
    $region12: #{cae_3_bn_forward.13} parent=5 // pred_fallthru
      _
    %p199 = scmp.lt.s32.totalorder %s12, 2
    // Predicated region
    $region21: #{cae_3_bn_forward.13} parent=5 // pred_check
      %p200 = pneg %p199
    $region22: #{cae_3_bn_forward.13} parent=5 // pred_check_branch
      %202 = sbr.rel (%p200) target = $region24
    $region23: #{cae_3_bn_forward.13} parent=5 // pred_region
      // Predicated region
      $region25: #{cae_3_bn_forward.13} parent=23 // pred_check
        %p203 = pneg %p88
      $region26: #{cae_3_bn_forward.13} parent=23 // pred_check_branch
        %205 = sbr.rel (%p203) target = $region28
      $region27: #{cae_3_bn_forward.13} parent=23 // pred_region
        %p206 = scmp.lt.s32.totalorder %s19, 1
        %s207 = scalar_select %p206, %s19, 1
        %p208 = scmp.lt.s32.totalorder %s20, 0
        %s209 = scalar_select %p208, %s20, 0
        %s210 = smul.addr %s207, 6
        %s211 = sadd.s32 %s209, %s210
        %s212 = smul.addr %s211, 4
        %s213 = scalar_lea.vmem %s2, %s212
      $region28: #{cae_3_bn_forward.13} parent=23 // pred_fallthru
        _
    $region24: #{cae_3_bn_forward.13} parent=5 // pred_fallthru
      _
    %p214 = scmp.le.s32.totalorder 1, %s12
    %p215 = scmp.lt.s32.totalorder %s12, 3
    %p216 = pnand %p214, %p215
    %p217 = pneg %p216
    // Predicated region
    $region29: #{cae_3_bn_forward.13} parent=5 // pred_check
      _
    $region30: #{cae_3_bn_forward.13} parent=5 // pred_check_branch
      %219 = sbr.rel (%p216) target = $region32
    $region31: #{cae_3_bn_forward.13} parent=5 // pred_region
      %s220 = ssub.s32 %s12, 1
      %p221 = pneg %p45
      %p222 = pneg %p42
      %p223 = pneg %p66
      %p224 = pneg %p63
      %p225 = scmp.lt.s32.totalorder %s21, 1
      %s226 = scalar_select %p225, %s21, 1
      %p227 = scmp.lt.s32.totalorder %s22, 0
      %s228 = scalar_select %p227, %s22, 0
      %s229 = smul.addr %s226, 6
      %s230 = sadd.s32 %s228, %s229
      %s231 = smul.addr %s230, 4
      %s232 = scalar_lea.vmem %s2, %s231
      %p233 = pneg %p94
      %p234 = pneg %p91
      %p235 = pneg %p122
      %p236 = pneg %p119
      %p237 = scmp.lt.s32.totalorder %s21, 1
      %s238 = scalar_select %p237, %s21, 1
      %p239 = scmp.lt.s32.totalorder %s22, 0
      %s240 = scalar_select %p239, %s22, 0
      %s241 = sadd.s32 %s240, %s238
      %s242 = smul.addr %s241, 4
      %s243 = scalar_lea.vmem %s3, %s242
      %p244 = pneg %p150
      %p245 = pneg %p147
      %p246 = scmp.lt.s32.totalorder %s21, 1
      %s247 = scalar_select %p246, %s21, 1
      %p248 = scmp.lt.s32.totalorder %s22, 0
      %s249 = scalar_select %p248, %s22, 0
      %s250 = sadd.s32 %s249, %s247
      %s251 = smul.addr %s250, 8
      %s252 = scalar_lea.vmem %s4, %s251
      %p253 = pneg %p178
      %p254 = pneg %p175
      %p255 = scmp.lt.s32.totalorder %s21, 1
      %s256 = scalar_select %p255, %s21, 1
      %p257 = scmp.lt.s32.totalorder %s22, 0
      %s258 = scalar_select %p257, %s22, 0
      %s259 = sadd.s32 %s258, %s256
      %s260 = smul.addr %s259, 8
      %s261 = scalar_lea.vmem %s5, %s260
      %p262 = scmp.lt.s32.totalorder %s21, 1
      %s263 = scalar_select %p262, %s21, 1
      %p264 = scmp.lt.s32.totalorder %s22, 0
      %s265 = scalar_select %p264, %s22, 0
      %s266 = smul.addr %s263, 6
      %s267 = sadd.s32 %s265, %s266
      %s268 = smul.addr %s267, 4
      %s269 = scalar_lea.vmem %s2, %s268
      %p270 = scmp.lt.s32.totalorder %s21, 1
      %s271 = scalar_select %p270, %s21, 1
      %p272 = scmp.lt.s32.totalorder %s22, 0
      %s273 = scalar_select %p272, %s22, 0
      %s274 = sadd.s32 %s273, %s271
      %s275 = smul.addr %s274, 4
      %s276 = scalar_lea.vmem %s3, %s275
      %p277 = scmp.lt.s32.totalorder %s21, 1
      %s278 = scalar_select %p277, %s21, 1
      %p279 = scmp.lt.s32.totalorder %s22, 0
      %s280 = scalar_select %p279, %s22, 0
      %s281 = sadd.s32 %s280, %s278
      %s282 = smul.addr %s281, 8
      %s283 = scalar_lea.vmem %s4, %s282
      %p284 = scmp.lt.s32.totalorder %s21, 1
      %s285 = scalar_select %p284, %s21, 1
      %p286 = scmp.lt.s32.totalorder %s22, 0
      %s287 = scalar_select %p286, %s22, 0
      %s288 = sadd.s32 %s287, %s285
      %s289 = smul.addr %s288, 8
      %s290 = scalar_lea.vmem %s5, %s289
      %v292 = vld [vmem:[%s0] sm:$0xf]
      %v293 = vld [vmem:[%s269] sm:$0xf]
      %v294 = vld [vmem:[%s269 + $0x4] sm:$0xf]
      %v295 = vld [vmem:[%s269 + $0x8] sm:$0xf]
      %v296 = vld [vmem:[%s269 + $0xc] sm:$0xf]
      %v297 = vld [vmem:[%s269 + $0x10] sm:$0xf]
      %v298 = vld [vmem:[%s269 + $0x14] sm:$0xf]
      %v299 = vld [vmem:[%s1] sm:$0xff]
      %301 = vset.pattern.permute.xlu0 0
      %302 = vperm.xlu0 %301, %v299
      %v303 = vpop.permute.xlu0 %302
      %v311 = vunpack.c.l.b16 %v293
      %v312 = vunpack.c.l.b16 %v294
      %v313 = vunpack.c.l.b16 %v295
      %v314 = vunpack.c.l.b16 %v296
      %v315 = vunpack.c.l.b16 %v297
      %v316 = vunpack.c.l.b16 %v298
      %v317 = vpack.c.b16 %v312, %v311
      %v318 = vpack.c.b16 %v314, %v313
      %v319 = vpack.c.b16 %v316, %v315
      %vm323 = vcmask 392192
      %v325 = vsel %vm323, %v292, 0
      %327 = vmatprep.subr.bf16.mxu0 0
      %328 = vmatpush1.bf16.msra.mxu0 %v317
      %329 = vmatprep.subr.bf16.mxu0 0
      %330 = vmatpush1.bf16.msra.mxu0 %v318
      %331 = vmatprep.subr.bf16.mxu0 0
      %332 = vmatpush1.bf16.msra.mxu0 %v319
      %333 = vmatprep.subr.bf16.mxu0 0
      %334 = vmatpush1.bf16.msra.mxu0 0
      %335 = vmatprep.subr.bf16.mxu0 0
      %336 = vmatpush1.bf16.msra.mxu0 0
      %337 = vmatprep.subr.bf16.mxu0 0
      %338 = vmatpush1.bf16.msra.mxu0 0
      %339 = vmatprep.subr.bf16.mxu0 0
      %340 = vmatpush1.bf16.msra.mxu0 0
      %341 = vmatprep.subr.bf16.mxu0 0
      %342 = vmatpush1.bf16.msra.mxu0 0
      %343 = vmatprep.subr.bf16.mxu0 0
      %344 = vmatpush1.bf16.msra.mxu0 0
      %345 = vmatprep.subr.bf16.mxu0 0
      %346 = vmatpush1.bf16.msra.mxu0 0
      %347 = vmatprep.subr.bf16.mxu0 0
      %348 = vmatpush1.bf16.msra.mxu0 0
      %349 = vmatprep.subr.bf16.mxu0 0
      %350 = vmatpush1.bf16.msra.mxu0 0
      %351 = vmatprep.subr.bf16.mxu0 0
      %352 = vmatpush1.bf16.msra.mxu0 0
      %353 = vmatprep.subr.bf16.mxu0 0
      %354 = vmatpush1.bf16.msra.mxu0 0
      %355 = vmatprep.subr.bf16.mxu0 0
      %356 = vmatpush1.bf16.msra.mxu0 0
      %357 = vmatprep.subr.bf16.mxu0 0
      %358 = vmatpush1.bf16.msra.mxu0 0
      %359 = vmatprep.mubr.bf16.mxu0 0
      %360 = vmatmul.mubr.bf16.gmra.mrb[0].mxu0 %v325
      %v361 = vpop.f32.mrb[0].mxu0
      %v362 = vadd.f32 %v303, %v361
      %v363 = vpop.f32.mrb[0].mxu0
      %v364 = vpop.f32.mrb[0].mxu0
      %v365 = vpop.f32.mrb[0].mxu0
      %366 = vdwg.mxu0
      %vm367 = vcmp.ge.f32.partialorder %v362, 0.0
      %v368 = vmul.f32 %v362, 0.01
      %v369 = vsel %vm367, %v362, %v368
      %v370 = vpack.c.bf16 %v369, %v369
      %vm371 = vcmask 125952
      %372 = vst.msk [vmem:[%s276] sm:$0xf] %vm371, %v370
      %vm373 = vcmask 130048
      %v374 = vsel %vm373, %v369, 0.0
      %375 = vadd.xlane.f32.xlu0 %v374
      %v376 = vpop.xlane.xlu0 %375
      %vm377 = vcmask 7168
      %378 = vst.msk [vmem:[%s283] sm:$0xff] %vm377, %v376
      %v379 = vmul.f32 %v369, %v369
      %v380 = vsel %vm373, %v379, 0.0
      %381 = vadd.xlane.f32.xlu0 %v380
      %v382 = vpop.xlane.xlu0 %381
      %383 = vst.msk [vmem:[%s290] sm:$0xff] %vm377, %v382
      %p384 = scmp.lt.s32.totalorder %s21, 1
      %s385 = scalar_select %p384, %s21, 1
      %p386 = scmp.lt.s32.totalorder %s22, 0
      %s387 = scalar_select %p386, %s22, 0
      %s388 = sadd.s32 %s387, %s385
      %s389 = smul.addr %s388, 4
      %s390 = scalar_lea.vmem %s3, %s389
      %p391 = scmp.lt.s32.totalorder %s21, 1
      %s392 = scalar_select %p391, %s21, 1
      %p393 = scmp.lt.s32.totalorder %s22, 0
      %s394 = scalar_select %p393, %s22, 0
      %s395 = sadd.s32 %s394, %s392
      %s396 = smul.addr %s395, 8
      %s397 = scalar_lea.vmem %s4, %s396
      %p398 = scmp.lt.s32.totalorder %s21, 1
      %s399 = scalar_select %p398, %s21, 1
      %p400 = scmp.lt.s32.totalorder %s22, 0
      %s401 = scalar_select %p400, %s22, 0
      %s402 = sadd.s32 %s401, %s399
      %s403 = smul.addr %s402, 8
      %s404 = scalar_lea.vmem %s5, %s403
      // Predicated region
      $region33: #{cae_3_bn_forward.13} parent=31 // pred_check
        %p405 = pneg %p119
      $region34: #{cae_3_bn_forward.13} parent=31 // pred_check_branch
        %407 = sbr.rel (%p405) target = $region36
      $region35: #{cae_3_bn_forward.13} parent=31 // pred_region
        _
      $region36: #{cae_3_bn_forward.13} parent=31 // pred_fallthru
        _
      // Predicated region
      $region37: #{cae_3_bn_forward.13} parent=31 // pred_check
        %p408 = pneg %p147
      $region38: #{cae_3_bn_forward.13} parent=31 // pred_check_branch
        %410 = sbr.rel (%p408) target = $region40
      $region39: #{cae_3_bn_forward.13} parent=31 // pred_region
        _
      $region40: #{cae_3_bn_forward.13} parent=31 // pred_fallthru
        _
      // Predicated region
      $region41: #{cae_3_bn_forward.13} parent=31 // pred_check
        %p411 = pneg %p175
      $region42: #{cae_3_bn_forward.13} parent=31 // pred_check_branch
        %413 = sbr.rel (%p411) target = $region44
      $region43: #{cae_3_bn_forward.13} parent=31 // pred_region
        _
      $region44: #{cae_3_bn_forward.13} parent=31 // pred_fallthru
        _
    $region32: #{cae_3_bn_forward.13} parent=5 // pred_fallthru
      _
    %p414 = scmp.le.s32.totalorder 2, %s12
    // Predicated region
    $region45: #{cae_3_bn_forward.13} parent=5 // pred_check
      %p415 = pneg %p414
    $region46: #{cae_3_bn_forward.13} parent=5 // pred_check_branch
      %417 = sbr.rel (%p415) target = $region48
    $region47: #{cae_3_bn_forward.13} parent=5 // pred_region
      %s418 = ssub.s32 %s12, 2
      // Predicated region
      $region49: #{cae_3_bn_forward.13} parent=47 // pred_check
        %p419 = pneg %p125
      $region50: #{cae_3_bn_forward.13} parent=47 // pred_check_branch
        %421 = sbr.rel (%p419) target = $region52
      $region51: #{cae_3_bn_forward.13} parent=47 // pred_region
        %p422 = scmp.lt.s32.totalorder %s23, 1
        %s423 = scalar_select %p422, %s23, 1
        %p424 = scmp.lt.s32.totalorder %s24, 0
        %s425 = scalar_select %p424, %s24, 0
        %s426 = sadd.s32 %s425, %s423
        %s427 = smul.addr %s426, 4
        %s428 = scalar_lea.vmem %s3, %s427
      $region52: #{cae_3_bn_forward.13} parent=47 // pred_fallthru
        _
      // Predicated region
      $region53: #{cae_3_bn_forward.13} parent=47 // pred_check
        %p429 = pneg %p153
      $region54: #{cae_3_bn_forward.13} parent=47 // pred_check_branch
        %431 = sbr.rel (%p429) target = $region56
      $region55: #{cae_3_bn_forward.13} parent=47 // pred_region
        %p432 = scmp.lt.s32.totalorder %s23, 1
        %s433 = scalar_select %p432, %s23, 1
        %p434 = scmp.lt.s32.totalorder %s24, 0
        %s435 = scalar_select %p434, %s24, 0
        %s436 = sadd.s32 %s435, %s433
        %s437 = smul.addr %s436, 8
        %s438 = scalar_lea.vmem %s4, %s437
      $region56: #{cae_3_bn_forward.13} parent=47 // pred_fallthru
        _
      // Predicated region
      $region57: #{cae_3_bn_forward.13} parent=47 // pred_check
        %p439 = pneg %p181
      $region58: #{cae_3_bn_forward.13} parent=47 // pred_check_branch
        %441 = sbr.rel (%p439) target = $region60
      $region59: #{cae_3_bn_forward.13} parent=47 // pred_region
        %p442 = scmp.lt.s32.totalorder %s23, 1
        %s443 = scalar_select %p442, %s23, 1
        %p444 = scmp.lt.s32.totalorder %s24, 0
        %s445 = scalar_select %p444, %s24, 0
        %s446 = sadd.s32 %s445, %s443
        %s447 = smul.addr %s446, 8
        %s448 = scalar_lea.vmem %s5, %s447
      $region60: #{cae_3_bn_forward.13} parent=47 // pred_fallthru
        _
    $region48: #{cae_3_bn_forward.13} parent=5 // pred_fallthru
      _
  $region6: #{cae_3_bn_forward.13} parent=0 // loop_footer
    %s16 = sadd.s32 1, %s12
  $region7: #{cae_3_bn_forward.13} parent=0 // loop_footer_branch
    %11 = sbr.rel target = $region3
  $region8: #{cae_3_bn_forward.13} parent=0 // loop_exit
    _

// kernel: cae_3_bn_forward.14
$region0: #{cae_3_bn_forward.14}
  #allocation0 [shape = 'u32[]', space=smem, size = 0x4, offset = 0x4, fixed_abs, tag = 'smem constant byte address 0x4 - core index']
  #allocation1 [shape = 'u32[144,128]{1,0:T(1,128)}', space=vmem, size = 0x12000, scoped, tag = 'internal scratch']
  %s0 = inlined_call_operand.vmem [shape: bf16[8,24], index: 0, kind: input, shape index: {}]
  %s1 = inlined_call_operand.vmem [shape: f32[8,1], index: 1, kind: input, shape index: {}]
  %s2 = inlined_call_operand.vmem [shape: bf16[2,24,34], index: 2, kind: input, shape index: {}]
  %s3 = inlined_call_operand.vmem [shape: bf16[2,8,34], index: 3, kind: output, shape index: {0}]
  %s4 = inlined_call_operand.vmem [shape: f32[2,1,8,1], index: 4, kind: output, shape index: {1}]
  %s5 = inlined_call_operand.vmem [shape: f32[2,1,8,1], index: 5, kind: output, shape index: {2}]
  %6 = xla_tuple %s3, %s4, %s5
  %s7 = sld [smem:[#allocation0]]
  $region61: #{cae_3_bn_forward.14} parent=0
    _
  %s9 = ssub.s32 1, %s7
  %s10 = scalar_select 0, %s9, %s7
  loop: start=0, step=1, limit=4
  $region2: #{cae_3_bn_forward.14} parent=0 // loop_pre_header
    _
  $region3: #{cae_3_bn_forward.14} parent=0 // loop_header
    %s12 = sphi 0, %s16
    %p13 = scmp.ge.s32.totalorder %s12, 4
    %s19 = sphi 0, %s31
    %s20 = sphi 0, %s27
    %s21 = sphi 0, %s19
    %s22 = sphi 0, %s20
    %s23 = sphi 0, %s21
    %s24 = sphi 0, %s22
    %s32 = sphi 0, %s32
    %s34 = sphi 0, %s32
    %s35 = sphi 0, %s34
    %s49 = sphi 0, %s35
    %s53 = sphi 0, %s53
    %s55 = sphi 0, %s53
    %s56 = sphi 0, %s55
    %s70 = sphi 0, %s56
    %s78 = sphi 0, %s80
    %s81 = sphi 0, %s78
    %s82 = sphi 0, %s81
    %s98 = sphi 0, %s82
    %s106 = sphi 0, %s108
    %s109 = sphi 0, %s106
    %s110 = sphi 0, %s109
    %s126 = sphi 0, %s110
    %s134 = sphi 0, %s136
    %s137 = sphi 0, %s134
    %s138 = sphi 0, %s137
    %s154 = sphi 0, %s138
    %s162 = sphi 0, %s164
    %s165 = sphi 0, %s162
    %s166 = sphi 0, %s165
    %s182 = sphi 0, %s166
  $region4: #{cae_3_bn_forward.14} parent=0 // loop_header_branch
    %15 = sbr.rel (%p13) target = $region8
  $region5: #{cae_3_bn_forward.14} parent=0 // loop_body
    %s17 = ssub.s32 %s12, 1
    %s18 = ssub.s32 %s12, 2
    %s25 = sadd.s32 1, %s20
    %p26 = scmp.ge.s32.totalorder %s25, 1
    %s27 = scalar_select %p26, 0, %s25
    %s28 = sadd.s32 1, %s19
    %s29 = scalar_select %p26, %s28, %s19
    %p30 = scmp.ge.s32.totalorder %s29, 2
    %s31 = scalar_select %p30, 0, %s29
    %s33 = sadd.s32 %s32, 1
    %p36 = scmp.eq.s32.totalorder %s12, 1
    %p37 = scmp.ne.s32.totalorder %s32, %s34
    %p38 = scmp.eq.s32.totalorder %s12, 0
    %p39 = por %p37, %p38
    %p40 = scmp.ne.s32.totalorder %s32, %s34
    %p41 = scmp.eq.s32.totalorder %s17, 1
    %p42 = por %p40, %p41
    %p43 = scmp.ne.s32.totalorder %s34, %s35
    %p44 = scmp.eq.s32.totalorder %s17, 0
    %p45 = por %p43, %p44
    %p46 = scmp.ne.s32.totalorder %s34, %s35
    %p47 = scmp.eq.s32.totalorder %s18, 1
    %p48 = por %p46, %p47
    %p50 = scmp.ne.s32.totalorder %s35, %s49
    %p51 = scmp.eq.s32.totalorder %s18, 0
    %p52 = por %p50, %p51
    %s54 = sadd.s32 %s53, 1
    %p57 = scmp.eq.s32.totalorder %s12, 1
    %p58 = scmp.ne.s32.totalorder %s53, %s55
    %p59 = scmp.eq.s32.totalorder %s12, 0
    %p60 = por %p58, %p59
    %p61 = scmp.ne.s32.totalorder %s53, %s55
    %p62 = scmp.eq.s32.totalorder %s17, 1
    %p63 = por %p61, %p62
    %p64 = scmp.ne.s32.totalorder %s55, %s56
    %p65 = scmp.eq.s32.totalorder %s17, 0
    %p66 = por %p64, %p65
    %p67 = scmp.ne.s32.totalorder %s55, %s56
    %p68 = scmp.eq.s32.totalorder %s18, 1
    %p69 = por %p67, %p68
    %p71 = scmp.ne.s32.totalorder %s56, %s70
    %p72 = scmp.eq.s32.totalorder %s18, 0
    %p73 = por %p71, %p72
    %s74 = ssub.s32 %s19, %s31
    %s75 = ssub.s32 %s20, %s27
    %s76 = sor.u32 %s74, %s75
    %p77 = scmp.eq.s32.totalorder %s76, 0
    %s79 = sadd.s32 %s78, 1
    %s80 = scalar_select %p77, %s78, %s79
    %p83 = pneg %p77
    %p84 = scmp.eq.s32.totalorder %s12, 1
    %p85 = por %p83, %p84
    %p86 = scmp.ne.s32.totalorder %s78, %s81
    %p87 = scmp.eq.s32.totalorder %s12, 0
    %p88 = por %p86, %p87
    %p89 = scmp.ne.s32.totalorder %s78, %s81
    %p90 = scmp.eq.s32.totalorder %s17, 1
    %p91 = por %p89, %p90
    %p92 = scmp.ne.s32.totalorder %s81, %s82
    %p93 = scmp.eq.s32.totalorder %s17, 0
    %p94 = por %p92, %p93
    %p95 = scmp.ne.s32.totalorder %s81, %s82
    %p96 = scmp.eq.s32.totalorder %s18, 1
    %p97 = por %p95, %p96
    %p99 = scmp.ne.s32.totalorder %s82, %s98
    %p100 = scmp.eq.s32.totalorder %s18, 0
    %p101 = por %p99, %p100
    %s102 = ssub.s32 %s19, %s31
    %s103 = ssub.s32 %s20, %s27
    %s104 = sor.u32 %s102, %s103
    %p105 = scmp.eq.s32.totalorder %s104, 0
    %s107 = sadd.s32 %s106, 1
    %s108 = scalar_select %p105, %s106, %s107
    %p111 = pneg %p105
    %p112 = scmp.eq.s32.totalorder %s12, 1
    %p113 = por %p111, %p112
    %p114 = scmp.ne.s32.totalorder %s106, %s109
    %p115 = scmp.eq.s32.totalorder %s12, 0
    %p116 = por %p114, %p115
    %p117 = scmp.ne.s32.totalorder %s106, %s109
    %p118 = scmp.eq.s32.totalorder %s17, 1
    %p119 = por %p117, %p118
    %p120 = scmp.ne.s32.totalorder %s109, %s110
    %p121 = scmp.eq.s32.totalorder %s17, 0
    %p122 = por %p120, %p121
    %p123 = scmp.ne.s32.totalorder %s109, %s110
    %p124 = scmp.eq.s32.totalorder %s18, 1
    %p125 = por %p123, %p124
    %p127 = scmp.ne.s32.totalorder %s110, %s126
    %p128 = scmp.eq.s32.totalorder %s18, 0
    %p129 = por %p127, %p128
    %s130 = ssub.s32 %s19, %s31
    %s131 = ssub.s32 %s20, %s27
    %s132 = sor.u32 %s130, %s131
    %p133 = scmp.eq.s32.totalorder %s132, 0
    %s135 = sadd.s32 %s134, 1
    %s136 = scalar_select %p133, %s134, %s135
    %p139 = pneg %p133
    %p140 = scmp.eq.s32.totalorder %s12, 1
    %p141 = por %p139, %p140
    %p142 = scmp.ne.s32.totalorder %s134, %s137
    %p143 = scmp.eq.s32.totalorder %s12, 0
    %p144 = por %p142, %p143
    %p145 = scmp.ne.s32.totalorder %s134, %s137
    %p146 = scmp.eq.s32.totalorder %s17, 1
    %p147 = por %p145, %p146
    %p148 = scmp.ne.s32.totalorder %s137, %s138
    %p149 = scmp.eq.s32.totalorder %s17, 0
    %p150 = por %p148, %p149
    %p151 = scmp.ne.s32.totalorder %s137, %s138
    %p152 = scmp.eq.s32.totalorder %s18, 1
    %p153 = por %p151, %p152
    %p155 = scmp.ne.s32.totalorder %s138, %s154
    %p156 = scmp.eq.s32.totalorder %s18, 0
    %p157 = por %p155, %p156
    %s158 = ssub.s32 %s19, %s31
    %s159 = ssub.s32 %s20, %s27
    %s160 = sor.u32 %s158, %s159
    %p161 = scmp.eq.s32.totalorder %s160, 0
    %s163 = sadd.s32 %s162, 1
    %s164 = scalar_select %p161, %s162, %s163
    %p167 = pneg %p161
    %p168 = scmp.eq.s32.totalorder %s12, 1
    %p169 = por %p167, %p168
    %p170 = scmp.ne.s32.totalorder %s162, %s165
    %p171 = scmp.eq.s32.totalorder %s12, 0
    %p172 = por %p170, %p171
    %p173 = scmp.ne.s32.totalorder %s162, %s165
    %p174 = scmp.eq.s32.totalorder %s17, 1
    %p175 = por %p173, %p174
    %p176 = scmp.ne.s32.totalorder %s165, %s166
    %p177 = scmp.eq.s32.totalorder %s17, 0
    %p178 = por %p176, %p177
    %p179 = scmp.ne.s32.totalorder %s165, %s166
    %p180 = scmp.eq.s32.totalorder %s18, 1
    %p181 = por %p179, %p180
    %p183 = scmp.ne.s32.totalorder %s166, %s182
    %p184 = scmp.eq.s32.totalorder %s18, 0
    %p185 = por %p183, %p184
    %p186 = scmp.le.s32.totalorder 1, %s12
    %p187 = scmp.lt.s32.totalorder %s12, 3
    %p188 = pnand %p186, %p187
    %p189 = pneg %p188
    // Predicated region
    $region9: #{cae_3_bn_forward.14} parent=5 // pred_check
      _
    $region10: #{cae_3_bn_forward.14} parent=5 // pred_check_branch
      %191 = sbr.rel (%p188) target = $region12
    $region11: #{cae_3_bn_forward.14} parent=5 // pred_region
      %s192 = ssub.s32 %s12, 1
      // Predicated region
      $region13: #{cae_3_bn_forward.14} parent=11 // pred_check
        %p193 = pneg %p45
      $region14: #{cae_3_bn_forward.14} parent=11 // pred_check_branch
        %195 = sbr.rel (%p193) target = $region16
      $region15: #{cae_3_bn_forward.14} parent=11 // pred_region
        _
      $region16: #{cae_3_bn_forward.14} parent=11 // pred_fallthru
        _
      // Predicated region
      $region17: #{cae_3_bn_forward.14} parent=11 // pred_check
        %p196 = pneg %p66
      $region18: #{cae_3_bn_forward.14} parent=11 // pred_check_branch
        %198 = sbr.rel (%p196) target = $region20
      $region19: #{cae_3_bn_forward.14} parent=11 // pred_region
        _
      $region20: #{cae_3_bn_forward.14} parent=11 // pred_fallthru
        _
    $region12: #{cae_3_bn_forward.14} parent=5 // pred_fallthru
      _
    %p199 = scmp.lt.s32.totalorder %s12, 2
    // Predicated region
    $region21: #{cae_3_bn_forward.14} parent=5 // pred_check
      %p200 = pneg %p199
    $region22: #{cae_3_bn_forward.14} parent=5 // pred_check_branch
      %202 = sbr.rel (%p200) target = $region24
    $region23: #{cae_3_bn_forward.14} parent=5 // pred_region
      // Predicated region
      $region25: #{cae_3_bn_forward.14} parent=23 // pred_check
        %p203 = pneg %p88
      $region26: #{cae_3_bn_forward.14} parent=23 // pred_check_branch
        %205 = sbr.rel (%p203) target = $region28
      $region27: #{cae_3_bn_forward.14} parent=23 // pred_region
        %p206 = scmp.lt.s32.totalorder %s19, 1
        %s207 = scalar_select %p206, %s19, 1
        %p208 = scmp.lt.s32.totalorder %s20, 0
        %s209 = scalar_select %p208, %s20, 0
        %s210 = smul.addr %s207, 3
        %s211 = sadd.s32 %s209, %s210
        %s212 = smul.addr %s211, 4
        %s213 = scalar_lea.vmem %s2, %s212
      $region28: #{cae_3_bn_forward.14} parent=23 // pred_fallthru
        _
    $region24: #{cae_3_bn_forward.14} parent=5 // pred_fallthru
      _
    %p214 = scmp.le.s32.totalorder 1, %s12
    %p215 = scmp.lt.s32.totalorder %s12, 3
    %p216 = pnand %p214, %p215
    %p217 = pneg %p216
    // Predicated region
    $region29: #{cae_3_bn_forward.14} parent=5 // pred_check
      _
    $region30: #{cae_3_bn_forward.14} parent=5 // pred_check_branch
      %219 = sbr.rel (%p216) target = $region32
    $region31: #{cae_3_bn_forward.14} parent=5 // pred_region
      %s220 = ssub.s32 %s12, 1
      %p221 = pneg %p45
      %p222 = pneg %p42
      %p223 = pneg %p66
      %p224 = pneg %p63
      %p225 = scmp.lt.s32.totalorder %s21, 1
      %s226 = scalar_select %p225, %s21, 1
      %p227 = scmp.lt.s32.totalorder %s22, 0
      %s228 = scalar_select %p227, %s22, 0
      %s229 = smul.addr %s226, 3
      %s230 = sadd.s32 %s228, %s229
      %s231 = smul.addr %s230, 4
      %s232 = scalar_lea.vmem %s2, %s231
      %p233 = pneg %p94
      %p234 = pneg %p91
      %p235 = pneg %p122
      %p236 = pneg %p119
      %p237 = scmp.lt.s32.totalorder %s21, 1
      %s238 = scalar_select %p237, %s21, 1
      %p239 = scmp.lt.s32.totalorder %s22, 0
      %s240 = scalar_select %p239, %s22, 0
      %s241 = sadd.s32 %s240, %s238
      %s242 = smul.addr %s241, 4
      %s243 = scalar_lea.vmem %s3, %s242
      %p244 = pneg %p150
      %p245 = pneg %p147
      %p246 = scmp.lt.s32.totalorder %s21, 1
      %s247 = scalar_select %p246, %s21, 1
      %p248 = scmp.lt.s32.totalorder %s22, 0
      %s249 = scalar_select %p248, %s22, 0
      %s250 = sadd.s32 %s249, %s247
      %s251 = smul.addr %s250, 8
      %s252 = scalar_lea.vmem %s4, %s251
      %p253 = pneg %p178
      %p254 = pneg %p175
      %p255 = scmp.lt.s32.totalorder %s21, 1
      %s256 = scalar_select %p255, %s21, 1
      %p257 = scmp.lt.s32.totalorder %s22, 0
      %s258 = scalar_select %p257, %s22, 0
      %s259 = sadd.s32 %s258, %s256
      %s260 = smul.addr %s259, 8
      %s261 = scalar_lea.vmem %s5, %s260
      %p262 = scmp.lt.s32.totalorder %s21, 1
      %s263 = scalar_select %p262, %s21, 1
      %p264 = scmp.lt.s32.totalorder %s22, 0
      %s265 = scalar_select %p264, %s22, 0
      %s266 = smul.addr %s263, 3
      %s267 = sadd.s32 %s265, %s266
      %s268 = smul.addr %s267, 4
      %s269 = scalar_lea.vmem %s2, %s268
      %p270 = scmp.lt.s32.totalorder %s21, 1
      %s271 = scalar_select %p270, %s21, 1
      %p272 = scmp.lt.s32.totalorder %s22, 0
      %s273 = scalar_select %p272, %s22, 0
      %s274 = sadd.s32 %s273, %s271
      %s275 = smul.addr %s274, 4
      %s276 = scalar_lea.vmem %s3, %s275
      %p277 = scmp.lt.s32.totalorder %s21, 1
      %s278 = scalar_select %p277, %s21, 1
      %p279 = scmp.lt.s32.totalorder %s22, 0
      %s280 = scalar_select %p279, %s22, 0
      %s281 = sadd.s32 %s280, %s278
      %s282 = smul.addr %s281, 8
      %s283 = scalar_lea.vmem %s4, %s282
      %p284 = scmp.lt.s32.totalorder %s21, 1
      %s285 = scalar_select %p284, %s21, 1
      %p286 = scmp.lt.s32.totalorder %s22, 0
      %s287 = scalar_select %p286, %s22, 0
      %s288 = sadd.s32 %s287, %s285
      %s289 = smul.addr %s288, 8
      %s290 = scalar_lea.vmem %s5, %s289
      %v292 = vld [vmem:[%s0] sm:$0xf]
      %v293 = vld [vmem:[%s269] sm:$0xf]
      %v294 = vld [vmem:[%s269 + $0x4] sm:$0xf]
      %v295 = vld [vmem:[%s269 + $0x8] sm:$0xf]
      %v296 = vld [vmem:[%s1] sm:$0xff]
      %298 = vset.pattern.permute.xlu0 0
      %299 = vperm.xlu0 %298, %v296
      %v300 = vpop.permute.xlu0 %299
      %v305 = vunpack.c.l.b16 %v293
      %v306 = vunpack.c.l.b16 %v294
      %v307 = vunpack.c.l.b16 %v295
      %v308 = vpack.c.b16 %v306, %v305
      %v309 = vpack.c.b16 %v307, %v307
      %vm311 = vcmask 195584
      %v313 = vsel %vm311, %v292, 0
      %vm315 = vcmask 1043456
      %v317 = vsel %vm315, %v309, 0
      %319 = vmatprep.subr.bf16.mxu0 0
      %320 = vmatpush1.bf16.msra.mxu0 %v308
      %321 = vmatprep.subr.bf16.mxu0 0
      %322 = vmatpush1.bf16.msra.mxu0 %v317
      %323 = vmatprep.subr.bf16.mxu0 0
      %324 = vmatpush1.bf16.msra.mxu0 0
      %325 = vmatprep.subr.bf16.mxu0 0
      %326 = vmatpush1.bf16.msra.mxu0 0
      %327 = vmatprep.subr.bf16.mxu0 0
      %328 = vmatpush1.bf16.msra.mxu0 0
      %329 = vmatprep.subr.bf16.mxu0 0
      %330 = vmatpush1.bf16.msra.mxu0 0
      %331 = vmatprep.subr.bf16.mxu0 0
      %332 = vmatpush1.bf16.msra.mxu0 0
      %333 = vmatprep.subr.bf16.mxu0 0
      %334 = vmatpush1.bf16.msra.mxu0 0
      %335 = vmatprep.subr.bf16.mxu0 0
      %336 = vmatpush1.bf16.msra.mxu0 0
      %337 = vmatprep.subr.bf16.mxu0 0
      %338 = vmatpush1.bf16.msra.mxu0 0
      %339 = vmatprep.subr.bf16.mxu0 0
      %340 = vmatpush1.bf16.msra.mxu0 0
      %341 = vmatprep.subr.bf16.mxu0 0
      %342 = vmatpush1.bf16.msra.mxu0 0
      %343 = vmatprep.subr.bf16.mxu0 0
      %344 = vmatpush1.bf16.msra.mxu0 0
      %345 = vmatprep.subr.bf16.mxu0 0
      %346 = vmatpush1.bf16.msra.mxu0 0
      %347 = vmatprep.subr.bf16.mxu0 0
      %348 = vmatpush1.bf16.msra.mxu0 0
      %349 = vmatprep.subr.bf16.mxu0 0
      %350 = vmatpush1.bf16.msra.mxu0 0
      %351 = vmatprep.mubr.bf16.mxu0 0
      %352 = vmatmul.mubr.bf16.gmra.mrb[0].mxu0 %v313
      %v353 = vpop.f32.mrb[0].mxu0
      %v354 = vadd.f32 %v300, %v353
      %v355 = vpop.f32.mrb[0].mxu0
      %v356 = vpop.f32.mrb[0].mxu0
      %v357 = vpop.f32.mrb[0].mxu0
      %358 = vdwg.mxu0
      %vm359 = vcmp.ge.f32.partialorder %v354, 0.0
      %v360 = vmul.f32 %v354, 0.01
      %v361 = vsel %vm359, %v354, %v360
      %v362 = vpack.c.bf16 %v361, %v361
      %vm363 = vcmask 273408
      %364 = vst.msk [vmem:[%s276] sm:$0xf] %vm363, %v362
      %vm365 = vcmask 277504
      %v366 = vsel %vm365, %v361, 0.0
      %367 = vadd.xlane.f32.xlu0 %v366
      %v368 = vpop.xlane.xlu0 %367
      %vm369 = vcmask 7168
      %370 = vst.msk [vmem:[%s283] sm:$0xff] %vm369, %v368
      %v371 = vmul.f32 %v361, %v361
      %v372 = vsel %vm365, %v371, 0.0
      %373 = vadd.xlane.f32.xlu0 %v372
      %v374 = vpop.xlane.xlu0 %373
      %375 = vst.msk [vmem:[%s290] sm:$0xff] %vm369, %v374
      %p376 = scmp.lt.s32.totalorder %s21, 1
      %s377 = scalar_select %p376, %s21, 1
      %p378 = scmp.lt.s32.totalorder %s22, 0
      %s379 = scalar_select %p378, %s22, 0
      %s380 = sadd.s32 %s379, %s377
      %s381 = smul.addr %s380, 4
      %s382 = scalar_lea.vmem %s3, %s381
      %p383 = scmp.lt.s32.totalorder %s21, 1
      %s384 = scalar_select %p383, %s21, 1
      %p385 = scmp.lt.s32.totalorder %s22, 0
      %s386 = scalar_select %p385, %s22, 0
      %s387 = sadd.s32 %s386, %s384
      %s388 = smul.addr %s387, 8
      %s389 = scalar_lea.vmem %s4, %s388
      %p390 = scmp.lt.s32.totalorder %s21, 1
      %s391 = scalar_select %p390, %s21, 1
      %p392 = scmp.lt.s32.totalorder %s22, 0
      %s393 = scalar_select %p392, %s22, 0
      %s394 = sadd.s32 %s393, %s391
      %s395 = smul.addr %s394, 8
      %s396 = scalar_lea.vmem %s5, %s395
      // Predicated region
      $region33: #{cae_3_bn_forward.14} parent=31 // pred_check
        %p397 = pneg %p119
      $region34: #{cae_3_bn_forward.14} parent=31 // pred_check_branch
        %399 = sbr.rel (%p397) target = $region36
      $region35: #{cae_3_bn_forward.14} parent=31 // pred_region
        _
      $region36: #{cae_3_bn_forward.14} parent=31 // pred_fallthru
        _
      // Predicated region
      $region37: #{cae_3_bn_forward.14} parent=31 // pred_check
        %p400 = pneg %p147
      $region38: #{cae_3_bn_forward.14} parent=31 // pred_check_branch
        %402 = sbr.rel (%p400) target = $region40
      $region39: #{cae_3_bn_forward.14} parent=31 // pred_region
        _
      $region40: #{cae_3_bn_forward.14} parent=31 // pred_fallthru
        _
      // Predicated region
      $region41: #{cae_3_bn_forward.14} parent=31 // pred_check
        %p403 = pneg %p175
      $region42: #{cae_3_bn_forward.14} parent=31 // pred_check_branch
        %405 = sbr.rel (%p403) target = $region44
      $region43: #{cae_3_bn_forward.14} parent=31 // pred_region
        _
      $region44: #{cae_3_bn_forward.14} parent=31 // pred_fallthru
        _
    $region32: #{cae_3_bn_forward.14} parent=5 // pred_fallthru
      _
    %p406 = scmp.le.s32.totalorder 2, %s12
    // Predicated region
    $region45: #{cae_3_bn_forward.14} parent=5 // pred_check
      %p407 = pneg %p406
    $region46: #{cae_3_bn_forward.14} parent=5 // pred_check_branch
      %409 = sbr.rel (%p407) target = $region48
    $region47: #{cae_3_bn_forward.14} parent=5 // pred_region
      %s410 = ssub.s32 %s12, 2
      // Predicated region
      $region49: #{cae_3_bn_forward.14} parent=47 // pred_check
        %p411 = pneg %p125
      $region50: #{cae_3_bn_forward.14} parent=47 // pred_check_branch
        %413 = sbr.rel (%p411) target = $region52
      $region51: #{cae_3_bn_forward.14} parent=47 // pred_region
        %p414 = scmp.lt.s32.totalorder %s23, 1
        %s415 = scalar_select %p414, %s23, 1
        %p416 = scmp.lt.s32.totalorder %s24, 0
        %s417 = scalar_select %p416, %s24, 0
        %s418 = sadd.s32 %s417, %s415
        %s419 = smul.addr %s418, 4
        %s420 = scalar_lea.vmem %s3, %s419
      $region52: #{cae_3_bn_forward.14} parent=47 // pred_fallthru
        _
      // Predicated region
      $region53: #{cae_3_bn_forward.14} parent=47 // pred_check
        %p421 = pneg %p153
      $region54: #{cae_3_bn_forward.14} parent=47 // pred_check_branch
        %423 = sbr.rel (%p421) target = $region56
      $region55: #{cae_3_bn_forward.14} parent=47 // pred_region
        %p424 = scmp.lt.s32.totalorder %s23, 1
        %s425 = scalar_select %p424, %s23, 1
        %p426 = scmp.lt.s32.totalorder %s24, 0
        %s427 = scalar_select %p426, %s24, 0
        %s428 = sadd.s32 %s427, %s425
        %s429 = smul.addr %s428, 8
        %s430 = scalar_lea.vmem %s4, %s429
      $region56: #{cae_3_bn_forward.14} parent=47 // pred_fallthru
        _
      // Predicated region
      $region57: #{cae_3_bn_forward.14} parent=47 // pred_check
        %p431 = pneg %p181
      $region58: #{cae_3_bn_forward.14} parent=47 // pred_check_branch
        %433 = sbr.rel (%p431) target = $region60
      $region59: #{cae_3_bn_forward.14} parent=47 // pred_region
        %p434 = scmp.lt.s32.totalorder %s23, 1
        %s435 = scalar_select %p434, %s23, 1
        %p436 = scmp.lt.s32.totalorder %s24, 0
        %s437 = scalar_select %p436, %s24, 0
        %s438 = sadd.s32 %s437, %s435
        %s439 = smul.addr %s438, 8
        %s440 = scalar_lea.vmem %s5, %s439
      $region60: #{cae_3_bn_forward.14} parent=47 // pred_fallthru
        _
    $region48: #{cae_3_bn_forward.14} parent=5 // pred_fallthru
      _
  $region6: #{cae_3_bn_forward.14} parent=0 // loop_footer
    %s16 = sadd.s32 1, %s12
  $region7: #{cae_3_bn_forward.14} parent=0 // loop_footer_branch
    %11 = sbr.rel target = $region3
  $region8: #{cae_3_bn_forward.14} parent=0 // loop_exit
    _

// kernel: cae_3_bn_forward.15
$region0: #{cae_3_bn_forward.15}
  #allocation0 [shape = 'u32[]', space=smem, size = 0x4, offset = 0x4, fixed_abs, tag = 'smem constant byte address 0x4 - core index']
  #allocation1 [shape = 'u32[144,128]{1,0:T(1,128)}', space=vmem, size = 0x12000, scoped, tag = 'internal scratch']
  %s0 = inlined_call_operand.vmem [shape: bf16[2,8,34], index: 0, kind: input, shape index: {}]
  %s1 = inlined_call_operand.vmem [shape: f32[8,1], index: 1, kind: input, shape index: {}]
  %s2 = inlined_call_operand.vmem [shape: f32[8,1], index: 2, kind: input, shape index: {}]
  %s3 = inlined_call_operand.vmem [shape: f32[2,8,34], index: 3, kind: output, shape index: {}]
  %s4 = sld [smem:[#allocation0]]
  $region45: #{cae_3_bn_forward.15} parent=0
    _
  %s6 = ssub.s32 1, %s4
  %s7 = scalar_select 0, %s6, %s4
  loop: start=0, step=1, limit=4
  $region2: #{cae_3_bn_forward.15} parent=0 // loop_pre_header
    _
  $region3: #{cae_3_bn_forward.15} parent=0 // loop_header
    %s9 = sphi 0, %s13
    %p10 = scmp.ge.s32.totalorder %s9, 4
    %s16 = sphi 0, %s28
    %s17 = sphi 0, %s24
    %s18 = sphi 0, %s16
    %s19 = sphi 0, %s17
    %s20 = sphi 0, %s18
    %s21 = sphi 0, %s19
    %s33 = sphi 0, %s35
    %s36 = sphi 0, %s33
    %s37 = sphi 0, %s36
    %s53 = sphi 0, %s37
    %s57 = sphi 0, %s57
    %s59 = sphi 0, %s57
    %s60 = sphi 0, %s59
    %s74 = sphi 0, %s60
    %s78 = sphi 0, %s78
    %s80 = sphi 0, %s78
    %s81 = sphi 0, %s80
    %s95 = sphi 0, %s81
    %s103 = sphi 0, %s105
    %s106 = sphi 0, %s103
    %s107 = sphi 0, %s106
    %s123 = sphi 0, %s107
  $region4: #{cae_3_bn_forward.15} parent=0 // loop_header_branch
    %12 = sbr.rel (%p10) target = $region8
  $region5: #{cae_3_bn_forward.15} parent=0 // loop_body
    %s14 = ssub.s32 %s9, 1
    %s15 = ssub.s32 %s9, 2
    %s22 = sadd.s32 1, %s17
    %p23 = scmp.ge.s32.totalorder %s22, 1
    %s24 = scalar_select %p23, 0, %s22
    %s25 = sadd.s32 1, %s16
    %s26 = scalar_select %p23, %s25, %s16
    %p27 = scmp.ge.s32.totalorder %s26, 2
    %s28 = scalar_select %p27, 0, %s26
    %s29 = ssub.s32 %s16, %s28
    %s30 = ssub.s32 %s17, %s24
    %s31 = sor.u32 %s29, %s30
    %p32 = scmp.eq.s32.totalorder %s31, 0
    %s34 = sadd.s32 %s33, 1
    %s35 = scalar_select %p32, %s33, %s34
    %p38 = pneg %p32
    %p39 = scmp.eq.s32.totalorder %s9, 1
    %p40 = por %p38, %p39
    %p41 = scmp.ne.s32.totalorder %s33, %s36
    %p42 = scmp.eq.s32.totalorder %s9, 0
    %p43 = por %p41, %p42
    %p44 = scmp.ne.s32.totalorder %s33, %s36
    %p45 = scmp.eq.s32.totalorder %s14, 1
    %p46 = por %p44, %p45
    %p47 = scmp.ne.s32.totalorder %s36, %s37
    %p48 = scmp.eq.s32.totalorder %s14, 0
    %p49 = por %p47, %p48
    %p50 = scmp.ne.s32.totalorder %s36, %s37
    %p51 = scmp.eq.s32.totalorder %s15, 1
    %p52 = por %p50, %p51
    %p54 = scmp.ne.s32.totalorder %s37, %s53
    %p55 = scmp.eq.s32.totalorder %s15, 0
    %p56 = por %p54, %p55
    %s58 = sadd.s32 %s57, 1
    %p61 = scmp.eq.s32.totalorder %s9, 1
    %p62 = scmp.ne.s32.totalorder %s57, %s59
    %p63 = scmp.eq.s32.totalorder %s9, 0
    %p64 = por %p62, %p63
    %p65 = scmp.ne.s32.totalorder %s57, %s59
    %p66 = scmp.eq.s32.totalorder %s14, 1
    %p67 = por %p65, %p66
    %p68 = scmp.ne.s32.totalorder %s59, %s60
    %p69 = scmp.eq.s32.totalorder %s14, 0
    %p70 = por %p68, %p69
    %p71 = scmp.ne.s32.totalorder %s59, %s60
    %p72 = scmp.eq.s32.totalorder %s15, 1
    %p73 = por %p71, %p72
    %p75 = scmp.ne.s32.totalorder %s60, %s74
    %p76 = scmp.eq.s32.totalorder %s15, 0
    %p77 = por %p75, %p76
    %s79 = sadd.s32 %s78, 1
    %p82 = scmp.eq.s32.totalorder %s9, 1
    %p83 = scmp.ne.s32.totalorder %s78, %s80
    %p84 = scmp.eq.s32.totalorder %s9, 0
    %p85 = por %p83, %p84
    %p86 = scmp.ne.s32.totalorder %s78, %s80
    %p87 = scmp.eq.s32.totalorder %s14, 1
    %p88 = por %p86, %p87
    %p89 = scmp.ne.s32.totalorder %s80, %s81
    %p90 = scmp.eq.s32.totalorder %s14, 0
    %p91 = por %p89, %p90
    %p92 = scmp.ne.s32.totalorder %s80, %s81
    %p93 = scmp.eq.s32.totalorder %s15, 1
    %p94 = por %p92, %p93
    %p96 = scmp.ne.s32.totalorder %s81, %s95
    %p97 = scmp.eq.s32.totalorder %s15, 0
    %p98 = por %p96, %p97
    %s99 = ssub.s32 %s16, %s28
    %s100 = ssub.s32 %s17, %s24
    %s101 = sor.u32 %s99, %s100
    %p102 = scmp.eq.s32.totalorder %s101, 0
    %s104 = sadd.s32 %s103, 1
    %s105 = scalar_select %p102, %s103, %s104
    %p108 = pneg %p102
    %p109 = scmp.eq.s32.totalorder %s9, 1
    %p110 = por %p108, %p109
    %p111 = scmp.ne.s32.totalorder %s103, %s106
    %p112 = scmp.eq.s32.totalorder %s9, 0
    %p113 = por %p111, %p112
    %p114 = scmp.ne.s32.totalorder %s103, %s106
    %p115 = scmp.eq.s32.totalorder %s14, 1
    %p116 = por %p114, %p115
    %p117 = scmp.ne.s32.totalorder %s106, %s107
    %p118 = scmp.eq.s32.totalorder %s14, 0
    %p119 = por %p117, %p118
    %p120 = scmp.ne.s32.totalorder %s106, %s107
    %p121 = scmp.eq.s32.totalorder %s15, 1
    %p122 = por %p120, %p121
    %p124 = scmp.ne.s32.totalorder %s107, %s123
    %p125 = scmp.eq.s32.totalorder %s15, 0
    %p126 = por %p124, %p125
    %p127 = scmp.le.s32.totalorder 1, %s9
    %p128 = scmp.lt.s32.totalorder %s9, 3
    %p129 = pnand %p127, %p128
    %p130 = pneg %p129
    // Predicated region
    $region9: #{cae_3_bn_forward.15} parent=5 // pred_check
      _
    $region10: #{cae_3_bn_forward.15} parent=5 // pred_check_branch
      %132 = sbr.rel (%p129) target = $region12
    $region11: #{cae_3_bn_forward.15} parent=5 // pred_region
      %s133 = ssub.s32 %s9, 1
      // Predicated region
      $region13: #{cae_3_bn_forward.15} parent=11 // pred_check
        %p134 = pneg %p70
      $region14: #{cae_3_bn_forward.15} parent=11 // pred_check_branch
        %136 = sbr.rel (%p134) target = $region16
      $region15: #{cae_3_bn_forward.15} parent=11 // pred_region
        _
      $region16: #{cae_3_bn_forward.15} parent=11 // pred_fallthru
        _
      // Predicated region
      $region17: #{cae_3_bn_forward.15} parent=11 // pred_check
        %p137 = pneg %p91
      $region18: #{cae_3_bn_forward.15} parent=11 // pred_check_branch
        %139 = sbr.rel (%p137) target = $region20
      $region19: #{cae_3_bn_forward.15} parent=11 // pred_region
        _
      $region20: #{cae_3_bn_forward.15} parent=11 // pred_fallthru
        _
    $region12: #{cae_3_bn_forward.15} parent=5 // pred_fallthru
      _
    %p140 = scmp.lt.s32.totalorder %s9, 2
    // Predicated region
    $region21: #{cae_3_bn_forward.15} parent=5 // pred_check
      %p141 = pneg %p140
    $region22: #{cae_3_bn_forward.15} parent=5 // pred_check_branch
      %143 = sbr.rel (%p141) target = $region24
    $region23: #{cae_3_bn_forward.15} parent=5 // pred_region
      // Predicated region
      $region25: #{cae_3_bn_forward.15} parent=23 // pred_check
        %p144 = pneg %p43
      $region26: #{cae_3_bn_forward.15} parent=23 // pred_check_branch
        %146 = sbr.rel (%p144) target = $region28
      $region27: #{cae_3_bn_forward.15} parent=23 // pred_region
        %p147 = scmp.lt.s32.totalorder %s16, 1
        %s148 = scalar_select %p147, %s16, 1
        %p149 = scmp.lt.s32.totalorder %s17, 0
        %s150 = scalar_select %p149, %s17, 0
        %s151 = sadd.s32 %s150, %s148
        %s152 = smul.addr %s151, 4
        %s153 = scalar_lea.vmem %s0, %s152
      $region28: #{cae_3_bn_forward.15} parent=23 // pred_fallthru
        _
    $region24: #{cae_3_bn_forward.15} parent=5 // pred_fallthru
      _
    %p154 = scmp.le.s32.totalorder 1, %s9
    %p155 = scmp.lt.s32.totalorder %s9, 3
    %p156 = pnand %p154, %p155
    %p157 = pneg %p156
    // Predicated region
    $region29: #{cae_3_bn_forward.15} parent=5 // pred_check
      _
    $region30: #{cae_3_bn_forward.15} parent=5 // pred_check_branch
      %159 = sbr.rel (%p156) target = $region32
    $region31: #{cae_3_bn_forward.15} parent=5 // pred_region
      %s160 = ssub.s32 %s9, 1
      %p161 = scmp.lt.s32.totalorder %s18, 1
      %s162 = scalar_select %p161, %s18, 1
      %p163 = scmp.lt.s32.totalorder %s19, 0
      %s164 = scalar_select %p163, %s19, 0
      %s165 = sadd.s32 %s164, %s162
      %s166 = smul.addr %s165, 4
      %s167 = scalar_lea.vmem %s0, %s166
      %p168 = pneg %p49
      %p169 = pneg %p46
      %p170 = pneg %p70
      %p171 = pneg %p67
      %p172 = pneg %p91
      %p173 = pneg %p88
      %p174 = pneg %p119
      %p175 = pneg %p116
      %p176 = scmp.lt.s32.totalorder %s18, 1
      %s177 = scalar_select %p176, %s18, 1
      %p178 = scmp.lt.s32.totalorder %s19, 0
      %s179 = scalar_select %p178, %s19, 0
      %s180 = sadd.s32 %s179, %s177
      %s181 = smul.addr %s180, 8
      %s182 = scalar_lea.vmem %s3, %s181
      %p183 = scmp.lt.s32.totalorder %s18, 1
      %s184 = scalar_select %p183, %s18, 1
      %p185 = scmp.lt.s32.totalorder %s19, 0
      %s186 = scalar_select %p185, %s19, 0
      %s187 = sadd.s32 %s186, %s184
      %s188 = smul.addr %s187, 4
      %s189 = scalar_lea.vmem %s0, %s188
      %p190 = scmp.lt.s32.totalorder %s18, 1
      %s191 = scalar_select %p190, %s18, 1
      %p192 = scmp.lt.s32.totalorder %s19, 0
      %s193 = scalar_select %p192, %s19, 0
      %s194 = sadd.s32 %s193, %s191
      %s195 = smul.addr %s194, 8
      %s196 = scalar_lea.vmem %s3, %s195
      %v197 = vld [vmem:[%s189] sm:$0xf]
      %v198 = vunpack.c.l.bf16 %v197
      %v199 = vld [vmem:[%s1] sm:$0xff]
      %201 = vset.pattern.permute.xlu0 0
      %202 = vperm.xlu0 %201, %v199
      %v203 = vpop.permute.xlu0 %202
      %v205 = vsub.f32 %v198, %v203
      %v206 = vld [vmem:[%s2] sm:$0xff]
      %208 = vset.pattern.permute.xlu0 0
      %209 = vperm.xlu0 %208, %v206
      %v210 = vpop.permute.xlu0 %209
      %v212 = vmul.f32 %v205, %v210
      %vm213 = vcmask 277504
      %214 = vst.msk [vmem:[%s196] sm:$0xff] %vm213, %v212
      %p215 = scmp.lt.s32.totalorder %s18, 1
      %s216 = scalar_select %p215, %s18, 1
      %p217 = scmp.lt.s32.totalorder %s19, 0
      %s218 = scalar_select %p217, %s19, 0
      %s219 = sadd.s32 %s218, %s216
      %s220 = smul.addr %s219, 8
      %s221 = scalar_lea.vmem %s3, %s220
      // Predicated region
      $region33: #{cae_3_bn_forward.15} parent=31 // pred_check
        %p222 = pneg %p116
      $region34: #{cae_3_bn_forward.15} parent=31 // pred_check_branch
        %224 = sbr.rel (%p222) target = $region36
      $region35: #{cae_3_bn_forward.15} parent=31 // pred_region
        _
      $region36: #{cae_3_bn_forward.15} parent=31 // pred_fallthru
        _
    $region32: #{cae_3_bn_forward.15} parent=5 // pred_fallthru
      _
    %p225 = scmp.le.s32.totalorder 2, %s9
    // Predicated region
    $region37: #{cae_3_bn_forward.15} parent=5 // pred_check
      %p226 = pneg %p225
    $region38: #{cae_3_bn_forward.15} parent=5 // pred_check_branch
      %228 = sbr.rel (%p226) target = $region40
    $region39: #{cae_3_bn_forward.15} parent=5 // pred_region
      %s229 = ssub.s32 %s9, 2
      // Predicated region
      $region41: #{cae_3_bn_forward.15} parent=39 // pred_check
        %p230 = pneg %p122
      $region42: #{cae_3_bn_forward.15} parent=39 // pred_check_branch
        %232 = sbr.rel (%p230) target = $region44
      $region43: #{cae_3_bn_forward.15} parent=39 // pred_region
        %p233 = scmp.lt.s32.totalorder %s20, 1
        %s234 = scalar_select %p233, %s20, 1
        %p235 = scmp.lt.s32.totalorder %s21, 0
        %s236 = scalar_select %p235, %s21, 0
        %s237 = sadd.s32 %s236, %s234
        %s238 = smul.addr %s237, 8
        %s239 = scalar_lea.vmem %s3, %s238
      $region44: #{cae_3_bn_forward.15} parent=39 // pred_fallthru
        _
    $region40: #{cae_3_bn_forward.15} parent=5 // pred_fallthru
      _
  $region6: #{cae_3_bn_forward.15} parent=0 // loop_footer
    %s13 = sadd.s32 1, %s9
  $region7: #{cae_3_bn_forward.15} parent=0 // loop_footer_branch
    %8 = sbr.rel target = $region3
  $region8: #{cae_3_bn_forward.15} parent=0 // loop_exit
    _

</llo_original>
